<compile_context>
chip_gen: v7x
topology: tpu7x:2x2x1
jax: 0.10.0
libtpu: 0.0.40
codegen_flags: <defaults>
</compile_context>

<pallas_src>
import math

import jax
import jax.numpy as jnp
from jax.experimental import pallas as pl
from jax.experimental.pallas import tpu as pltpu

# ------------------------- configuration (small) ----------------------------
BATCH = 2
IMG = 16                                   # image_size
C_IN = 4                                   # channels
NF = 8                                     # n_filter
LAT = 32                                   # lat_size (>3 so kept as-is)
N_CALLS = 1
N_LAYERS = int(math.ceil(math.log2(IMG)))  # 4
C_FACTOR = 3                               # identity + grad_x + grad_y
FIN = C_FACTOR * NF                        # 24
SPLIT_SIZES = [NF, NF, NF, 1]              # multi_cut=True
NOC = sum(SPLIT_SIZES)                     # 25
CONV_STATE = NF + NF * IMG + NF * IMG + IMG * IMG   # 520
HW = IMG * IMG                             # 256
DP_ROWS = 5 * NF                           # 40 rows in packed dyn-weight slab


# ----------------------- fused whole-forward Pallas kernel ------------------
def _make_fused_kernel(radii, H, W):
    """radii: static tuple of gradient radii, one per (layer, call)."""
    hw = H * W

    def kernel(x_ref, dyn_ref, wic_ref, bic_ref, woc_ref, boc_ref,
               pw_ref, ph_ref, embs_ref, pooled_ref, hwout_ref):
        # ---- in_conv: 1x1 conv == channels-major matmul, lane-dense (NF, HW)
        out = (jnp.dot(wic_ref[...], x_ref[0],
                       preferred_element_type=jnp.float32) + bic_ref[...])
        embs_ref[0, 0] = out

        # index maps for boundary masks (hoisted out of the layer loop)
        flat = jax.lax.broadcasted_iota(jnp.int32, (NF, hw), 1)
        if (W & (W - 1)) == 0:
            col = jnp.bitwise_and(flat, W - 1)
        else:
            col = jax.lax.rem(flat, W)

        for step, r in enumerate(radii):
            # packed per-sample dynamic weights (already transposed), static slices
            d = dyn_ref[0, step]                   # (5*NF, FIN)
            w_inT = d[0:NF, :]                     # (NF, FIN)
            w_shT = d[NF:2 * NF, :]                # (NF, FIN)
            w_midT = d[2 * NF:3 * NF, 0:NF]        # (NF, NF)
            w_outT = d[3 * NF:4 * NF, 0:NF]        # (NF, NF)
            b_in = d[4 * NF:5 * NF, 0:1]           # (NF, 1)
            b_mid = d[4 * NF:5 * NF, 1:2]
            b_out = d[4 * NF:5 * NF, 2:3]
            b_sh = d[4 * NF:5 * NF, 3:4]

            # ---- RandGrads-style perception [x, grad_x(r), grad_y(r)]
            #      lane rolls (XLU) + boundary masks == zero-padded shifts
            fx = pltpu.roll(out, (-r) % hw, axis=1)
            bx = pltpu.roll(out, r, axis=1)
            gx = (jnp.where(col < W - r, fx, 0.0)
                  - jnp.where(col >= r, bx, 0.0))
            fy = pltpu.roll(out, (-r * W) % hw, axis=1)
            by = pltpu.roll(out, r * W, axis=1)
            gy = (jnp.where(flat < (H - r) * W, fy, 0.0)
                  - jnp.where(flat >= r * W, by, 0.0))
            p = jnp.concatenate([out, gx, gy], axis=0)          # (FIN, HW)

            # ---- InstanceNorm2d (affine=False, eps=1e-5, biased variance)
            mu = jnp.mean(p, axis=1, keepdims=True)
            var = jnp.mean(jnp.square(p - mu), axis=1, keepdims=True)
            pn = (p - mu) * jax.lax.rsqrt(var + 1e-5)

            # ---- DynaResidualBlock: per-sample dynamic 1x1-conv residual block
            x_s = jnp.dot(w_shT, pn, preferred_element_type=jnp.float32) + b_sh
            h1 = jnp.dot(w_inT, pn, preferred_element_type=jnp.float32) + b_in
            h1 = jnp.maximum(h1, 0.2 * h1)
            h1 = jnp.dot(w_midT, h1, preferred_element_type=jnp.float32) + b_mid
            h1 = jnp.maximum(h1, 0.2 * h1)
            h1 = jnp.dot(w_outT, h1, preferred_element_type=jnp.float32) + b_out
            out = x_s + h1                                       # (NF, HW)
            embs_ref[0, step + 1] = out

        # ---- out_conv (1x1) + multi_cut pooling, all in-kernel
        oc = (jnp.dot(woc_ref[...], out, preferred_element_type=jnp.float32)
              + boc_ref[...])                                    # (NOC, HW)
        # channel means over H*W (lane reduction)
        pooled_ref[0, :, 0:1] = jnp.mean(oc[0:NF], axis=1, keepdims=True)
        # per-row / per-column means via pooling matmuls (no in-kernel reshape)
        pooled_ref[0, :, 1:1 + H] = jnp.dot(
            oc[NF:2 * NF], pw_ref[...], preferred_element_type=jnp.float32)
        pooled_ref[0, :, 1 + H:1 + H + W] = jnp.dot(
            oc[2 * NF:3 * NF], ph_ref[...], preferred_element_type=jnp.float32)
        hwout_ref[0] = oc[3 * NF:3 * NF + 1]                     # (1, HW)

    return kernel


def fused_encoder_call(x3, dynw, wic_t, bic, woc_t, boc, pw, ph, radii):
    """x3:(B,C_IN,HW) dynw:(B,TC,5*NF,FIN) -> (embs, pooled, hw_flat)."""
    b = x3.shape[0]
    tc = len(radii)
    kernel = _make_fused_kernel(tuple(radii), IMG, IMG)
    return pl.pallas_call(
        kernel,
        out_shape=(
            jax.ShapeDtypeStruct((b, tc + 1, NF, HW), jnp.float32),   # embs
            jax.ShapeDtypeStruct((b, NF, 1 + 2 * IMG), jnp.float32),  # f|fh|fw
            jax.ShapeDtypeStruct((b, 1, HW), jnp.float32),            # hw slice
        ),
        grid=(b,),
        in_specs=[
            pl.BlockSpec((1, C_IN, HW), lambda i: (i, 0, 0)),
            pl.BlockSpec((1, tc, DP_ROWS, FIN), lambda i: (i, 0, 0, 0)),
            pl.BlockSpec((NF, C_IN), lambda i: (0, 0)),
            pl.BlockSpec((NF, 1), lambda i: (0, 0)),
            pl.BlockSpec((NOC, NF), lambda i: (0, 0)),
            pl.BlockSpec((NOC, 1), lambda i: (0, 0)),
            pl.BlockSpec((HW, IMG), lambda i: (0, 0)),
            pl.BlockSpec((HW, IMG), lambda i: (0, 0)),
        ],
        out_specs=(
            pl.BlockSpec((1, tc + 1, NF, HW), lambda i: (i, 0, 0, 0)),
            pl.BlockSpec((1, NF, 1 + 2 * IMG), lambda i: (i, 0, 0)),
            pl.BlockSpec((1, 1, HW), lambda i: (i, 0, 0)),
        ),
        compiler_params=pltpu.CompilerParams(
            dimension_semantics=("parallel",),
            vmem_limit_bytes=16 * 1024 * 1024,
        ),
    )(x3, dynw, wic_t, bic, woc_t, boc, pw, ph)


# ------------------------- parameter initialization -------------------------
def _winit(key, shape, scale=None):
    s = scale if scale is not None else 1.0 / math.sqrt(shape[0])
    return s * jax.random.normal(key, shape, jnp.float32)


def init_params(key):
    keys = iter(jax.random.split(key, 256))
    nk = lambda: next(keys)
    P = {}
    P["in_conv_w"] = _winit(nk(), (C_IN, NF))
    P["in_conv_b"] = jnp.zeros((NF,), jnp.float32)

    tot_k = FIN * NF + NF + NF * NF + NF + NF * NF + NF + FIN * NF + NF
    layers = []
    for _ in range(N_LAYERS):
        lp = {
            # frac_lat: LinearResidualBlock(LAT, LAT) (identity shortcut)
            "lat_w0": _winit(nk(), (LAT, LAT)), "lat_b0": jnp.zeros((LAT,)),
            "lat_w1": _winit(nk(), (LAT, LAT)), "lat_b1": jnp.zeros((LAT,)),
            # dyna-conv weight generator (lat_factor=2)
            "g_w0": _winit(nk(), (LAT, 2 * LAT)), "g_b0": jnp.zeros((2 * LAT,)),
            "g_rw0": _winit(nk(), (2 * LAT, 2 * LAT)), "g_rb0": jnp.zeros((2 * LAT,)),
            "g_rw1": _winit(nk(), (2 * LAT, 2 * LAT)), "g_rb1": jnp.zeros((2 * LAT,)),
            "g_w1": _winit(nk(), (2 * LAT, tot_k), scale=0.1 / math.sqrt(2 * LAT)),
            "g_b1": jnp.zeros((tot_k,)),
        }
        layers.append(lp)
    P["layers"] = layers

    P["out_conv_w"] = _winit(nk(), (NF, NOC))
    P["out_conv_b"] = jnp.zeros((NOC,), jnp.float32)

    # out_to_lat[0]: Linear(520, 4*LAT, bias=False), orthogonal init
    a = jax.random.normal(nk(), (CONV_STATE, 4 * LAT), jnp.float32)
    q, rr = jnp.linalg.qr(a)
    dgn = jnp.diag(rr)
    P["ol_w"] = q * jnp.where(dgn == 0, 1.0, jnp.sign(dgn))[None, :]
    # out_to_lat[1]: LinearResidualBlock(4*LAT, LAT, bias=False)
    P["ol_rw0"] = _winit(nk(), (4 * LAT, 4 * LAT))
    P["ol_rw1"] = _winit(nk(), (4 * LAT, LAT))
    P["ol_rws"] = _winit(nk(), (4 * LAT, LAT))
    return P


# ------------------------- XLA-side helpers (tiny matmuls) -------------------
def _lin(x, w, b=None, act=False):
    y = jnp.dot(x, w, preferred_element_type=jnp.float32)
    if b is not None:
        y = y + b
    if act:
        y = jnp.maximum(y, 0.2 * y)   # LeakyReLU(0.2)
    return y


def _pack_dyn(k):
    """(B, tot_k) flat generated weights -> (B, 5*NF, FIN) packed slab.

    Rows [0:8)=W_in^T, [8:16)=W_sh^T, [16:24)=W_mid^T (cols 0:NF),
    [24:32)=W_out^T (cols 0:NF), [32:40)=biases b_in|b_mid|b_out|b_sh (cols 0:4).
    """
    b = k.shape[0]
    o = [0]

    def take(n):
        v = k[:, o[0]:o[0] + n]
        o[0] += n
        return v

    w_in = take(FIN * NF).reshape(b, FIN, NF)
    b_in = take(NF)
    w_mid = take(NF * NF).reshape(b, NF, NF)
    b_mid = take(NF)
    w_out = take(NF * NF).reshape(b, NF, NF)
    b_out = take(NF)
    w_sh = take(FIN * NF).reshape(b, FIN, NF)
    b_sh = take(NF)

    padc = lambda a: jnp.pad(a, ((0, 0), (0, 0), (0, FIN - a.shape[2])))
    bias = jnp.stack([b_in, b_mid, b_out, b_sh], axis=2)        # (B, NF, 4)
    return jnp.concatenate([
        jnp.transpose(w_in, (0, 2, 1)),
        jnp.transpose(w_sh, (0, 2, 1)),
        padc(jnp.transpose(w_mid, (0, 2, 1))),
        padc(jnp.transpose(w_out, (0, 2, 1))),
        padc(bias),
    ], axis=1)                                                   # (B, 5*NF, FIN)


# ------------------------------- forward ------------------------------------
@jax.jit
def encoder_forward(params, x, inj_lat):
    """x: (B, C_IN, IMG, IMG) NCHW (as in PyTorch).  Returns (lat, out_embs)."""
    b = x.shape[0]
    x3 = x.reshape(b, C_IN, HW).astype(jnp.float32)

    # ---- latent path + dynamic-weight generation (tiny matmuls -> XLA) ----
    lat = inj_lat.astype(jnp.float32)
    dyn_blocks, radii = [], []
    for l in range(N_LAYERS):
        lp = params["layers"][l]
        r = 2 ** (N_LAYERS - l - 1)          # gradient radius (kernel = 2r+1)
        for _c in range(N_CALLS):
            dxl = _lin(lat, lp["lat_w0"], lp["lat_b0"], act=True)
            dxl = _lin(dxl, lp["lat_w1"], lp["lat_b1"])
            lat = lat + dxl
            g = _lin(lat, lp["g_w0"], lp["g_b0"])
            dg = _lin(g, lp["g_rw0"], lp["g_rb0"], act=True)
            dg = _lin(dg, lp["g_rw1"], lp["g_rb1"])
            g = g + dg
            k = _lin(g, lp["g_w1"], lp["g_b1"])          # (B, tot_k)
            dyn_blocks.append(_pack_dyn(k))
            radii.append(r)
    dynw = jnp.stack(dyn_blocks, axis=1)                 # (B, TC, 5*NF, FIN)

    # static 1x1-conv weights, transposed for channels-major matmuls
    wic_t = jnp.transpose(params["in_conv_w"]).astype(jnp.float32)   # (NF, C_IN)
    bic = params["in_conv_b"].reshape(NF, 1).astype(jnp.float32)
    woc_t = jnp.transpose(params["out_conv_w"]).astype(jnp.float32)  # (NOC, NF)
    boc = params["out_conv_b"].reshape(NOC, 1).astype(jnp.float32)

    # pooling matrices for per-row / per-column means (constant-folded by XLA)
    ii = jnp.arange(HW)
    pw = ((ii[:, None] // IMG) == jnp.arange(IMG)[None, :]).astype(jnp.float32) / IMG
    ph = ((ii[:, None] % IMG) == jnp.arange(IMG)[None, :]).astype(jnp.float32) / IMG

    # ---- fused Pallas kernel: in_conv + all cell layers + out_conv + pooling
    embs, pooled, hw_flat = fused_encoder_call(
        x3, dynw, wic_t, bic, woc_t, boc, pw, ph, tuple(radii))

    # ---- multi_cut conv_state (matches PyTorch NCHW flatten order) ----
    conv_state = jnp.concatenate([
        pooled[:, :, 0],                                       # (B, NF)
        pooled[:, :, 1:1 + IMG].reshape(b, NF * IMG),          # (B, NF*H)
        pooled[:, :, 1 + IMG:1 + 2 * IMG].reshape(b, NF * IMG),  # (B, NF*W)
        hw_flat[:, 0, :],                                      # (B, H*W)
    ], axis=1)                                                 # (B, 520)

    # ---- out_to_lat (tiny matmuls -> XLA) ----
    z = _lin(conv_state, params["ol_w"])
    zs = _lin(z, params["ol_rws"])
    dz = _lin(_lin(z, params["ol_rw0"], act=True), params["ol_rw1"])
    lat_out = zs + dz

    # out_embs returned channels-last (B, H, W, NF) for convenience
    out_embs = [jnp.transpose(embs[:, i].reshape(b, NF, IMG, IMG), (0, 2, 3, 1))
                for i in range(embs.shape[1])]
    return lat_out, out_embs


# --------------------------------- main --------------------------------------
if __name__ == "__main__":
    key = jax.random.PRNGKey(0)
    kp, kx, kl = jax.random.split(key, 3)
    params = init_params(kp)
    # NCHW input, matching the PyTorch module: (B, C, H, W)
    x = jax.random.normal(kx, (BATCH, C_IN, IMG, IMG), jnp.float32)
    inj_lat = jax.random.normal(kl, (BATCH, LAT), jnp.float32)

    lat, out_embs = encoder_forward(params, x, inj_lat)
    jax.block_until_ready(lat)
    jax.block_until_ready(out_embs[-1])

    assert lat.shape == (BATCH, LAT)
    assert len(out_embs) == 1 + N_LAYERS * N_CALLS
    assert out_embs[-1].shape == (BATCH, IMG, IMG, NF)
    assert bool(jnp.all(jnp.isfinite(lat)))
    assert all(bool(jnp.all(jnp.isfinite(e))) for e in out_embs)
    print("KERNEL_OK")
</pallas_src>

<mosaic_0001>
module attributes {stable_mosaic.version = 11 : i64} {
  func.func @kernel(%arg0: i32, %arg1: memref<1x4x256xf32, #tpu.memory_space<vmem>>, %arg2: memref<1x4x40x24xf32, #tpu.memory_space<vmem>>, %arg3: memref<8x4xf32, #tpu.memory_space<vmem>>, %arg4: memref<8x1xf32, #tpu.memory_space<vmem>>, %arg5: memref<25x8xf32, #tpu.memory_space<vmem>>, %arg6: memref<25x1xf32, #tpu.memory_space<vmem>>, %arg7: memref<256x16xf32, #tpu.memory_space<vmem>>, %arg8: memref<256x16xf32, #tpu.memory_space<vmem>>, %arg9: memref<1x5x8x256xf32, #tpu.memory_space<vmem>>, %arg10: memref<1x8x33xf32, #tpu.memory_space<vmem>>, %arg11: memref<1x1x256xf32, #tpu.memory_space<vmem>>) attributes {dimension_semantics = [#tpu.dimension_semantics<parallel>], iteration_bounds = array<i64: 2>, scalar_prefetch = 0 : i64, scratch_operands = 0 : i64, tpu.core_type = #tpu.core_type<tc>, window_params = [{transform_indices = @transform_0, window_bounds = array<i64: 1, 4, 256>}, {transform_indices = @transform_1, window_bounds = array<i64: 1, 4, 40, 24>}, {pipeline_mode = #tpu.pipeline_mode<synchronous>, transform_indices = @transform_2, window_bounds = array<i64: 8, 4>}, {pipeline_mode = #tpu.pipeline_mode<synchronous>, transform_indices = @transform_3, window_bounds = array<i64: 8, 1>}, {pipeline_mode = #tpu.pipeline_mode<synchronous>, transform_indices = @transform_4, window_bounds = array<i64: 25, 8>}, {pipeline_mode = #tpu.pipeline_mode<synchronous>, transform_indices = @transform_5, window_bounds = array<i64: 25, 1>}, {pipeline_mode = #tpu.pipeline_mode<synchronous>, transform_indices = @transform_6, window_bounds = array<i64: 256, 16>}, {pipeline_mode = #tpu.pipeline_mode<synchronous>, transform_indices = @transform_7, window_bounds = array<i64: 256, 16>}, {transform_indices = @transform_8, window_bounds = array<i64: 1, 5, 8, 256>}, {transform_indices = @transform_9, window_bounds = array<i64: 1, 8, 33>}, {transform_indices = @transform_10, window_bounds = array<i64: 1, 1, 256>}]} {
    %c0 = arith.constant 0 : index
    %c0_0 = arith.constant 0 : index
    %0 = vector.load %arg3[%c0, %c0_0] : memref<8x4xf32, #tpu.memory_space<vmem>>, vector<8x4xf32>
    %c0_1 = arith.constant 0 : index
    %c0_2 = arith.constant 0 : index
    %c0_3 = arith.constant 0 : index
    %1 = vector.load %arg1[%c0_1, %c0_2, %c0_3] : memref<1x4x256xf32, #tpu.memory_space<vmem>>, vector<1x4x256xf32>
    %2 = vector.shape_cast %1 : vector<1x4x256xf32> to vector<4x256xf32>
    %cst = arith.constant dense<0.000000e+00> : vector<8x256xf32>
    %3 = tpu.matmul %0, %2, %cst {dimension_numbers = #tpu.dot_dimension_numbers<[1], [0], [0], [1], [0, 0, 1, 1], [], []>} : vector<8x4xf32>, vector<4x256xf32>, vector<8x256xf32> -> vector<8x256xf32>
    %c0_4 = arith.constant 0 : index
    %c0_5 = arith.constant 0 : index
    %4 = vector.load %arg4[%c0_4, %c0_5] : memref<8x1xf32, #tpu.memory_space<vmem>>, vector<8x1xf32>
    %5 = vector.broadcast %4 : vector<8x1xf32> to vector<8x256xf32>
    %6 = arith.addf %3, %5 : vector<8x256xf32>
    %c0_6 = arith.constant 0 : index
    %c0_7 = arith.constant 0 : index
    %c0_8 = arith.constant 0 : index
    %c0_9 = arith.constant 0 : index
    %7 = vector.load %arg9[%c0_6, %c0_7, %c0_8, %c0_9] : memref<1x5x8x256xf32, #tpu.memory_space<vmem>>, vector<1x1x8x256xf32>
    %8 = vector.shape_cast %7 : vector<1x1x8x256xf32> to vector<8x256xf32>
    %9 = vector.shape_cast %6 : vector<8x256xf32> to vector<1x1x8x256xf32>
    tpu.vector_store %arg9[%c0_6, %c0_7, %c0_8, %c0_9], %9 {strides = array<i32>} : memref<1x5x8x256xf32, #tpu.memory_space<vmem>>, vector<1x1x8x256xf32>,
    %10 = tpu.iota {dimensions = array<i32: 1>} : vector<8x256xi32>
    %c15_i32 = arith.constant 15 : i32
    %11 = vector.broadcast %c15_i32 : i32 to vector<8x256xi32>
    %12 = arith.andi %10, %11 : vector<8x256xi32>
    %c0_10 = arith.constant 0 : index
    %c0_11 = arith.constant 0 : index
    %c0_12 = arith.constant 0 : index
    %c0_13 = arith.constant 0 : index
    %13 = vector.load %arg2[%c0_10, %c0_11, %c0_12, %c0_13] : memref<1x4x40x24xf32, #tpu.memory_space<vmem>>, vector<1x1x40x24xf32>
    %14 = vector.shape_cast %13 : vector<1x1x40x24xf32> to vector<40x24xf32>
    %15 = vector.extract_strided_slice %14 {offsets = [0, 0], sizes = [8, 24], strides = [1, 1]} : vector<40x24xf32> to vector<8x24xf32>
    %16 = vector.extract_strided_slice %14 {offsets = [8, 0], sizes = [8, 24], strides = [1, 1]} : vector<40x24xf32> to vector<8x24xf32>
    %17 = vector.extract_strided_slice %14 {offsets = [16, 0], sizes = [8, 8], strides = [1, 1]} : vector<40x24xf32> to vector<8x8xf32>
    %18 = vector.extract_strided_slice %14 {offsets = [24, 0], sizes = [8, 8], strides = [1, 1]} : vector<40x24xf32> to vector<8x8xf32>
    %19 = vector.extract_strided_slice %14 {offsets = [32, 0], sizes = [8, 1], strides = [1, 1]} : vector<40x24xf32> to vector<8x1xf32>
    %20 = vector.extract_strided_slice %14 {offsets = [32, 1], sizes = [8, 1], strides = [1, 1]} : vector<40x24xf32> to vector<8x1xf32>
    %21 = vector.extract_strided_slice %14 {offsets = [32, 2], sizes = [8, 1], strides = [1, 1]} : vector<40x24xf32> to vector<8x1xf32>
    %22 = vector.extract_strided_slice %14 {offsets = [32, 3], sizes = [8, 1], strides = [1, 1]} : vector<40x24xf32> to vector<8x1xf32>
    %c248_i32 = arith.constant 248 : i32
    %23 = tpu.dynamic_rotate %6 by %c248_i32 dim 1 : vector<8x256xf32>, i32 -> vector<8x256xf32>
    %c8_i32 = arith.constant 8 : i32
    %24 = tpu.dynamic_rotate %6 by %c8_i32 dim 1 : vector<8x256xf32>, i32 -> vector<8x256xf32>
    %c8_i32_14 = arith.constant 8 : i32
    %25 = vector.broadcast %c8_i32_14 : i32 to vector<8x256xi32>
    %26 = arith.cmpi slt, %12, %25 : vector<8x256xi32>
    %cst_15 = arith.constant 0.000000e+00 : f32
    %27 = vector.broadcast %cst_15 : f32 to vector<8x256xf32>
    %28 = arith.select %26, %23, %27 : vector<8x256xi1>, vector<8x256xf32>
    %c8_i32_16 = arith.constant 8 : i32
    %29 = vector.broadcast %c8_i32_16 : i32 to vector<8x256xi32>
    %30 = arith.cmpi sge, %12, %29 : vector<8x256xi32>
    %cst_17 = arith.constant 0.000000e+00 : f32
    %31 = vector.broadcast %cst_17 : f32 to vector<8x256xf32>
    %32 = arith.select %30, %24, %31 : vector<8x256xi1>, vector<8x256xf32>
    %33 = arith.subf %28, %32 : vector<8x256xf32>
    %c128_i32 = arith.constant 128 : i32
    %34 = tpu.dynamic_rotate %6 by %c128_i32 dim 1 : vector<8x256xf32>, i32 -> vector<8x256xf32>
    %c128_i32_18 = arith.constant 128 : i32
    %35 = tpu.dynamic_rotate %6 by %c128_i32_18 dim 1 : vector<8x256xf32>, i32 -> vector<8x256xf32>
    %c128_i32_19 = arith.constant 128 : i32
    %36 = vector.broadcast %c128_i32_19 : i32 to vector<8x256xi32>
    %37 = arith.cmpi slt, %10, %36 : vector<8x256xi32>
    %cst_20 = arith.constant 0.000000e+00 : f32
    %38 = vector.broadcast %cst_20 : f32 to vector<8x256xf32>
    %39 = arith.select %37, %34, %38 : vector<8x256xi1>, vector<8x256xf32>
    %c128_i32_21 = arith.constant 128 : i32
    %40 = vector.broadcast %c128_i32_21 : i32 to vector<8x256xi32>
    %41 = arith.cmpi sge, %10, %40 : vector<8x256xi32>
    %cst_22 = arith.constant 0.000000e+00 : f32
    %42 = vector.broadcast %cst_22 : f32 to vector<8x256xf32>
    %43 = arith.select %41, %35, %42 : vector<8x256xi1>, vector<8x256xf32>
    %44 = arith.subf %39, %43 : vector<8x256xf32>
    %45 = tpu.concatenate %6, %33, %44 in 0 : vector<8x256xf32>, vector<8x256xf32>, vector<8x256xf32> -> vector<24x256xf32>
    %cst_23 = arith.constant dense<0.000000e+00> : vector<24xf32>
    %46 = vector.multi_reduction <add>, %45, %cst_23 [1] : vector<24x256xf32> to vector<24xf32>
    %47 = vector.shape_cast %46 : vector<24xf32> to vector<24x1xf32>
    %cst_24 = arith.constant 2.560000e+02 : f32
    %48 = vector.broadcast %cst_24 : f32 to vector<24x1xf32>
    %49 = arith.divf %47, %48 : vector<24x1xf32>
    %50 = vector.broadcast %49 : vector<24x1xf32> to vector<24x256xf32>
    %51 = arith.subf %45, %50 : vector<24x256xf32>
    %52 = arith.mulf %51, %51 : vector<24x256xf32>
    %cst_25 = arith.constant dense<0.000000e+00> : vector<24xf32>
    %53 = vector.multi_reduction <add>, %52, %cst_25 [1] : vector<24x256xf32> to vector<24xf32>
    %54 = vector.shape_cast %53 : vector<24xf32> to vector<24x1xf32>
    %cst_26 = arith.constant 2.560000e+02 : f32
    %55 = vector.broadcast %cst_26 : f32 to vector<24x1xf32>
    %56 = arith.divf %54, %55 : vector<24x1xf32>
    %57 = vector.broadcast %49 : vector<24x1xf32> to vector<24x256xf32>
    %58 = arith.subf %45, %57 : vector<24x256xf32>
    %cst_27 = arith.constant 9.99999974E-6 : f32
    %59 = vector.broadcast %cst_27 : f32 to vector<24x1xf32>
    %60 = arith.addf %56, %59 : vector<24x1xf32>
    %61 = math.rsqrt %60 : vector<24x1xf32>
    %62 = vector.broadcast %61 : vector<24x1xf32> to vector<24x256xf32>
    %63 = arith.mulf %58, %62 : vector<24x256xf32>
    %cst_28 = arith.constant dense<0.000000e+00> : vector<8x256xf32>
    %64 = tpu.matmul %16, %63, %cst_28 {dimension_numbers = #tpu.dot_dimension_numbers<[1], [0], [0], [1], [0, 0, 1, 1], [], []>} : vector<8x24xf32>, vector<24x256xf32>, vector<8x256xf32> -> vector<8x256xf32>
    %65 = vector.broadcast %22 : vector<8x1xf32> to vector<8x256xf32>
    %66 = arith.addf %64, %65 : vector<8x256xf32>
    %cst_29 = arith.constant dense<0.000000e+00> : vector<8x256xf32>
    %67 = tpu.matmul %15, %63, %cst_29 {dimension_numbers = #tpu.dot_dimension_numbers<[1], [0], [0], [1], [0, 0, 1, 1], [], []>} : vector<8x24xf32>, vector<24x256xf32>, vector<8x256xf32> -> vector<8x256xf32>
    %68 = vector.broadcast %19 : vector<8x1xf32> to vector<8x256xf32>
    %69 = arith.addf %67, %68 : vector<8x256xf32>
    %cst_30 = arith.constant 2.000000e-01 : f32
    %70 = vector.broadcast %cst_30 : f32 to vector<8x256xf32>
    %71 = arith.mulf %70, %69 : vector<8x256xf32>
    %72 = arith.maximumf %69, %71 : vector<8x256xf32>
    %cst_31 = arith.constant dense<0.000000e+00> : vector<8x256xf32>
    %73 = tpu.matmul %17, %72, %cst_31 {dimension_numbers = #tpu.dot_dimension_numbers<[1], [0], [0], [1], [0, 0, 1, 1], [], []>} : vector<8x8xf32>, vector<8x256xf32>, vector<8x256xf32> -> vector<8x256xf32>
    %74 = vector.broadcast %20 : vector<8x1xf32> to vector<8x256xf32>
    %75 = arith.addf %73, %74 : vector<8x256xf32>
    %cst_32 = arith.constant 2.000000e-01 : f32
    %76 = vector.broadcast %cst_32 : f32 to vector<8x256xf32>
    %77 = arith.mulf %76, %75 : vector<8x256xf32>
    %78 = arith.maximumf %75, %77 : vector<8x256xf32>
    %cst_33 = arith.constant dense<0.000000e+00> : vector<8x256xf32>
    %79 = tpu.matmul %18, %78, %cst_33 {dimension_numbers = #tpu.dot_dimension_numbers<[1], [0], [0], [1], [0, 0, 1, 1], [], []>} : vector<8x8xf32>, vector<8x256xf32>, vector<8x256xf32> -> vector<8x256xf32>
    %80 = vector.broadcast %21 : vector<8x1xf32> to vector<8x256xf32>
    %81 = arith.addf %79, %80 : vector<8x256xf32>
    %82 = arith.addf %66, %81 : vector<8x256xf32>
    %c0_34 = arith.constant 0 : index
    %c1 = arith.constant 1 : index
    %c0_35 = arith.constant 0 : index
    %c0_36 = arith.constant 0 : index
    %83 = vector.load %arg9[%c0_34, %c1, %c0_35, %c0_36] : memref<1x5x8x256xf32, #tpu.memory_space<vmem>>, vector<1x1x8x256xf32>
    %84 = vector.shape_cast %83 : vector<1x1x8x256xf32> to vector<8x256xf32>
    %85 = vector.shape_cast %82 : vector<8x256xf32> to vector<1x1x8x256xf32>
    tpu.vector_store %arg9[%c0_34, %c1, %c0_35, %c0_36], %85 {strides = array<i32>} : memref<1x5x8x256xf32, #tpu.memory_space<vmem>>, vector<1x1x8x256xf32>,
    %c0_37 = arith.constant 0 : index
    %c1_38 = arith.constant 1 : index
    %c0_39 = arith.constant 0 : index
    %c0_40 = arith.constant 0 : index
    %86 = vector.load %arg2[%c0_37, %c1_38, %c0_39, %c0_40] : memref<1x4x40x24xf32, #tpu.memory_space<vmem>>, vector<1x1x40x24xf32>
    %87 = vector.shape_cast %86 : vector<1x1x40x24xf32> to vector<40x24xf32>
    %88 = vector.extract_strided_slice %87 {offsets = [0, 0], sizes = [8, 24], strides = [1, 1]} : vector<40x24xf32> to vector<8x24xf32>
    %89 = vector.extract_strided_slice %87 {offsets = [8, 0], sizes = [8, 24], strides = [1, 1]} : vector<40x24xf32> to vector<8x24xf32>
    %90 = vector.extract_strided_slice %87 {offsets = [16, 0], sizes = [8, 8], strides = [1, 1]} : vector<40x24xf32> to vector<8x8xf32>
    %91 = vector.extract_strided_slice %87 {offsets = [24, 0], sizes = [8, 8], strides = [1, 1]} : vector<40x24xf32> to vector<8x8xf32>
    %92 = vector.extract_strided_slice %87 {offsets = [32, 0], sizes = [8, 1], strides = [1, 1]} : vector<40x24xf32> to vector<8x1xf32>
    %93 = vector.extract_strided_slice %87 {offsets = [32, 1], sizes = [8, 1], strides = [1, 1]} : vector<40x24xf32> to vector<8x1xf32>
    %94 = vector.extract_strided_slice %87 {offsets = [32, 2], sizes = [8, 1], strides = [1, 1]} : vector<40x24xf32> to vector<8x1xf32>
    %95 = vector.extract_strided_slice %87 {offsets = [32, 3], sizes = [8, 1], strides = [1, 1]} : vector<40x24xf32> to vector<8x1xf32>
    %c252_i32 = arith.constant 252 : i32
    %96 = tpu.dynamic_rotate %82 by %c252_i32 dim 1 : vector<8x256xf32>, i32 -> vector<8x256xf32>
    %c4_i32 = arith.constant 4 : i32
    %97 = tpu.dynamic_rotate %82 by %c4_i32 dim 1 : vector<8x256xf32>, i32 -> vector<8x256xf32>
    %c12_i32 = arith.constant 12 : i32
    %98 = vector.broadcast %c12_i32 : i32 to vector<8x256xi32>
    %99 = arith.cmpi slt, %12, %98 : vector<8x256xi32>
    %cst_41 = arith.constant 0.000000e+00 : f32
    %100 = vector.broadcast %cst_41 : f32 to vector<8x256xf32>
    %101 = arith.select %99, %96, %100 : vector<8x256xi1>, vector<8x256xf32>
    %c4_i32_42 = arith.constant 4 : i32
    %102 = vector.broadcast %c4_i32_42 : i32 to vector<8x256xi32>
    %103 = arith.cmpi sge, %12, %102 : vector<8x256xi32>
    %cst_43 = arith.constant 0.000000e+00 : f32
    %104 = vector.broadcast %cst_43 : f32 to vector<8x256xf32>
    %105 = arith.select %103, %97, %104 : vector<8x256xi1>, vector<8x256xf32>
    %106 = arith.subf %101, %105 : vector<8x256xf32>
    %c192_i32 = arith.constant 192 : i32
    %107 = tpu.dynamic_rotate %82 by %c192_i32 dim 1 : vector<8x256xf32>, i32 -> vector<8x256xf32>
    %c64_i32 = arith.constant 64 : i32
    %108 = tpu.dynamic_rotate %82 by %c64_i32 dim 1 : vector<8x256xf32>, i32 -> vector<8x256xf32>
    %c192_i32_44 = arith.constant 192 : i32
    %109 = vector.broadcast %c192_i32_44 : i32 to vector<8x256xi32>
    %110 = arith.cmpi slt, %10, %109 : vector<8x256xi32>
    %cst_45 = arith.constant 0.000000e+00 : f32
    %111 = vector.broadcast %cst_45 : f32 to vector<8x256xf32>
    %112 = arith.select %110, %107, %111 : vector<8x256xi1>, vector<8x256xf32>
    %c64_i32_46 = arith.constant 64 : i32
    %113 = vector.broadcast %c64_i32_46 : i32 to vector<8x256xi32>
    %114 = arith.cmpi sge, %10, %113 : vector<8x256xi32>
    %cst_47 = arith.constant 0.000000e+00 : f32
    %115 = vector.broadcast %cst_47 : f32 to vector<8x256xf32>
    %116 = arith.select %114, %108, %115 : vector<8x256xi1>, vector<8x256xf32>
    %117 = arith.subf %112, %116 : vector<8x256xf32>
    %118 = tpu.concatenate %82, %106, %117 in 0 : vector<8x256xf32>, vector<8x256xf32>, vector<8x256xf32> -> vector<24x256xf32>
    %cst_48 = arith.constant dense<0.000000e+00> : vector<24xf32>
    %119 = vector.multi_reduction <add>, %118, %cst_48 [1] : vector<24x256xf32> to vector<24xf32>
    %120 = vector.shape_cast %119 : vector<24xf32> to vector<24x1xf32>
    %cst_49 = arith.constant 2.560000e+02 : f32
    %121 = vector.broadcast %cst_49 : f32 to vector<24x1xf32>
    %122 = arith.divf %120, %121 : vector<24x1xf32>
    %123 = vector.broadcast %122 : vector<24x1xf32> to vector<24x256xf32>
    %124 = arith.subf %118, %123 : vector<24x256xf32>
    %125 = arith.mulf %124, %124 : vector<24x256xf32>
    %cst_50 = arith.constant dense<0.000000e+00> : vector<24xf32>
    %126 = vector.multi_reduction <add>, %125, %cst_50 [1] : vector<24x256xf32> to vector<24xf32>
    %127 = vector.shape_cast %126 : vector<24xf32> to vector<24x1xf32>
    %cst_51 = arith.constant 2.560000e+02 : f32
    %128 = vector.broadcast %cst_51 : f32 to vector<24x1xf32>
    %129 = arith.divf %127, %128 : vector<24x1xf32>
    %130 = vector.broadcast %122 : vector<24x1xf32> to vector<24x256xf32>
    %131 = arith.subf %118, %130 : vector<24x256xf32>
    %cst_52 = arith.constant 9.99999974E-6 : f32
    %132 = vector.broadcast %cst_52 : f32 to vector<24x1xf32>
    %133 = arith.addf %129, %132 : vector<24x1xf32>
    %134 = math.rsqrt %133 : vector<24x1xf32>
    %135 = vector.broadcast %134 : vector<24x1xf32> to vector<24x256xf32>
    %136 = arith.mulf %131, %135 : vector<24x256xf32>
    %cst_53 = arith.constant dense<0.000000e+00> : vector<8x256xf32>
    %137 = tpu.matmul %89, %136, %cst_53 {dimension_numbers = #tpu.dot_dimension_numbers<[1], [0], [0], [1], [0, 0, 1, 1], [], []>} : vector<8x24xf32>, vector<24x256xf32>, vector<8x256xf32> -> vector<8x256xf32>
    %138 = vector.broadcast %95 : vector<8x1xf32> to vector<8x256xf32>
    %139 = arith.addf %137, %138 : vector<8x256xf32>
    %cst_54 = arith.constant dense<0.000000e+00> : vector<8x256xf32>
    %140 = tpu.matmul %88, %136, %cst_54 {dimension_numbers = #tpu.dot_dimension_numbers<[1], [0], [0], [1], [0, 0, 1, 1], [], []>} : vector<8x24xf32>, vector<24x256xf32>, vector<8x256xf32> -> vector<8x256xf32>
    %141 = vector.broadcast %92 : vector<8x1xf32> to vector<8x256xf32>
    %142 = arith.addf %140, %141 : vector<8x256xf32>
    %cst_55 = arith.constant 2.000000e-01 : f32
    %143 = vector.broadcast %cst_55 : f32 to vector<8x256xf32>
    %144 = arith.mulf %143, %142 : vector<8x256xf32>
    %145 = arith.maximumf %142, %144 : vector<8x256xf32>
    %cst_56 = arith.constant dense<0.000000e+00> : vector<8x256xf32>
    %146 = tpu.matmul %90, %145, %cst_56 {dimension_numbers = #tpu.dot_dimension_numbers<[1], [0], [0], [1], [0, 0, 1, 1], [], []>} : vector<8x8xf32>, vector<8x256xf32>, vector<8x256xf32> -> vector<8x256xf32>
    %147 = vector.broadcast %93 : vector<8x1xf32> to vector<8x256xf32>
    %148 = arith.addf %146, %147 : vector<8x256xf32>
    %cst_57 = arith.constant 2.000000e-01 : f32
    %149 = vector.broadcast %cst_57 : f32 to vector<8x256xf32>
    %150 = arith.mulf %149, %148 : vector<8x256xf32>
    %151 = arith.maximumf %148, %150 : vector<8x256xf32>
    %cst_58 = arith.constant dense<0.000000e+00> : vector<8x256xf32>
    %152 = tpu.matmul %91, %151, %cst_58 {dimension_numbers = #tpu.dot_dimension_numbers<[1], [0], [0], [1], [0, 0, 1, 1], [], []>} : vector<8x8xf32>, vector<8x256xf32>, vector<8x256xf32> -> vector<8x256xf32>
    %153 = vector.broadcast %94 : vector<8x1xf32> to vector<8x256xf32>
    %154 = arith.addf %152, %153 : vector<8x256xf32>
    %155 = arith.addf %139, %154 : vector<8x256xf32>
    %c0_59 = arith.constant 0 : index
    %c2 = arith.constant 2 : index
    %c0_60 = arith.constant 0 : index
    %c0_61 = arith.constant 0 : index
    %156 = vector.load %arg9[%c0_59, %c2, %c0_60, %c0_61] : memref<1x5x8x256xf32, #tpu.memory_space<vmem>>, vector<1x1x8x256xf32>
    %157 = vector.shape_cast %156 : vector<1x1x8x256xf32> to vector<8x256xf32>
    %158 = vector.shape_cast %155 : vector<8x256xf32> to vector<1x1x8x256xf32>
    tpu.vector_store %arg9[%c0_59, %c2, %c0_60, %c0_61], %158 {strides = array<i32>} : memref<1x5x8x256xf32, #tpu.memory_space<vmem>>, vector<1x1x8x256xf32>,
    %c0_62 = arith.constant 0 : index
    %c2_63 = arith.constant 2 : index
    %c0_64 = arith.constant 0 : index
    %c0_65 = arith.constant 0 : index
    %159 = vector.load %arg2[%c0_62, %c2_63, %c0_64, %c0_65] : memref<1x4x40x24xf32, #tpu.memory_space<vmem>>, vector<1x1x40x24xf32>
    %160 = vector.shape_cast %159 : vector<1x1x40x24xf32> to vector<40x24xf32>
    %161 = vector.extract_strided_slice %160 {offsets = [0, 0], sizes = [8, 24], strides = [1, 1]} : vector<40x24xf32> to vector<8x24xf32>
    %162 = vector.extract_strided_slice %160 {offsets = [8, 0], sizes = [8, 24], strides = [1, 1]} : vector<40x24xf32> to vector<8x24xf32>
    %163 = vector.extract_strided_slice %160 {offsets = [16, 0], sizes = [8, 8], strides = [1, 1]} : vector<40x24xf32> to vector<8x8xf32>
    %164 = vector.extract_strided_slice %160 {offsets = [24, 0], sizes = [8, 8], strides = [1, 1]} : vector<40x24xf32> to vector<8x8xf32>
    %165 = vector.extract_strided_slice %160 {offsets = [32, 0], sizes = [8, 1], strides = [1, 1]} : vector<40x24xf32> to vector<8x1xf32>
    %166 = vector.extract_strided_slice %160 {offsets = [32, 1], sizes = [8, 1], strides = [1, 1]} : vector<40x24xf32> to vector<8x1xf32>
    %167 = vector.extract_strided_slice %160 {offsets = [32, 2], sizes = [8, 1], strides = [1, 1]} : vector<40x24xf32> to vector<8x1xf32>
    %168 = vector.extract_strided_slice %160 {offsets = [32, 3], sizes = [8, 1], strides = [1, 1]} : vector<40x24xf32> to vector<8x1xf32>
    %c254_i32 = arith.constant 254 : i32
    %169 = tpu.dynamic_rotate %155 by %c254_i32 dim 1 : vector<8x256xf32>, i32 -> vector<8x256xf32>
    %c2_i32 = arith.constant 2 : i32
    %170 = tpu.dynamic_rotate %155 by %c2_i32 dim 1 : vector<8x256xf32>, i32 -> vector<8x256xf32>
    %c14_i32 = arith.constant 14 : i32
    %171 = vector.broadcast %c14_i32 : i32 to vector<8x256xi32>
    %172 = arith.cmpi slt, %12, %171 : vector<8x256xi32>
    %cst_66 = arith.constant 0.000000e+00 : f32
    %173 = vector.broadcast %cst_66 : f32 to vector<8x256xf32>
    %174 = arith.select %172, %169, %173 : vector<8x256xi1>, vector<8x256xf32>
    %c2_i32_67 = arith.constant 2 : i32
    %175 = vector.broadcast %c2_i32_67 : i32 to vector<8x256xi32>
    %176 = arith.cmpi sge, %12, %175 : vector<8x256xi32>
    %cst_68 = arith.constant 0.000000e+00 : f32
    %177 = vector.broadcast %cst_68 : f32 to vector<8x256xf32>
    %178 = arith.select %176, %170, %177 : vector<8x256xi1>, vector<8x256xf32>
    %179 = arith.subf %174, %178 : vector<8x256xf32>
    %c224_i32 = arith.constant 224 : i32
    %180 = tpu.dynamic_rotate %155 by %c224_i32 dim 1 : vector<8x256xf32>, i32 -> vector<8x256xf32>
    %c32_i32 = arith.constant 32 : i32
    %181 = tpu.dynamic_rotate %155 by %c32_i32 dim 1 : vector<8x256xf32>, i32 -> vector<8x256xf32>
    %c224_i32_69 = arith.constant 224 : i32
    %182 = vector.broadcast %c224_i32_69 : i32 to vector<8x256xi32>
    %183 = arith.cmpi slt, %10, %182 : vector<8x256xi32>
    %cst_70 = arith.constant 0.000000e+00 : f32
    %184 = vector.broadcast %cst_70 : f32 to vector<8x256xf32>
    %185 = arith.select %183, %180, %184 : vector<8x256xi1>, vector<8x256xf32>
    %c32_i32_71 = arith.constant 32 : i32
    %186 = vector.broadcast %c32_i32_71 : i32 to vector<8x256xi32>
    %187 = arith.cmpi sge, %10, %186 : vector<8x256xi32>
    %cst_72 = arith.constant 0.000000e+00 : f32
    %188 = vector.broadcast %cst_72 : f32 to vector<8x256xf32>
    %189 = arith.select %187, %181, %188 : vector<8x256xi1>, vector<8x256xf32>
    %190 = arith.subf %185, %189 : vector<8x256xf32>
    %191 = tpu.concatenate %155, %179, %190 in 0 : vector<8x256xf32>, vector<8x256xf32>, vector<8x256xf32> -> vector<24x256xf32>
    %cst_73 = arith.constant dense<0.000000e+00> : vector<24xf32>
    %192 = vector.multi_reduction <add>, %191, %cst_73 [1] : vector<24x256xf32> to vector<24xf32>
    %193 = vector.shape_cast %192 : vector<24xf32> to vector<24x1xf32>
    %cst_74 = arith.constant 2.560000e+02 : f32
    %194 = vector.broadcast %cst_74 : f32 to vector<24x1xf32>
    %195 = arith.divf %193, %194 : vector<24x1xf32>
    %196 = vector.broadcast %195 : vector<24x1xf32> to vector<24x256xf32>
    %197 = arith.subf %191, %196 : vector<24x256xf32>
    %198 = arith.mulf %197, %197 : vector<24x256xf32>
    %cst_75 = arith.constant dense<0.000000e+00> : vector<24xf32>
    %199 = vector.multi_reduction <add>, %198, %cst_75 [1] : vector<24x256xf32> to vector<24xf32>
    %200 = vector.shape_cast %199 : vector<24xf32> to vector<24x1xf32>
    %cst_76 = arith.constant 2.560000e+02 : f32
    %201 = vector.broadcast %cst_76 : f32 to vector<24x1xf32>
    %202 = arith.divf %200, %201 : vector<24x1xf32>
    %203 = vector.broadcast %195 : vector<24x1xf32> to vector<24x256xf32>
    %204 = arith.subf %191, %203 : vector<24x256xf32>
    %cst_77 = arith.constant 9.99999974E-6 : f32
    %205 = vector.broadcast %cst_77 : f32 to vector<24x1xf32>
    %206 = arith.addf %202, %205 : vector<24x1xf32>
    %207 = math.rsqrt %206 : vector<24x1xf32>
    %208 = vector.broadcast %207 : vector<24x1xf32> to vector<24x256xf32>
    %209 = arith.mulf %204, %208 : vector<24x256xf32>
    %cst_78 = arith.constant dense<0.000000e+00> : vector<8x256xf32>
    %210 = tpu.matmul %162, %209, %cst_78 {dimension_numbers = #tpu.dot_dimension_numbers<[1], [0], [0], [1], [0, 0, 1, 1], [], []>} : vector<8x24xf32>, vector<24x256xf32>, vector<8x256xf32> -> vector<8x256xf32>
    %211 = vector.broadcast %168 : vector<8x1xf32> to vector<8x256xf32>
    %212 = arith.addf %210, %211 : vector<8x256xf32>
    %cst_79 = arith.constant dense<0.000000e+00> : vector<8x256xf32>
    %213 = tpu.matmul %161, %209, %cst_79 {dimension_numbers = #tpu.dot_dimension_numbers<[1], [0], [0], [1], [0, 0, 1, 1], [], []>} : vector<8x24xf32>, vector<24x256xf32>, vector<8x256xf32> -> vector<8x256xf32>
    %214 = vector.broadcast %165 : vector<8x1xf32> to vector<8x256xf32>
    %215 = arith.addf %213, %214 : vector<8x256xf32>
    %cst_80 = arith.constant 2.000000e-01 : f32
    %216 = vector.broadcast %cst_80 : f32 to vector<8x256xf32>
    %217 = arith.mulf %216, %215 : vector<8x256xf32>
    %218 = arith.maximumf %215, %217 : vector<8x256xf32>
    %cst_81 = arith.constant dense<0.000000e+00> : vector<8x256xf32>
    %219 = tpu.matmul %163, %218, %cst_81 {dimension_numbers = #tpu.dot_dimension_numbers<[1], [0], [0], [1], [0, 0, 1, 1], [], []>} : vector<8x8xf32>, vector<8x256xf32>, vector<8x256xf32> -> vector<8x256xf32>
    %220 = vector.broadcast %166 : vector<8x1xf32> to vector<8x256xf32>
    %221 = arith.addf %219, %220 : vector<8x256xf32>
    %cst_82 = arith.constant 2.000000e-01 : f32
    %222 = vector.broadcast %cst_82 : f32 to vector<8x256xf32>
    %223 = arith.mulf %222, %221 : vector<8x256xf32>
    %224 = arith.maximumf %221, %223 : vector<8x256xf32>
    %cst_83 = arith.constant dense<0.000000e+00> : vector<8x256xf32>
    %225 = tpu.matmul %164, %224, %cst_83 {dimension_numbers = #tpu.dot_dimension_numbers<[1], [0], [0], [1], [0, 0, 1, 1], [], []>} : vector<8x8xf32>, vector<8x256xf32>, vector<8x256xf32> -> vector<8x256xf32>
    %226 = vector.broadcast %167 : vector<8x1xf32> to vector<8x256xf32>
    %227 = arith.addf %225, %226 : vector<8x256xf32>
    %228 = arith.addf %212, %227 : vector<8x256xf32>
    %c0_84 = arith.constant 0 : index
    %c3 = arith.constant 3 : index
    %c0_85 = arith.constant 0 : index
    %c0_86 = arith.constant 0 : index
    %229 = vector.load %arg9[%c0_84, %c3, %c0_85, %c0_86] : memref<1x5x8x256xf32, #tpu.memory_space<vmem>>, vector<1x1x8x256xf32>
    %230 = vector.shape_cast %229 : vector<1x1x8x256xf32> to vector<8x256xf32>
    %231 = vector.shape_cast %228 : vector<8x256xf32> to vector<1x1x8x256xf32>
    tpu.vector_store %arg9[%c0_84, %c3, %c0_85, %c0_86], %231 {strides = array<i32>} : memref<1x5x8x256xf32, #tpu.memory_space<vmem>>, vector<1x1x8x256xf32>,
    %c0_87 = arith.constant 0 : index
    %c3_88 = arith.constant 3 : index
    %c0_89 = arith.constant 0 : index
    %c0_90 = arith.constant 0 : index
    %232 = vector.load %arg2[%c0_87, %c3_88, %c0_89, %c0_90] : memref<1x4x40x24xf32, #tpu.memory_space<vmem>>, vector<1x1x40x24xf32>
    %233 = vector.shape_cast %232 : vector<1x1x40x24xf32> to vector<40x24xf32>
    %234 = vector.extract_strided_slice %233 {offsets = [0, 0], sizes = [8, 24], strides = [1, 1]} : vector<40x24xf32> to vector<8x24xf32>
    %235 = vector.extract_strided_slice %233 {offsets = [8, 0], sizes = [8, 24], strides = [1, 1]} : vector<40x24xf32> to vector<8x24xf32>
    %236 = vector.extract_strided_slice %233 {offsets = [16, 0], sizes = [8, 8], strides = [1, 1]} : vector<40x24xf32> to vector<8x8xf32>
    %237 = vector.extract_strided_slice %233 {offsets = [24, 0], sizes = [8, 8], strides = [1, 1]} : vector<40x24xf32> to vector<8x8xf32>
    %238 = vector.extract_strided_slice %233 {offsets = [32, 0], sizes = [8, 1], strides = [1, 1]} : vector<40x24xf32> to vector<8x1xf32>
    %239 = vector.extract_strided_slice %233 {offsets = [32, 1], sizes = [8, 1], strides = [1, 1]} : vector<40x24xf32> to vector<8x1xf32>
    %240 = vector.extract_strided_slice %233 {offsets = [32, 2], sizes = [8, 1], strides = [1, 1]} : vector<40x24xf32> to vector<8x1xf32>
    %241 = vector.extract_strided_slice %233 {offsets = [32, 3], sizes = [8, 1], strides = [1, 1]} : vector<40x24xf32> to vector<8x1xf32>
    %c255_i32 = arith.constant 255 : i32
    %242 = tpu.dynamic_rotate %228 by %c255_i32 dim 1 : vector<8x256xf32>, i32 -> vector<8x256xf32>
    %c1_i32 = arith.constant 1 : i32
    %243 = tpu.dynamic_rotate %228 by %c1_i32 dim 1 : vector<8x256xf32>, i32 -> vector<8x256xf32>
    %c15_i32_91 = arith.constant 15 : i32
    %244 = vector.broadcast %c15_i32_91 : i32 to vector<8x256xi32>
    %245 = arith.cmpi slt, %12, %244 : vector<8x256xi32>
    %cst_92 = arith.constant 0.000000e+00 : f32
    %246 = vector.broadcast %cst_92 : f32 to vector<8x256xf32>
    %247 = arith.select %245, %242, %246 : vector<8x256xi1>, vector<8x256xf32>
    %c1_i32_93 = arith.constant 1 : i32
    %248 = vector.broadcast %c1_i32_93 : i32 to vector<8x256xi32>
    %249 = arith.cmpi sge, %12, %248 : vector<8x256xi32>
    %cst_94 = arith.constant 0.000000e+00 : f32
    %250 = vector.broadcast %cst_94 : f32 to vector<8x256xf32>
    %251 = arith.select %249, %243, %250 : vector<8x256xi1>, vector<8x256xf32>
    %252 = arith.subf %247, %251 : vector<8x256xf32>
    %c240_i32 = arith.constant 240 : i32
    %253 = tpu.dynamic_rotate %228 by %c240_i32 dim 1 : vector<8x256xf32>, i32 -> vector<8x256xf32>
    %c16_i32 = arith.constant 16 : i32
    %254 = tpu.dynamic_rotate %228 by %c16_i32 dim 1 : vector<8x256xf32>, i32 -> vector<8x256xf32>
    %c240_i32_95 = arith.constant 240 : i32
    %255 = vector.broadcast %c240_i32_95 : i32 to vector<8x256xi32>
    %256 = arith.cmpi slt, %10, %255 : vector<8x256xi32>
    %cst_96 = arith.constant 0.000000e+00 : f32
    %257 = vector.broadcast %cst_96 : f32 to vector<8x256xf32>
    %258 = arith.select %256, %253, %257 : vector<8x256xi1>, vector<8x256xf32>
    %c16_i32_97 = arith.constant 16 : i32
    %259 = vector.broadcast %c16_i32_97 : i32 to vector<8x256xi32>
    %260 = arith.cmpi sge, %10, %259 : vector<8x256xi32>
    %cst_98 = arith.constant 0.000000e+00 : f32
    %261 = vector.broadcast %cst_98 : f32 to vector<8x256xf32>
    %262 = arith.select %260, %254, %261 : vector<8x256xi1>, vector<8x256xf32>
    %263 = arith.subf %258, %262 : vector<8x256xf32>
    %264 = tpu.concatenate %228, %252, %263 in 0 : vector<8x256xf32>, vector<8x256xf32>, vector<8x256xf32> -> vector<24x256xf32>
    %cst_99 = arith.constant dense<0.000000e+00> : vector<24xf32>
    %265 = vector.multi_reduction <add>, %264, %cst_99 [1] : vector<24x256xf32> to vector<24xf32>
    %266 = vector.shape_cast %265 : vector<24xf32> to vector<24x1xf32>
    %cst_100 = arith.constant 2.560000e+02 : f32
    %267 = vector.broadcast %cst_100 : f32 to vector<24x1xf32>
    %268 = arith.divf %266, %267 : vector<24x1xf32>
    %269 = vector.broadcast %268 : vector<24x1xf32> to vector<24x256xf32>
    %270 = arith.subf %264, %269 : vector<24x256xf32>
    %271 = arith.mulf %270, %270 : vector<24x256xf32>
    %cst_101 = arith.constant dense<0.000000e+00> : vector<24xf32>
    %272 = vector.multi_reduction <add>, %271, %cst_101 [1] : vector<24x256xf32> to vector<24xf32>
    %273 = vector.shape_cast %272 : vector<24xf32> to vector<24x1xf32>
    %cst_102 = arith.constant 2.560000e+02 : f32
    %274 = vector.broadcast %cst_102 : f32 to vector<24x1xf32>
    %275 = arith.divf %273, %274 : vector<24x1xf32>
    %276 = vector.broadcast %268 : vector<24x1xf32> to vector<24x256xf32>
    %277 = arith.subf %264, %276 : vector<24x256xf32>
    %cst_103 = arith.constant 9.99999974E-6 : f32
    %278 = vector.broadcast %cst_103 : f32 to vector<24x1xf32>
    %279 = arith.addf %275, %278 : vector<24x1xf32>
    %280 = math.rsqrt %279 : vector<24x1xf32>
    %281 = vector.broadcast %280 : vector<24x1xf32> to vector<24x256xf32>
    %282 = arith.mulf %277, %281 : vector<24x256xf32>
    %cst_104 = arith.constant dense<0.000000e+00> : vector<8x256xf32>
    %283 = tpu.matmul %235, %282, %cst_104 {dimension_numbers = #tpu.dot_dimension_numbers<[1], [0], [0], [1], [0, 0, 1, 1], [], []>} : vector<8x24xf32>, vector<24x256xf32>, vector<8x256xf32> -> vector<8x256xf32>
    %284 = vector.broadcast %241 : vector<8x1xf32> to vector<8x256xf32>
    %285 = arith.addf %283, %284 : vector<8x256xf32>
    %cst_105 = arith.constant dense<0.000000e+00> : vector<8x256xf32>
    %286 = tpu.matmul %234, %282, %cst_105 {dimension_numbers = #tpu.dot_dimension_numbers<[1], [0], [0], [1], [0, 0, 1, 1], [], []>} : vector<8x24xf32>, vector<24x256xf32>, vector<8x256xf32> -> vector<8x256xf32>
    %287 = vector.broadcast %238 : vector<8x1xf32> to vector<8x256xf32>
    %288 = arith.addf %286, %287 : vector<8x256xf32>
    %cst_106 = arith.constant 2.000000e-01 : f32
    %289 = vector.broadcast %cst_106 : f32 to vector<8x256xf32>
    %290 = arith.mulf %289, %288 : vector<8x256xf32>
    %291 = arith.maximumf %288, %290 : vector<8x256xf32>
    %cst_107 = arith.constant dense<0.000000e+00> : vector<8x256xf32>
    %292 = tpu.matmul %236, %291, %cst_107 {dimension_numbers = #tpu.dot_dimension_numbers<[1], [0], [0], [1], [0, 0, 1, 1], [], []>} : vector<8x8xf32>, vector<8x256xf32>, vector<8x256xf32> -> vector<8x256xf32>
    %293 = vector.broadcast %239 : vector<8x1xf32> to vector<8x256xf32>
    %294 = arith.addf %292, %293 : vector<8x256xf32>
    %cst_108 = arith.constant 2.000000e-01 : f32
    %295 = vector.broadcast %cst_108 : f32 to vector<8x256xf32>
    %296 = arith.mulf %295, %294 : vector<8x256xf32>
    %297 = arith.maximumf %294, %296 : vector<8x256xf32>
    %cst_109 = arith.constant dense<0.000000e+00> : vector<8x256xf32>
    %298 = tpu.matmul %237, %297, %cst_109 {dimension_numbers = #tpu.dot_dimension_numbers<[1], [0], [0], [1], [0, 0, 1, 1], [], []>} : vector<8x8xf32>, vector<8x256xf32>, vector<8x256xf32> -> vector<8x256xf32>
    %299 = vector.broadcast %240 : vector<8x1xf32> to vector<8x256xf32>
    %300 = arith.addf %298, %299 : vector<8x256xf32>
    %301 = arith.addf %285, %300 : vector<8x256xf32>
    %c0_110 = arith.constant 0 : index
    %c4 = arith.constant 4 : index
    %c0_111 = arith.constant 0 : index
    %c0_112 = arith.constant 0 : index
    %302 = vector.load %arg9[%c0_110, %c4, %c0_111, %c0_112] : memref<1x5x8x256xf32, #tpu.memory_space<vmem>>, vector<1x1x8x256xf32>
    %303 = vector.shape_cast %302 : vector<1x1x8x256xf32> to vector<8x256xf32>
    %304 = vector.shape_cast %301 : vector<8x256xf32> to vector<1x1x8x256xf32>
    tpu.vector_store %arg9[%c0_110, %c4, %c0_111, %c0_112], %304 {strides = array<i32>} : memref<1x5x8x256xf32, #tpu.memory_space<vmem>>, vector<1x1x8x256xf32>,
    %c0_113 = arith.constant 0 : index
    %c0_114 = arith.constant 0 : index
    %305 = vector.load %arg5[%c0_113, %c0_114] : memref<25x8xf32, #tpu.memory_space<vmem>>, vector<25x8xf32>
    %cst_115 = arith.constant dense<0.000000e+00> : vector<25x256xf32>
    %306 = tpu.matmul %305, %301, %cst_115 {dimension_numbers = #tpu.dot_dimension_numbers<[1], [0], [0], [1], [0, 0, 1, 1], [], []>} : vector<25x8xf32>, vector<8x256xf32>, vector<25x256xf32> -> vector<25x256xf32>
    %c0_116 = arith.constant 0 : index
    %c0_117 = arith.constant 0 : index
    %307 = vector.load %arg6[%c0_116, %c0_117] : memref<25x1xf32, #tpu.memory_space<vmem>>, vector<25x1xf32>
    %308 = vector.broadcast %307 : vector<25x1xf32> to vector<25x256xf32>
    %309 = arith.addf %306, %308 : vector<25x256xf32>
    %310 = vector.extract_strided_slice %309 {offsets = [0, 0], sizes = [8, 256], strides = [1, 1]} : vector<25x256xf32> to vector<8x256xf32>
    %cst_118 = arith.constant dense<0.000000e+00> : vector<8xf32>
    %311 = vector.multi_reduction <add>, %310, %cst_118 [1] : vector<8x256xf32> to vector<8xf32>
    %312 = vector.shape_cast %311 : vector<8xf32> to vector<8x1xf32>
    %cst_119 = arith.constant 2.560000e+02 : f32
    %313 = vector.broadcast %cst_119 : f32 to vector<8x1xf32>
    %314 = arith.divf %312, %313 : vector<8x1xf32>
    %c0_120 = arith.constant 0 : index
    %c0_121 = arith.constant 0 : index
    %c0_122 = arith.constant 0 : index
    %315 = vector.load %arg10[%c0_120, %c0_121, %c0_122] : memref<1x8x33xf32, #tpu.memory_space<vmem>>, vector<1x8x1xf32>
    %316 = vector.shape_cast %315 : vector<1x8x1xf32> to vector<8x1xf32>
    %317 = vector.shape_cast %314 : vector<8x1xf32> to vector<1x8x1xf32>
    tpu.vector_store %arg10[%c0_120, %c0_121, %c0_122], %317 {strides = array<i32>} : memref<1x8x33xf32, #tpu.memory_space<vmem>>, vector<1x8x1xf32>,
    %318 = vector.extract_strided_slice %309 {offsets = [8, 0], sizes = [8, 256], strides = [1, 1]} : vector<25x256xf32> to vector<8x256xf32>
    %c0_123 = arith.constant 0 : index
    %c0_124 = arith.constant 0 : index
    %319 = vector.load %arg7[%c0_123, %c0_124] : memref<256x16xf32, #tpu.memory_space<vmem>>, vector<256x16xf32>
    %cst_125 = arith.constant dense<0.000000e+00> : vector<8x16xf32>
    %320 = tpu.matmul %318, %319, %cst_125 {dimension_numbers = #tpu.dot_dimension_numbers<[1], [0], [0], [1], [0, 0, 1, 1], [], []>} : vector<8x256xf32>, vector<256x16xf32>, vector<8x16xf32> -> vector<8x16xf32>
    %c0_126 = arith.constant 0 : index
    %c0_127 = arith.constant 0 : index
    %c1_128 = arith.constant 1 : index
    %321 = vector.load %arg10[%c0_126, %c0_127, %c1_128] : memref<1x8x33xf32, #tpu.memory_space<vmem>>, vector<1x8x16xf32>
    %322 = vector.shape_cast %321 : vector<1x8x16xf32> to vector<8x16xf32>
    %323 = vector.shape_cast %320 : vector<8x16xf32> to vector<1x8x16xf32>
    tpu.vector_store %arg10[%c0_126, %c0_127, %c1_128], %323 {strides = array<i32>} : memref<1x8x33xf32, #tpu.memory_space<vmem>>, vector<1x8x16xf32>,
    %324 = vector.extract_strided_slice %309 {offsets = [16, 0], sizes = [8, 256], strides = [1, 1]} : vector<25x256xf32> to vector<8x256xf32>
    %c0_129 = arith.constant 0 : index
    %c0_130 = arith.constant 0 : index
    %325 = vector.load %arg8[%c0_129, %c0_130] : memref<256x16xf32, #tpu.memory_space<vmem>>, vector<256x16xf32>
    %cst_131 = arith.constant dense<0.000000e+00> : vector<8x16xf32>
    %326 = tpu.matmul %324, %325, %cst_131 {dimension_numbers = #tpu.dot_dimension_numbers<[1], [0], [0], [1], [0, 0, 1, 1], [], []>} : vector<8x256xf32>, vector<256x16xf32>, vector<8x16xf32> -> vector<8x16xf32>
    %c0_132 = arith.constant 0 : index
    %c0_133 = arith.constant 0 : index
    %c17 = arith.constant 17 : index
    %327 = vector.load %arg10[%c0_132, %c0_133, %c17] : memref<1x8x33xf32, #tpu.memory_space<vmem>>, vector<1x8x16xf32>
    %328 = vector.shape_cast %327 : vector<1x8x16xf32> to vector<8x16xf32>
    %329 = vector.shape_cast %326 : vector<8x16xf32> to vector<1x8x16xf32>
    tpu.vector_store %arg10[%c0_132, %c0_133, %c17], %329 {strides = array<i32>} : memref<1x8x33xf32, #tpu.memory_space<vmem>>, vector<1x8x16xf32>,
    %330 = vector.extract_strided_slice %309 {offsets = [24, 0], sizes = [1, 256], strides = [1, 1]} : vector<25x256xf32> to vector<1x256xf32>
    %c0_134 = arith.constant 0 : index
    %c0_135 = arith.constant 0 : index
    %c0_136 = arith.constant 0 : index
    %331 = vector.load %arg11[%c0_134, %c0_135, %c0_136] : memref<1x1x256xf32, #tpu.memory_space<vmem>>, vector<1x1x256xf32>
    %332 = vector.shape_cast %331 : vector<1x1x256xf32> to vector<1x256xf32>
    %333 = vector.shape_cast %330 : vector<1x256xf32> to vector<1x1x256xf32>
    tpu.vector_store %arg11[%c0_134, %c0_135, %c0_136], %333 {strides = array<i32>} : memref<1x1x256xf32, #tpu.memory_space<vmem>>, vector<1x1x256xf32>,
    return
  }
  func.func @transform_0(%arg0: i32) -> (i32, i32, i32) {
    %c0_i32 = arith.constant 0 : i32
    %c0_i32_0 = arith.constant 0 : i32
    %c0_i32_1 = arith.constant 0 : i32
    return %arg0, %c0_i32, %c0_i32_0 : i32, i32, i32
  }
  func.func @transform_1(%arg0: i32) -> (i32, i32, i32, i32) {
    %c0_i32 = arith.constant 0 : i32
    %c0_i32_0 = arith.constant 0 : i32
    %c0_i32_1 = arith.constant 0 : i32
    %c0_i32_2 = arith.constant 0 : i32
    return %arg0, %c0_i32, %c0_i32_0, %c0_i32_1 : i32, i32, i32, i32
  }
  func.func @transform_2(%arg0: i32) -> (i32, i32) {
    %c0_i32 = arith.constant 0 : i32
    %c0_i32_0 = arith.constant 0 : i32
    %c0_i32_1 = arith.constant 0 : i32
    return %c0_i32, %c0_i32_0 : i32, i32
  }
  func.func @transform_3(%arg0: i32) -> (i32, i32) {
    %c0_i32 = arith.constant 0 : i32
    %c0_i32_0 = arith.constant 0 : i32
    %c0_i32_1 = arith.constant 0 : i32
    return %c0_i32, %c0_i32_0 : i32, i32
  }
  func.func @transform_4(%arg0: i32) -> (i32, i32) {
    %c0_i32 = arith.constant 0 : i32
    %c0_i32_0 = arith.constant 0 : i32
    %c0_i32_1 = arith.constant 0 : i32
    return %c0_i32, %c0_i32_0 : i32, i32
  }
  func.func @transform_5(%arg0: i32) -> (i32, i32) {
    %c0_i32 = arith.constant 0 : i32
    %c0_i32_0 = arith.constant 0 : i32
    %c0_i32_1 = arith.constant 0 : i32
    return %c0_i32, %c0_i32_0 : i32, i32
  }
  func.func @transform_6(%arg0: i32) -> (i32, i32) {
    %c0_i32 = arith.constant 0 : i32
    %c0_i32_0 = arith.constant 0 : i32
    %c0_i32_1 = arith.constant 0 : i32
    return %c0_i32, %c0_i32_0 : i32, i32
  }
  func.func @transform_7(%arg0: i32) -> (i32, i32) {
    %c0_i32 = arith.constant 0 : i32
    %c0_i32_0 = arith.constant 0 : i32
    %c0_i32_1 = arith.constant 0 : i32
    return %c0_i32, %c0_i32_0 : i32, i32
  }
  func.func @transform_8(%arg0: i32) -> (i32, i32, i32, i32) {
    %c0_i32 = arith.constant 0 : i32
    %c0_i32_0 = arith.constant 0 : i32
    %c0_i32_1 = arith.constant 0 : i32
    %c0_i32_2 = arith.constant 0 : i32
    return %arg0, %c0_i32, %c0_i32_0, %c0_i32_1 : i32, i32, i32, i32
  }
  func.func @transform_9(%arg0: i32) -> (i32, i32, i32) {
    %c0_i32 = arith.constant 0 : i32
    %c0_i32_0 = arith.constant 0 : i32
    %c0_i32_1 = arith.constant 0 : i32
    return %arg0, %c0_i32, %c0_i32_0 : i32, i32, i32
  }
  func.func @transform_10(%arg0: i32) -> (i32, i32, i32) {
    %c0_i32 = arith.constant 0 : i32
    %c0_i32_0 = arith.constant 0 : i32
    %c0_i32_1 = arith.constant 0 : i32
    return %arg0, %c0_i32, %c0_i32_0 : i32, i32, i32
  }
}

</mosaic_0001>

<llo_original>
// kernel: squeeze.13
$region0: #{squeeze.13}
  %s0 = inlined_call_operand.vmem [shape: f32[2,1,8,256], index: 0, kind: input, shape index: {}]
  %s1 = inlined_call_operand.vmem [shape: f32[2,8,16,16], index: 1, kind: output, shape index: {}]
  %v2 = vld [vmem:[%s0] sm:$0xff]
  %vm3 = vcmask 130048
  %4 = vst.msk [vmem:[%s1] ss:$16 sm:$0x3] %vm3, %v2
  %5 = vst.msk [vmem:[%s1] ss:$16 sm:$0xc] %vm3, %v2
  %6 = vst.msk [vmem:[%s1] ss:$16 sm:$0x30] %vm3, %v2
  %7 = vst.msk [vmem:[%s1] ss:$16 sm:$0xc0] %vm3, %v2
  %s8 = scalar_lea.vmem %s0, 8
  %v9 = vld [vmem:[%s8] sm:$0xff]
  %vm10 = vcmask 130048
  %s11 = scalar_lea.vmem %s1, 8
  %12 = vst.msk [vmem:[%s11] ss:$16 sm:$0x3] %vm10, %v9
  %s13 = scalar_lea.vmem %s1, 8
  %14 = vst.msk [vmem:[%s13] ss:$16 sm:$0xc] %vm10, %v9
  %s15 = scalar_lea.vmem %s1, 8
  %16 = vst.msk [vmem:[%s15] ss:$16 sm:$0x30] %vm10, %v9
  %s17 = scalar_lea.vmem %s1, 8
  %18 = vst.msk [vmem:[%s17] ss:$16 sm:$0xc0] %vm10, %v9
  %s19 = scalar_lea.vmem %s0, 16
  %v20 = vld [vmem:[%s19] sm:$0xff]
  %vm21 = vcmask 130048
  %s22 = scalar_lea.vmem %s1, 128
  %23 = vst.msk [vmem:[%s22] ss:$16 sm:$0x3] %vm21, %v20
  %s24 = scalar_lea.vmem %s1, 128
  %25 = vst.msk [vmem:[%s24] ss:$16 sm:$0xc] %vm21, %v20
  %s26 = scalar_lea.vmem %s1, 128
  %27 = vst.msk [vmem:[%s26] ss:$16 sm:$0x30] %vm21, %v20
  %s28 = scalar_lea.vmem %s1, 128
  %29 = vst.msk [vmem:[%s28] ss:$16 sm:$0xc0] %vm21, %v20
  %s30 = scalar_lea.vmem %s0, 24
  %v31 = vld [vmem:[%s30] sm:$0xff]
  %vm32 = vcmask 130048
  %s33 = scalar_lea.vmem %s1, 136
  %34 = vst.msk [vmem:[%s33] ss:$16 sm:$0x3] %vm32, %v31
  %s35 = scalar_lea.vmem %s1, 136
  %36 = vst.msk [vmem:[%s35] ss:$16 sm:$0xc] %vm32, %v31
  %s37 = scalar_lea.vmem %s1, 136
  %38 = vst.msk [vmem:[%s37] ss:$16 sm:$0x30] %vm32, %v31
  %s39 = scalar_lea.vmem %s1, 136
  %40 = vst.msk [vmem:[%s39] ss:$16 sm:$0xc0] %vm32, %v31
  %v41 = vld.sshfl [vmem:[%s0] sm:$0xff pattern:$0xb3a29180]
  %42 = vrot.lane.b32.xlu0 %v41, 112
  %v43 = vpop.permute.xlu0 %42
  %vm44 = vcmask 130048
  %s45 = scalar_lea.vmem %s1, 1
  %46 = vst.msk [vmem:[%s45] ss:$8 sm:$0xf] %vm44, %v43
  %s47 = scalar_lea.vmem %s1, 1
  %48 = vst.msk [vmem:[%s47] ss:$8 sm:$0xf0] %vm44, %v43
  %s49 = scalar_lea.vmem %s0, 4
  %v50 = vld.sshfl [vmem:[%s49] sm:$0xff pattern:$0xb3a29180]
  %51 = vrot.lane.b32.xlu0 %v50, 112
  %v52 = vpop.permute.xlu0 %51
  %vm53 = vcmask 130048
  %s54 = scalar_lea.vmem %s1, 65
  %55 = vst.msk [vmem:[%s54] ss:$8 sm:$0xf] %vm53, %v52
  %s56 = scalar_lea.vmem %s1, 65
  %57 = vst.msk [vmem:[%s56] ss:$8 sm:$0xf0] %vm53, %v52
  %s58 = scalar_lea.vmem %s0, 16
  %v59 = vld.sshfl [vmem:[%s58] sm:$0xff pattern:$0xb3a29180]
  %60 = vrot.lane.b32.xlu0 %v59, 112
  %v61 = vpop.permute.xlu0 %60
  %vm62 = vcmask 130048
  %s63 = scalar_lea.vmem %s1, 129
  %64 = vst.msk [vmem:[%s63] ss:$8 sm:$0xf] %vm62, %v61
  %s65 = scalar_lea.vmem %s1, 129
  %66 = vst.msk [vmem:[%s65] ss:$8 sm:$0xf0] %vm62, %v61
  %s67 = scalar_lea.vmem %s0, 20
  %v68 = vld.sshfl [vmem:[%s67] sm:$0xff pattern:$0xb3a29180]
  %69 = vrot.lane.b32.xlu0 %v68, 112
  %v70 = vpop.permute.xlu0 %69
  %vm71 = vcmask 130048
  %s72 = scalar_lea.vmem %s1, 193
  %73 = vst.msk [vmem:[%s72] ss:$8 sm:$0xf] %vm71, %v70
  %s74 = scalar_lea.vmem %s1, 193
  %75 = vst.msk [vmem:[%s74] ss:$8 sm:$0xf0] %vm71, %v70
  %v76 = vld.sshfl [vmem:[%s0] sm:$0xff pattern:$0xb3a29180]
  %77 = vrot.lane.b32.xlu0 %v76, 96
  %v78 = vpop.permute.xlu0 %77
  %vm79 = vcmask 130048
  %s80 = scalar_lea.vmem %s1, 2
  %81 = vst.msk [vmem:[%s80] ss:$8 sm:$0xf] %vm79, %v78
  %s82 = scalar_lea.vmem %s1, 2
  %83 = vst.msk [vmem:[%s82] ss:$8 sm:$0xf0] %vm79, %v78
  %s84 = scalar_lea.vmem %s0, 4
  %v85 = vld.sshfl [vmem:[%s84] sm:$0xff pattern:$0xb3a29180]
  %86 = vrot.lane.b32.xlu0 %v85, 96
  %v87 = vpop.permute.xlu0 %86
  %vm88 = vcmask 130048
  %s89 = scalar_lea.vmem %s1, 66
  %90 = vst.msk [vmem:[%s89] ss:$8 sm:$0xf] %vm88, %v87
  %s91 = scalar_lea.vmem %s1, 66
  %92 = vst.msk [vmem:[%s91] ss:$8 sm:$0xf0] %vm88, %v87
  %s93 = scalar_lea.vmem %s0, 16
  %v94 = vld.sshfl [vmem:[%s93] sm:$0xff pattern:$0xb3a29180]
  %95 = vrot.lane.b32.xlu0 %v94, 96
  %v96 = vpop.permute.xlu0 %95
  %vm97 = vcmask 130048
  %s98 = scalar_lea.vmem %s1, 130
  %99 = vst.msk [vmem:[%s98] ss:$8 sm:$0xf] %vm97, %v96
  %s100 = scalar_lea.vmem %s1, 130
  %101 = vst.msk [vmem:[%s100] ss:$8 sm:$0xf0] %vm97, %v96
  %s102 = scalar_lea.vmem %s0, 20
  %v103 = vld.sshfl [vmem:[%s102] sm:$0xff pattern:$0xb3a29180]
  %104 = vrot.lane.b32.xlu0 %v103, 96
  %v105 = vpop.permute.xlu0 %104
  %vm106 = vcmask 130048
  %s107 = scalar_lea.vmem %s1, 194
  %108 = vst.msk [vmem:[%s107] ss:$8 sm:$0xf] %vm106, %v105
  %s109 = scalar_lea.vmem %s1, 194
  %110 = vst.msk [vmem:[%s109] ss:$8 sm:$0xf0] %vm106, %v105
  %v111 = vld.sshfl [vmem:[%s0] sm:$0xff pattern:$0xb3a29180]
  %112 = vrot.lane.b32.xlu0 %v111, 80
  %v113 = vpop.permute.xlu0 %112
  %vm114 = vcmask 130048
  %s115 = scalar_lea.vmem %s1, 3
  %116 = vst.msk [vmem:[%s115] ss:$8 sm:$0xf] %vm114, %v113
  %s117 = scalar_lea.vmem %s1, 3
  %118 = vst.msk [vmem:[%s117] ss:$8 sm:$0xf0] %vm114, %v113
  %s119 = scalar_lea.vmem %s0, 4
  %v120 = vld.sshfl [vmem:[%s119] sm:$0xff pattern:$0xb3a29180]
  %121 = vrot.lane.b32.xlu0 %v120, 80
  %v122 = vpop.permute.xlu0 %121
  %vm123 = vcmask 130048
  %s124 = scalar_lea.vmem %s1, 67
  %125 = vst.msk [vmem:[%s124] ss:$8 sm:$0xf] %vm123, %v122
  %s126 = scalar_lea.vmem %s1, 67
  %127 = vst.msk [vmem:[%s126] ss:$8 sm:$0xf0] %vm123, %v122
  %s128 = scalar_lea.vmem %s0, 16
  %v129 = vld.sshfl [vmem:[%s128] sm:$0xff pattern:$0xb3a29180]
  %130 = vrot.lane.b32.xlu0 %v129, 80
  %v131 = vpop.permute.xlu0 %130
  %vm132 = vcmask 130048
  %s133 = scalar_lea.vmem %s1, 131
  %134 = vst.msk [vmem:[%s133] ss:$8 sm:$0xf] %vm132, %v131
  %s135 = scalar_lea.vmem %s1, 131
  %136 = vst.msk [vmem:[%s135] ss:$8 sm:$0xf0] %vm132, %v131
  %s137 = scalar_lea.vmem %s0, 20
  %v138 = vld.sshfl [vmem:[%s137] sm:$0xff pattern:$0xb3a29180]
  %139 = vrot.lane.b32.xlu0 %v138, 80
  %v140 = vpop.permute.xlu0 %139
  %vm141 = vcmask 130048
  %s142 = scalar_lea.vmem %s1, 195
  %143 = vst.msk [vmem:[%s142] ss:$8 sm:$0xf] %vm141, %v140
  %s144 = scalar_lea.vmem %s1, 195
  %145 = vst.msk [vmem:[%s144] ss:$8 sm:$0xf0] %vm141, %v140
  %v146 = vld.sshfl [vmem:[%s0] sm:$0xff pattern:$0xb3a29180]
  %147 = vrot.lane.b32.xlu0 %v146, 64
  %v148 = vpop.permute.xlu0 %147
  %vm149 = vcmask 130048
  %s150 = scalar_lea.vmem %s1, 4
  %151 = vst.msk [vmem:[%s150] ss:$8 sm:$0xf] %vm149, %v148
  %s152 = scalar_lea.vmem %s1, 4
  %153 = vst.msk [vmem:[%s152] ss:$8 sm:$0xf0] %vm149, %v148
  %s154 = scalar_lea.vmem %s0, 4
  %v155 = vld.sshfl [vmem:[%s154] sm:$0xff pattern:$0xb3a29180]
  %156 = vrot.lane.b32.xlu0 %v155, 64
  %v157 = vpop.permute.xlu0 %156
  %vm158 = vcmask 130048
  %s159 = scalar_lea.vmem %s1, 68
  %160 = vst.msk [vmem:[%s159] ss:$8 sm:$0xf] %vm158, %v157
  %s161 = scalar_lea.vmem %s1, 68
  %162 = vst.msk [vmem:[%s161] ss:$8 sm:$0xf0] %vm158, %v157
  %s163 = scalar_lea.vmem %s0, 16
  %v164 = vld.sshfl [vmem:[%s163] sm:$0xff pattern:$0xb3a29180]
  %165 = vrot.lane.b32.xlu0 %v164, 64
  %v166 = vpop.permute.xlu0 %165
  %vm167 = vcmask 130048
  %s168 = scalar_lea.vmem %s1, 132
  %169 = vst.msk [vmem:[%s168] ss:$8 sm:$0xf] %vm167, %v166
  %s170 = scalar_lea.vmem %s1, 132
  %171 = vst.msk [vmem:[%s170] ss:$8 sm:$0xf0] %vm167, %v166
  %s172 = scalar_lea.vmem %s0, 20
  %v173 = vld.sshfl [vmem:[%s172] sm:$0xff pattern:$0xb3a29180]
  %174 = vrot.lane.b32.xlu0 %v173, 64
  %v175 = vpop.permute.xlu0 %174
  %vm176 = vcmask 130048
  %s177 = scalar_lea.vmem %s1, 196
  %178 = vst.msk [vmem:[%s177] ss:$8 sm:$0xf] %vm176, %v175
  %s179 = scalar_lea.vmem %s1, 196
  %180 = vst.msk [vmem:[%s179] ss:$8 sm:$0xf0] %vm176, %v175
  %v181 = vld.sshfl [vmem:[%s0] sm:$0xff pattern:$0xb3a29180]
  %182 = vrot.lane.b32.xlu0 %v181, 48
  %v183 = vpop.permute.xlu0 %182
  %vm184 = vcmask 130048
  %s185 = scalar_lea.vmem %s1, 5
  %186 = vst.msk [vmem:[%s185] ss:$8 sm:$0xf] %vm184, %v183
  %s187 = scalar_lea.vmem %s1, 5
  %188 = vst.msk [vmem:[%s187] ss:$8 sm:$0xf0] %vm184, %v183
  %s189 = scalar_lea.vmem %s0, 4
  %v190 = vld.sshfl [vmem:[%s189] sm:$0xff pattern:$0xb3a29180]
  %191 = vrot.lane.b32.xlu0 %v190, 48
  %v192 = vpop.permute.xlu0 %191
  %vm193 = vcmask 130048
  %s194 = scalar_lea.vmem %s1, 69
  %195 = vst.msk [vmem:[%s194] ss:$8 sm:$0xf] %vm193, %v192
  %s196 = scalar_lea.vmem %s1, 69
  %197 = vst.msk [vmem:[%s196] ss:$8 sm:$0xf0] %vm193, %v192
  %s198 = scalar_lea.vmem %s0, 16
  %v199 = vld.sshfl [vmem:[%s198] sm:$0xff pattern:$0xb3a29180]
  %200 = vrot.lane.b32.xlu0 %v199, 48
  %v201 = vpop.permute.xlu0 %200
  %vm202 = vcmask 130048
  %s203 = scalar_lea.vmem %s1, 133
  %204 = vst.msk [vmem:[%s203] ss:$8 sm:$0xf] %vm202, %v201
  %s205 = scalar_lea.vmem %s1, 133
  %206 = vst.msk [vmem:[%s205] ss:$8 sm:$0xf0] %vm202, %v201
  %s207 = scalar_lea.vmem %s0, 20
  %v208 = vld.sshfl [vmem:[%s207] sm:$0xff pattern:$0xb3a29180]
  %209 = vrot.lane.b32.xlu0 %v208, 48
  %v210 = vpop.permute.xlu0 %209
  %vm211 = vcmask 130048
  %s212 = scalar_lea.vmem %s1, 197
  %213 = vst.msk [vmem:[%s212] ss:$8 sm:$0xf] %vm211, %v210
  %s214 = scalar_lea.vmem %s1, 197
  %215 = vst.msk [vmem:[%s214] ss:$8 sm:$0xf0] %vm211, %v210
  %v216 = vld.sshfl [vmem:[%s0] sm:$0xff pattern:$0xb3a29180]
  %217 = vrot.lane.b32.xlu0 %v216, 32
  %v218 = vpop.permute.xlu0 %217
  %vm219 = vcmask 130048
  %s220 = scalar_lea.vmem %s1, 6
  %221 = vst.msk [vmem:[%s220] ss:$8 sm:$0xf] %vm219, %v218
  %s222 = scalar_lea.vmem %s1, 6
  %223 = vst.msk [vmem:[%s222] ss:$8 sm:$0xf0] %vm219, %v218
  %s224 = scalar_lea.vmem %s0, 4
  %v225 = vld.sshfl [vmem:[%s224] sm:$0xff pattern:$0xb3a29180]
  %226 = vrot.lane.b32.xlu0 %v225, 32
  %v227 = vpop.permute.xlu0 %226
  %vm228 = vcmask 130048
  %s229 = scalar_lea.vmem %s1, 70
  %230 = vst.msk [vmem:[%s229] ss:$8 sm:$0xf] %vm228, %v227
  %s231 = scalar_lea.vmem %s1, 70
  %232 = vst.msk [vmem:[%s231] ss:$8 sm:$0xf0] %vm228, %v227
  %s233 = scalar_lea.vmem %s0, 16
  %v234 = vld.sshfl [vmem:[%s233] sm:$0xff pattern:$0xb3a29180]
  %235 = vrot.lane.b32.xlu0 %v234, 32
  %v236 = vpop.permute.xlu0 %235
  %vm237 = vcmask 130048
  %s238 = scalar_lea.vmem %s1, 134
  %239 = vst.msk [vmem:[%s238] ss:$8 sm:$0xf] %vm237, %v236
  %s240 = scalar_lea.vmem %s1, 134
  %241 = vst.msk [vmem:[%s240] ss:$8 sm:$0xf0] %vm237, %v236
  %s242 = scalar_lea.vmem %s0, 20
  %v243 = vld.sshfl [vmem:[%s242] sm:$0xff pattern:$0xb3a29180]
  %244 = vrot.lane.b32.xlu0 %v243, 32
  %v245 = vpop.permute.xlu0 %244
  %vm246 = vcmask 130048
  %s247 = scalar_lea.vmem %s1, 198
  %248 = vst.msk [vmem:[%s247] ss:$8 sm:$0xf] %vm246, %v245
  %s249 = scalar_lea.vmem %s1, 198
  %250 = vst.msk [vmem:[%s249] ss:$8 sm:$0xf0] %vm246, %v245
  %v251 = vld.sshfl [vmem:[%s0] sm:$0xff pattern:$0xb3a29180]
  %252 = vrot.lane.b32.xlu0 %v251, 16
  %v253 = vpop.permute.xlu0 %252
  %vm254 = vcmask 130048
  %s255 = scalar_lea.vmem %s1, 7
  %256 = vst.msk [vmem:[%s255] ss:$8 sm:$0xf] %vm254, %v253
  %s257 = scalar_lea.vmem %s1, 7
  %258 = vst.msk [vmem:[%s257] ss:$8 sm:$0xf0] %vm254, %v253
  %s259 = scalar_lea.vmem %s0, 4
  %v260 = vld.sshfl [vmem:[%s259] sm:$0xff pattern:$0xb3a29180]
  %261 = vrot.lane.b32.xlu0 %v260, 16
  %v262 = vpop.permute.xlu0 %261
  %vm263 = vcmask 130048
  %s264 = scalar_lea.vmem %s1, 71
  %265 = vst.msk [vmem:[%s264] ss:$8 sm:$0xf] %vm263, %v262
  %s266 = scalar_lea.vmem %s1, 71
  %267 = vst.msk [vmem:[%s266] ss:$8 sm:$0xf0] %vm263, %v262
  %s268 = scalar_lea.vmem %s0, 16
  %v269 = vld.sshfl [vmem:[%s268] sm:$0xff pattern:$0xb3a29180]
  %270 = vrot.lane.b32.xlu0 %v269, 16
  %v271 = vpop.permute.xlu0 %270
  %vm272 = vcmask 130048
  %s273 = scalar_lea.vmem %s1, 135
  %274 = vst.msk [vmem:[%s273] ss:$8 sm:$0xf] %vm272, %v271
  %s275 = scalar_lea.vmem %s1, 135
  %276 = vst.msk [vmem:[%s275] ss:$8 sm:$0xf0] %vm272, %v271
  %s277 = scalar_lea.vmem %s0, 20
  %v278 = vld.sshfl [vmem:[%s277] sm:$0xff pattern:$0xb3a29180]
  %279 = vrot.lane.b32.xlu0 %v278, 16
  %v280 = vpop.permute.xlu0 %279
  %vm281 = vcmask 130048
  %s282 = scalar_lea.vmem %s1, 199
  %283 = vst.msk [vmem:[%s282] ss:$8 sm:$0xf] %vm281, %v280
  %s284 = scalar_lea.vmem %s1, 199
  %285 = vst.msk [vmem:[%s284] ss:$8 sm:$0xf0] %vm281, %v280

// kernel: encoder_forward.1
$region0: #{encoder_forward.1}
  #allocation0 [shape = 'u32[]', space=smem, size = 0x4, offset = 0x4, fixed_abs, tag = 'smem constant byte address 0x4 - core index']
  #allocation1 [shape = 'u32[144,128]{1,0:T(1,128)}', space=vmem, size = 0x12000, scoped, tag = 'internal scratch']
  %s0 = inlined_call_operand.vmem [shape: f32[2,4,256], index: 0, kind: input, shape index: {}]
  %s1 = inlined_call_operand.vmem [shape: f32[2,4,40,24], index: 1, kind: input, shape index: {}]
  %s2 = inlined_call_operand.vmem [shape: f32[8,4], index: 2, kind: input, shape index: {}]
  %s3 = inlined_call_operand.vmem [shape: f32[8,1], index: 3, kind: input, shape index: {}]
  %s4 = inlined_call_operand.vmem [shape: f32[25,8], index: 4, kind: input, shape index: {}]
  %s5 = inlined_call_operand.vmem [shape: f32[25,1], index: 5, kind: input, shape index: {}]
  %s6 = inlined_call_operand.vmem [shape: f32[256,16], index: 6, kind: input, shape index: {}]
  %s7 = inlined_call_operand.vmem [shape: f32[256,16], index: 7, kind: input, shape index: {}]
  %s8 = inlined_call_operand.vmem [shape: f32[2,5,8,256], index: 8, kind: output, shape index: {0}]
  %s9 = inlined_call_operand.vmem [shape: f32[2,8,33], index: 9, kind: output, shape index: {1}]
  %s10 = inlined_call_operand.vmem [shape: f32[2,1,256], index: 10, kind: output, shape index: {2}]
  %11 = xla_tuple %s8, %s9, %s10
  %s12 = sld [smem:[#allocation0]]
  $region81: #{encoder_forward.1} parent=0
    _
  %s14 = ssub.s32 1, %s12
  %s15 = scalar_select 0, %s14, %s12
  loop: start=0, step=1, limit=4
  $region2: #{encoder_forward.1} parent=0 // loop_pre_header
    _
  $region3: #{encoder_forward.1} parent=0 // loop_header
    %s17 = sphi 0, %s21
    %p18 = scmp.ge.s32.totalorder %s17, 4
    %s27 = sphi 0, %s29
    %s30 = sphi 0, %s27
    %s31 = sphi 0, %s30
    %s47 = sphi 0, %s31
    %s53 = sphi 0, %s55
    %s56 = sphi 0, %s53
    %s57 = sphi 0, %s56
    %s73 = sphi 0, %s57
    %s77 = sphi 0, %s77
    %s79 = sphi 0, %s77
    %s80 = sphi 0, %s79
    %s94 = sphi 0, %s80
    %s98 = sphi 0, %s98
    %s100 = sphi 0, %s98
    %s101 = sphi 0, %s100
    %s115 = sphi 0, %s101
    %s119 = sphi 0, %s119
    %s121 = sphi 0, %s119
    %s122 = sphi 0, %s121
    %s136 = sphi 0, %s122
    %s140 = sphi 0, %s140
    %s142 = sphi 0, %s140
    %s143 = sphi 0, %s142
    %s157 = sphi 0, %s143
    %s161 = sphi 0, %s161
    %s163 = sphi 0, %s161
    %s164 = sphi 0, %s163
    %s178 = sphi 0, %s164
    %s182 = sphi 0, %s182
    %s184 = sphi 0, %s182
    %s185 = sphi 0, %s184
    %s199 = sphi 0, %s185
    %s205 = sphi 0, %s207
    %s208 = sphi 0, %s205
    %s209 = sphi 0, %s208
    %s225 = sphi 0, %s209
    %s231 = sphi 0, %s233
    %s234 = sphi 0, %s231
    %s235 = sphi 0, %s234
    %s251 = sphi 0, %s235
    %s257 = sphi 0, %s259
    %s260 = sphi 0, %s257
    %s261 = sphi 0, %s260
    %s277 = sphi 0, %s261
  $region4: #{encoder_forward.1} parent=0 // loop_header_branch
    %20 = sbr.rel (%p18) target = $region8
  $region5: #{encoder_forward.1} parent=0 // loop_body
    %s22 = ssub.s32 %s17, 1
    %s23 = ssub.s32 %s17, 2
    %s24 = sadd.s32 %s17, 1
    %s25 = ssub.s32 %s17, %s24
    %p26 = scmp.eq.s32.totalorder %s25, 0
    %s28 = sadd.s32 %s27, 1
    %s29 = scalar_select %p26, %s27, %s28
    %p32 = pneg %p26
    %p33 = scmp.eq.s32.totalorder %s17, 1
    %p34 = por %p32, %p33
    %p35 = scmp.ne.s32.totalorder %s27, %s30
    %p36 = scmp.eq.s32.totalorder %s17, 0
    %p37 = por %p35, %p36
    %p38 = scmp.ne.s32.totalorder %s27, %s30
    %p39 = scmp.eq.s32.totalorder %s22, 1
    %p40 = por %p38, %p39
    %p41 = scmp.ne.s32.totalorder %s30, %s31
    %p42 = scmp.eq.s32.totalorder %s22, 0
    %p43 = por %p41, %p42
    %p44 = scmp.ne.s32.totalorder %s30, %s31
    %p45 = scmp.eq.s32.totalorder %s23, 1
    %p46 = por %p44, %p45
    %p48 = scmp.ne.s32.totalorder %s31, %s47
    %p49 = scmp.eq.s32.totalorder %s23, 0
    %p50 = por %p48, %p49
    %s51 = ssub.s32 %s17, %s24
    %p52 = scmp.eq.s32.totalorder %s51, 0
    %s54 = sadd.s32 %s53, 1
    %s55 = scalar_select %p52, %s53, %s54
    %p58 = pneg %p52
    %p59 = scmp.eq.s32.totalorder %s17, 1
    %p60 = por %p58, %p59
    %p61 = scmp.ne.s32.totalorder %s53, %s56
    %p62 = scmp.eq.s32.totalorder %s17, 0
    %p63 = por %p61, %p62
    %p64 = scmp.ne.s32.totalorder %s53, %s56
    %p65 = scmp.eq.s32.totalorder %s22, 1
    %p66 = por %p64, %p65
    %p67 = scmp.ne.s32.totalorder %s56, %s57
    %p68 = scmp.eq.s32.totalorder %s22, 0
    %p69 = por %p67, %p68
    %p70 = scmp.ne.s32.totalorder %s56, %s57
    %p71 = scmp.eq.s32.totalorder %s23, 1
    %p72 = por %p70, %p71
    %p74 = scmp.ne.s32.totalorder %s57, %s73
    %p75 = scmp.eq.s32.totalorder %s23, 0
    %p76 = por %p74, %p75
    %s78 = sadd.s32 %s77, 1
    %p81 = scmp.eq.s32.totalorder %s17, 1
    %p82 = scmp.ne.s32.totalorder %s77, %s79
    %p83 = scmp.eq.s32.totalorder %s17, 0
    %p84 = por %p82, %p83
    %p85 = scmp.ne.s32.totalorder %s77, %s79
    %p86 = scmp.eq.s32.totalorder %s22, 1
    %p87 = por %p85, %p86
    %p88 = scmp.ne.s32.totalorder %s79, %s80
    %p89 = scmp.eq.s32.totalorder %s22, 0
    %p90 = por %p88, %p89
    %p91 = scmp.ne.s32.totalorder %s79, %s80
    %p92 = scmp.eq.s32.totalorder %s23, 1
    %p93 = por %p91, %p92
    %p95 = scmp.ne.s32.totalorder %s80, %s94
    %p96 = scmp.eq.s32.totalorder %s23, 0
    %p97 = por %p95, %p96
    %s99 = sadd.s32 %s98, 1
    %p102 = scmp.eq.s32.totalorder %s17, 1
    %p103 = scmp.ne.s32.totalorder %s98, %s100
    %p104 = scmp.eq.s32.totalorder %s17, 0
    %p105 = por %p103, %p104
    %p106 = scmp.ne.s32.totalorder %s98, %s100
    %p107 = scmp.eq.s32.totalorder %s22, 1
    %p108 = por %p106, %p107
    %p109 = scmp.ne.s32.totalorder %s100, %s101
    %p110 = scmp.eq.s32.totalorder %s22, 0
    %p111 = por %p109, %p110
    %p112 = scmp.ne.s32.totalorder %s100, %s101
    %p113 = scmp.eq.s32.totalorder %s23, 1
    %p114 = por %p112, %p113
    %p116 = scmp.ne.s32.totalorder %s101, %s115
    %p117 = scmp.eq.s32.totalorder %s23, 0
    %p118 = por %p116, %p117
    %s120 = sadd.s32 %s119, 1
    %p123 = scmp.eq.s32.totalorder %s17, 1
    %p124 = scmp.ne.s32.totalorder %s119, %s121
    %p125 = scmp.eq.s32.totalorder %s17, 0
    %p126 = por %p124, %p125
    %p127 = scmp.ne.s32.totalorder %s119, %s121
    %p128 = scmp.eq.s32.totalorder %s22, 1
    %p129 = por %p127, %p128
    %p130 = scmp.ne.s32.totalorder %s121, %s122
    %p131 = scmp.eq.s32.totalorder %s22, 0
    %p132 = por %p130, %p131
    %p133 = scmp.ne.s32.totalorder %s121, %s122
    %p134 = scmp.eq.s32.totalorder %s23, 1
    %p135 = por %p133, %p134
    %p137 = scmp.ne.s32.totalorder %s122, %s136
    %p138 = scmp.eq.s32.totalorder %s23, 0
    %p139 = por %p137, %p138
    %s141 = sadd.s32 %s140, 1
    %p144 = scmp.eq.s32.totalorder %s17, 1
    %p145 = scmp.ne.s32.totalorder %s140, %s142
    %p146 = scmp.eq.s32.totalorder %s17, 0
    %p147 = por %p145, %p146
    %p148 = scmp.ne.s32.totalorder %s140, %s142
    %p149 = scmp.eq.s32.totalorder %s22, 1
    %p150 = por %p148, %p149
    %p151 = scmp.ne.s32.totalorder %s142, %s143
    %p152 = scmp.eq.s32.totalorder %s22, 0
    %p153 = por %p151, %p152
    %p154 = scmp.ne.s32.totalorder %s142, %s143
    %p155 = scmp.eq.s32.totalorder %s23, 1
    %p156 = por %p154, %p155
    %p158 = scmp.ne.s32.totalorder %s143, %s157
    %p159 = scmp.eq.s32.totalorder %s23, 0
    %p160 = por %p158, %p159
    %s162 = sadd.s32 %s161, 1
    %p165 = scmp.eq.s32.totalorder %s17, 1
    %p166 = scmp.ne.s32.totalorder %s161, %s163
    %p167 = scmp.eq.s32.totalorder %s17, 0
    %p168 = por %p166, %p167
    %p169 = scmp.ne.s32.totalorder %s161, %s163
    %p170 = scmp.eq.s32.totalorder %s22, 1
    %p171 = por %p169, %p170
    %p172 = scmp.ne.s32.totalorder %s163, %s164
    %p173 = scmp.eq.s32.totalorder %s22, 0
    %p174 = por %p172, %p173
    %p175 = scmp.ne.s32.totalorder %s163, %s164
    %p176 = scmp.eq.s32.totalorder %s23, 1
    %p177 = por %p175, %p176
    %p179 = scmp.ne.s32.totalorder %s164, %s178
    %p180 = scmp.eq.s32.totalorder %s23, 0
    %p181 = por %p179, %p180
    %s183 = sadd.s32 %s182, 1
    %p186 = scmp.eq.s32.totalorder %s17, 1
    %p187 = scmp.ne.s32.totalorder %s182, %s184
    %p188 = scmp.eq.s32.totalorder %s17, 0
    %p189 = por %p187, %p188
    %p190 = scmp.ne.s32.totalorder %s182, %s184
    %p191 = scmp.eq.s32.totalorder %s22, 1
    %p192 = por %p190, %p191
    %p193 = scmp.ne.s32.totalorder %s184, %s185
    %p194 = scmp.eq.s32.totalorder %s22, 0
    %p195 = por %p193, %p194
    %p196 = scmp.ne.s32.totalorder %s184, %s185
    %p197 = scmp.eq.s32.totalorder %s23, 1
    %p198 = por %p196, %p197
    %p200 = scmp.ne.s32.totalorder %s185, %s199
    %p201 = scmp.eq.s32.totalorder %s23, 0
    %p202 = por %p200, %p201
    %s203 = ssub.s32 %s17, %s24
    %p204 = scmp.eq.s32.totalorder %s203, 0
    %s206 = sadd.s32 %s205, 1
    %s207 = scalar_select %p204, %s205, %s206
    %p210 = pneg %p204
    %p211 = scmp.eq.s32.totalorder %s17, 1
    %p212 = por %p210, %p211
    %p213 = scmp.ne.s32.totalorder %s205, %s208
    %p214 = scmp.eq.s32.totalorder %s17, 0
    %p215 = por %p213, %p214
    %p216 = scmp.ne.s32.totalorder %s205, %s208
    %p217 = scmp.eq.s32.totalorder %s22, 1
    %p218 = por %p216, %p217
    %p219 = scmp.ne.s32.totalorder %s208, %s209
    %p220 = scmp.eq.s32.totalorder %s22, 0
    %p221 = por %p219, %p220
    %p222 = scmp.ne.s32.totalorder %s208, %s209
    %p223 = scmp.eq.s32.totalorder %s23, 1
    %p224 = por %p222, %p223
    %p226 = scmp.ne.s32.totalorder %s209, %s225
    %p227 = scmp.eq.s32.totalorder %s23, 0
    %p228 = por %p226, %p227
    %s229 = ssub.s32 %s17, %s24
    %p230 = scmp.eq.s32.totalorder %s229, 0
    %s232 = sadd.s32 %s231, 1
    %s233 = scalar_select %p230, %s231, %s232
    %p236 = pneg %p230
    %p237 = scmp.eq.s32.totalorder %s17, 1
    %p238 = por %p236, %p237
    %p239 = scmp.ne.s32.totalorder %s231, %s234
    %p240 = scmp.eq.s32.totalorder %s17, 0
    %p241 = por %p239, %p240
    %p242 = scmp.ne.s32.totalorder %s231, %s234
    %p243 = scmp.eq.s32.totalorder %s22, 1
    %p244 = por %p242, %p243
    %p245 = scmp.ne.s32.totalorder %s234, %s235
    %p246 = scmp.eq.s32.totalorder %s22, 0
    %p247 = por %p245, %p246
    %p248 = scmp.ne.s32.totalorder %s234, %s235
    %p249 = scmp.eq.s32.totalorder %s23, 1
    %p250 = por %p248, %p249
    %p252 = scmp.ne.s32.totalorder %s235, %s251
    %p253 = scmp.eq.s32.totalorder %s23, 0
    %p254 = por %p252, %p253
    %s255 = ssub.s32 %s17, %s24
    %p256 = scmp.eq.s32.totalorder %s255, 0
    %s258 = sadd.s32 %s257, 1
    %s259 = scalar_select %p256, %s257, %s258
    %p262 = pneg %p256
    %p263 = scmp.eq.s32.totalorder %s17, 1
    %p264 = por %p262, %p263
    %p265 = scmp.ne.s32.totalorder %s257, %s260
    %p266 = scmp.eq.s32.totalorder %s17, 0
    %p267 = por %p265, %p266
    %p268 = scmp.ne.s32.totalorder %s257, %s260
    %p269 = scmp.eq.s32.totalorder %s22, 1
    %p270 = por %p268, %p269
    %p271 = scmp.ne.s32.totalorder %s260, %s261
    %p272 = scmp.eq.s32.totalorder %s22, 0
    %p273 = por %p271, %p272
    %p274 = scmp.ne.s32.totalorder %s260, %s261
    %p275 = scmp.eq.s32.totalorder %s23, 1
    %p276 = por %p274, %p275
    %p278 = scmp.ne.s32.totalorder %s261, %s277
    %p279 = scmp.eq.s32.totalorder %s23, 0
    %p280 = por %p278, %p279
    %p281 = scmp.le.s32.totalorder 1, %s17
    %p282 = scmp.lt.s32.totalorder %s17, 3
    %p283 = pnand %p281, %p282
    %p284 = pneg %p283
    // Predicated region
    $region9: #{encoder_forward.1} parent=5 // pred_check
      _
    $region10: #{encoder_forward.1} parent=5 // pred_check_branch
      %286 = sbr.rel (%p283) target = $region12
    $region11: #{encoder_forward.1} parent=5 // pred_region
      %s287 = ssub.s32 %s17, 1
      // Predicated region
      $region13: #{encoder_forward.1} parent=11 // pred_check
        %p288 = pneg %p90
      $region14: #{encoder_forward.1} parent=11 // pred_check_branch
        %290 = sbr.rel (%p288) target = $region16
      $region15: #{encoder_forward.1} parent=11 // pred_region
        _
      $region16: #{encoder_forward.1} parent=11 // pred_fallthru
        _
      // Predicated region
      $region17: #{encoder_forward.1} parent=11 // pred_check
        %p291 = pneg %p111
      $region18: #{encoder_forward.1} parent=11 // pred_check_branch
        %293 = sbr.rel (%p291) target = $region20
      $region19: #{encoder_forward.1} parent=11 // pred_region
        _
      $region20: #{encoder_forward.1} parent=11 // pred_fallthru
        _
      // Predicated region
      $region21: #{encoder_forward.1} parent=11 // pred_check
        %p294 = pneg %p132
      $region22: #{encoder_forward.1} parent=11 // pred_check_branch
        %296 = sbr.rel (%p294) target = $region24
      $region23: #{encoder_forward.1} parent=11 // pred_region
        _
      $region24: #{encoder_forward.1} parent=11 // pred_fallthru
        _
      // Predicated region
      $region25: #{encoder_forward.1} parent=11 // pred_check
        %p297 = pneg %p153
      $region26: #{encoder_forward.1} parent=11 // pred_check_branch
        %299 = sbr.rel (%p297) target = $region28
      $region27: #{encoder_forward.1} parent=11 // pred_region
        _
      $region28: #{encoder_forward.1} parent=11 // pred_fallthru
        _
      // Predicated region
      $region29: #{encoder_forward.1} parent=11 // pred_check
        %p300 = pneg %p174
      $region30: #{encoder_forward.1} parent=11 // pred_check_branch
        %302 = sbr.rel (%p300) target = $region32
      $region31: #{encoder_forward.1} parent=11 // pred_region
        _
      $region32: #{encoder_forward.1} parent=11 // pred_fallthru
        _
      // Predicated region
      $region33: #{encoder_forward.1} parent=11 // pred_check
        %p303 = pneg %p195
      $region34: #{encoder_forward.1} parent=11 // pred_check_branch
        %305 = sbr.rel (%p303) target = $region36
      $region35: #{encoder_forward.1} parent=11 // pred_region
        _
      $region36: #{encoder_forward.1} parent=11 // pred_fallthru
        _
    $region12: #{encoder_forward.1} parent=5 // pred_fallthru
      _
    %p306 = scmp.lt.s32.totalorder %s17, 2
    // Predicated region
    $region37: #{encoder_forward.1} parent=5 // pred_check
      %p307 = pneg %p306
    $region38: #{encoder_forward.1} parent=5 // pred_check_branch
      %309 = sbr.rel (%p307) target = $region40
    $region39: #{encoder_forward.1} parent=5 // pred_region
      // Predicated region
      $region41: #{encoder_forward.1} parent=39 // pred_check
        %p310 = pneg %p37
      $region42: #{encoder_forward.1} parent=39 // pred_check_branch
        %312 = sbr.rel (%p310) target = $region44
      $region43: #{encoder_forward.1} parent=39 // pred_region
        %p313 = scmp.lt.s32.totalorder %s17, 1
        %s314 = scalar_select %p313, %s17, 1
        %s315 = smul.addr %s314, 2
        %s316 = smul.addr %s315, 4
        %s317 = scalar_lea.vmem %s0, %s316
      $region44: #{encoder_forward.1} parent=39 // pred_fallthru
        _
      // Predicated region
      $region45: #{encoder_forward.1} parent=39 // pred_check
        %p318 = pneg %p63
      $region46: #{encoder_forward.1} parent=39 // pred_check_branch
        %320 = sbr.rel (%p318) target = $region48
      $region47: #{encoder_forward.1} parent=39 // pred_region
        %p321 = scmp.lt.s32.totalorder %s17, 1
        %s322 = scalar_select %p321, %s17, 1
        %s323 = smul.addr %s322, 20
        %s324 = smul.addr %s323, 8
        %s325 = scalar_lea.vmem %s1, %s324
      $region48: #{encoder_forward.1} parent=39 // pred_fallthru
        _
    $region40: #{encoder_forward.1} parent=5 // pred_fallthru
      _
    %p326 = scmp.le.s32.totalorder 1, %s17
    %p327 = scmp.lt.s32.totalorder %s17, 3
    %p328 = pnand %p326, %p327
    %p329 = pneg %p328
    // Predicated region
    $region49: #{encoder_forward.1} parent=5 // pred_check
      _
    $region50: #{encoder_forward.1} parent=5 // pred_check_branch
      %331 = sbr.rel (%p328) target = $region52
    $region51: #{encoder_forward.1} parent=5 // pred_region
      %s332 = ssub.s32 %s17, 1
      %p333 = scmp.lt.s32.totalorder %s22, 1
      %s334 = scalar_select %p333, %s22, 1
      %s335 = smul.addr %s334, 2
      %s336 = smul.addr %s335, 4
      %s337 = scalar_lea.vmem %s0, %s336
      %p338 = pneg %p43
      %p339 = pneg %p40
      %p340 = scmp.lt.s32.totalorder %s22, 1
      %s341 = scalar_select %p340, %s22, 1
      %s342 = smul.addr %s341, 20
      %s343 = smul.addr %s342, 8
      %s344 = scalar_lea.vmem %s1, %s343
      %p345 = pneg %p69
      %p346 = pneg %p66
      %p347 = pneg %p90
      %p348 = pneg %p87
      %p349 = pneg %p111
      %p350 = pneg %p108
      %p351 = pneg %p132
      %p352 = pneg %p129
      %p353 = pneg %p153
      %p354 = pneg %p150
      %p355 = pneg %p174
      %p356 = pneg %p171
      %p357 = pneg %p195
      %p358 = pneg %p192
      %p359 = pneg %p221
      %p360 = pneg %p218
      %p361 = scmp.lt.s32.totalorder %s22, 1
      %s362 = scalar_select %p361, %s22, 1
      %s363 = smul.addr %s362, 10
      %s364 = smul.addr %s363, 8
      %s365 = scalar_lea.vmem %s8, %s364
      %p366 = pneg %p247
      %p367 = pneg %p244
      %p368 = scmp.lt.s32.totalorder %s22, 1
      %s369 = scalar_select %p368, %s22, 1
      %s370 = smul.addr %s369, 8
      %s371 = scalar_lea.vmem %s9, %s370
      %p372 = pneg %p273
      %p373 = pneg %p270
      %p374 = scmp.lt.s32.totalorder %s22, 1
      %s375 = scalar_select %p374, %s22, 1
      %s376 = smul.addr %s375, 2
      %s377 = scalar_lea.vmem %s10, %s376
      %p378 = scmp.lt.s32.totalorder %s22, 1
      %s379 = scalar_select %p378, %s22, 1
      %s380 = smul.addr %s379, 2
      %s381 = smul.addr %s380, 4
      %s382 = scalar_lea.vmem %s0, %s381
      %p383 = scmp.lt.s32.totalorder %s22, 1
      %s384 = scalar_select %p383, %s22, 1
      %s385 = smul.addr %s384, 20
      %s386 = smul.addr %s385, 8
      %s387 = scalar_lea.vmem %s1, %s386
      %p388 = scmp.lt.s32.totalorder %s22, 1
      %s389 = scalar_select %p388, %s22, 1
      %s390 = smul.addr %s389, 10
      %s391 = smul.addr %s390, 8
      %s392 = scalar_lea.vmem %s8, %s391
      %p393 = scmp.lt.s32.totalorder %s22, 1
      %s394 = scalar_select %p393, %s22, 1
      %s395 = smul.addr %s394, 8
      %s396 = scalar_lea.vmem %s9, %s395
      %p397 = scmp.lt.s32.totalorder %s22, 1
      %s398 = scalar_select %p397, %s22, 1
      %s399 = smul.addr %s398, 2
      %s400 = scalar_lea.vmem %s10, %s399
      %v401 = vld [vmem:[%s2] sm:$0xff]
      %v402 = vld [vmem:[%s382] sm:$0xff]
      %v403 = vld [vmem:[%s3] sm:$0xff]
      %405 = vset.pattern.permute.xlu0 0
      %406 = vperm.xlu0 %405, %v403
      %v407 = vpop.permute.xlu0 %406
      %v410 = vcombine.high %v402, %v402
      %vm411 = vcmask 31744
      %v413 = vsel %vm411, %v401, 0
      %vm415 = vcmask 1043456
      %v416 = vsel %vm415, %v402, 0
      %v418 = vsel %vm415, %v410, 0
      %420 = vmatprep.subr.mxu0 %v418
      %421 = vmatpush1.msra.mxu0 %v416
      %422 = vmatprep.subr.mxu0 0.0
      %423 = vmatpush1.msra.mxu0 0.0
      %424 = vmatprep.subr.mxu0 0.0
      %425 = vmatpush1.msra.mxu0 0.0
      %426 = vmatprep.subr.mxu0 0.0
      %427 = vmatpush1.msra.mxu0 0.0
      %428 = vmatprep.subr.mxu0 0.0
      %429 = vmatpush1.msra.mxu0 0.0
      %430 = vmatprep.subr.mxu0 0.0
      %431 = vmatpush1.msra.mxu0 0.0
      %432 = vmatprep.subr.mxu0 0.0
      %433 = vmatpush1.msra.mxu0 0.0
      %434 = vmatprep.subr.mxu0 0.0
      %435 = vmatpush1.msra.mxu0 0.0
      %436 = vmatprep.subr.mxu0 0.0
      %437 = vmatpush1.msra.mxu0 0.0
      %438 = vmatprep.subr.mxu0 0.0
      %439 = vmatpush1.msra.mxu0 0.0
      %440 = vmatprep.subr.mxu0 0.0
      %441 = vmatpush1.msra.mxu0 0.0
      %442 = vmatprep.subr.mxu0 0.0
      %443 = vmatpush1.msra.mxu0 0.0
      %444 = vmatprep.subr.mxu0 0.0
      %445 = vmatpush1.msra.mxu0 0.0
      %446 = vmatprep.subr.mxu0 0.0
      %447 = vmatpush1.msra.mxu0 0.0
      %448 = vmatprep.subr.mxu0 0.0
      %449 = vmatpush1.msra.mxu0 0.0
      %450 = vmatprep.subr.mxu0 0.0
      %451 = vmatpush1.msra.mxu0 0.0
      %452 = vmatprep.subr.mxu0 0.0
      %453 = vmatpush1.msra.mxu0 0.0
      %454 = vmatprep.subr.mxu0 0.0
      %455 = vmatpush1.msra.mxu0 0.0
      %456 = vmatprep.subr.mxu0 0.0
      %457 = vmatpush1.msra.mxu0 0.0
      %458 = vmatprep.subr.mxu0 0.0
      %459 = vmatpush1.msra.mxu0 0.0
      %460 = vmatprep.subr.mxu0 0.0
      %461 = vmatpush1.msra.mxu0 0.0
      %462 = vmatprep.subr.mxu0 0.0
      %463 = vmatpush1.msra.mxu0 0.0
      %464 = vmatprep.subr.mxu0 0.0
      %465 = vmatpush1.msra.mxu0 0.0
      %466 = vmatprep.subr.mxu0 0.0
      %467 = vmatpush1.msra.mxu0 0.0
      %468 = vmatprep.subr.mxu0 0.0
      %469 = vmatpush1.msra.mxu0 0.0
      %470 = vmatprep.subr.mxu0 0.0
      %471 = vmatpush1.msra.mxu0 0.0
      %472 = vmatprep.subr.mxu0 0.0
      %473 = vmatpush1.msra.mxu0 0.0
      %474 = vmatprep.subr.mxu0 0.0
      %475 = vmatpush1.msra.mxu0 0.0
      %476 = vmatprep.subr.mxu0 0.0
      %477 = vmatpush1.msra.mxu0 0.0
      %478 = vmatprep.subr.mxu0 0.0
      %479 = vmatpush1.msra.mxu0 0.0
      %480 = vmatprep.subr.mxu0 0.0
      %481 = vmatpush1.msra.mxu0 0.0
      %482 = vmatprep.subr.mxu0 0.0
      %483 = vmatpush1.msra.mxu0 0.0
      %484 = vmatprep.mubr.f32.mxu0 0.0
      %485 = vmatmul.mubr.f32.gmra.mrb[0].mxu0 %v413
      %v486 = vpop.f32.mrb[0].mxu0
      %v487 = vadd.f32 %v407, %v486
      %v488 = vpop.f32.mrb[0].mxu0
      %v489 = vadd.f32 %v407, %v488
      %490 = vdwg.mxu0
      %491 = vst [vmem:[%s392] sm:$0xff] %v487
      %492 = vst [vmem:[%s392 + $0x8] sm:$0xff] %v489
      %v493 = vlaneseq
      %v494 = vand.u32 %v493, 127
      %v495 = vadd.s32 %v494, 128
      %v496 = vand.u32 %v494, 15
      %v497 = vand.u32 %v495, 15
      %v498 = vld [vmem:[%s387] sm:$0xff]
      %v499 = vld [vmem:[%s387 + $0x8] sm:$0xff]
      %v500 = vld [vmem:[%s387 + $0x10] sm:$0xff]
      %v501 = vld [vmem:[%s387 + $0x18] sm:$0xff]
      %v502 = vld [vmem:[%s387 + $0x20] sm:$0xff]
      %503 = vrot.lane.b32.xlu0 %v487, 120
      %v504 = vpop.permute.xlu0 %503
      %505 = vrot.lane.b32.xlu0 %v489, 120
      %v506 = vpop.permute.xlu0 %505
      %vm507 = vcmp.lt.s32.totalorder %v494, 120
      %v508 = vsel %vm507, %v504, %v506
      %v509 = vsel %vm507, %v506, %v504
      %510 = vrot.lane.b32.xlu0 %v487, 8
      %v511 = vpop.permute.xlu0 %510
      %512 = vrot.lane.b32.xlu0 %v489, 8
      %v513 = vpop.permute.xlu0 %512
      %vm514 = vcmp.lt.s32.totalorder %v494, 8
      %v515 = vsel %vm514, %v511, %v513
      %v516 = vsel %vm514, %v513, %v511
      %vm517 = vcmp.lt.s32.totalorder %v496, 8
      %vm518 = vcmp.lt.s32.totalorder %v497, 8
      %v519 = vsel %vm517, %v508, 0.0
      %v520 = vsel %vm518, %v509, 0.0
      %vm521 = vcmp.ge.s32.totalorder %v496, 8
      %vm522 = vcmp.ge.s32.totalorder %v497, 8
      %v523 = vsel %vm521, %v516, 0.0
      %v524 = vsel %vm522, %v515, 0.0
      %v525 = vsub.f32 %v519, %v523
      %v526 = vsub.f32 %v520, %v524
      %vm527 = vcmp.lt.s32.totalorder %v494, 128
      %vm528 = vcmp.lt.s32.totalorder %v495, 128
      %v529 = vsel %vm527, %v489, 0.0
      %v530 = vsel %vm528, %v487, 0.0
      %vm531 = vcmp.ge.s32.totalorder %v494, 128
      %vm532 = vcmp.ge.s32.totalorder %v495, 128
      %v533 = vsel %vm531, %v489, 0.0
      %v534 = vsel %vm532, %v487, 0.0
      %v535 = vsub.f32 %v529, %v533
      %v536 = vsub.f32 %v530, %v534
      %v537 = vadd.f32 %v487, %v489
      %538 = vadd.xlane.f32.xlu0 %v537
      %v539 = vpop.xlane.xlu0 %538
      %v540 = vadd.f32 %v525, %v526
      %541 = vadd.xlane.f32.xlu0 %v540
      %v542 = vpop.xlane.xlu0 %541
      %v543 = vadd.f32 %v535, %v536
      %544 = vadd.xlane.f32.xlu0 %v543
      %v545 = vpop.xlane.xlu0 %544
      %v546 = vrcp.pop 256.0
      %v547 = vmul.f32 %v539, %v546
      %v548 = vmul.f32 %v542, %v546
      %v549 = vmul.f32 %v545, %v546
      %v550 = vsub.f32 %v487, %v547
      %v551 = vsub.f32 %v489, %v547
      %v552 = vsub.f32 %v525, %v548
      %v553 = vsub.f32 %v526, %v548
      %v554 = vsub.f32 %v535, %v549
      %v555 = vsub.f32 %v536, %v549
      %v556 = vmul.f32 %v550, %v550
      %v557 = vmul.f32 %v551, %v551
      %v558 = vmul.f32 %v552, %v552
      %v559 = vmul.f32 %v553, %v553
      %v560 = vmul.f32 %v554, %v554
      %v561 = vmul.f32 %v555, %v555
      %v562 = vadd.f32 %v556, %v557
      %563 = vadd.xlane.f32.xlu0 %v562
      %v564 = vpop.xlane.xlu0 %563
      %v565 = vadd.f32 %v558, %v559
      %566 = vadd.xlane.f32.xlu0 %v565
      %v567 = vpop.xlane.xlu0 %566
      %v568 = vadd.f32 %v560, %v561
      %569 = vadd.xlane.f32.xlu0 %v568
      %v570 = vpop.xlane.xlu0 %569
      %v571 = vmul.f32 %v564, %v546
      %v572 = vmul.f32 %v567, %v546
      %v573 = vmul.f32 %v570, %v546
      %v574 = vadd.f32 %v571, 1e-05
      %v575 = vadd.f32 %v572, 1e-05
      %v576 = vadd.f32 %v573, 1e-05
      %v577 = vrsqrt.pop %v574
      %v578 = vrsqrt.pop %v575
      %v579 = vrsqrt.pop %v576
      %v580 = vmul.f32 %v550, %v577
      %v581 = vmul.f32 %v551, %v577
      %v582 = vmul.f32 %v552, %v578
      %v583 = vmul.f32 %v553, %v578
      %v584 = vmul.f32 %v554, %v579
      %v585 = vmul.f32 %v555, %v579
      %587 = vset.pattern.permute.xlu0 3
      %588 = vperm.xlu0 %587, %v502
      %v589 = vpop.permute.xlu0 %588
      %vm591 = vcmask 195584
      %v593 = vsel %vm591, %v499, 0
      %595 = vmatprep.subr.mxu0 %v581
      %596 = vmatpush1.msra.mxu0 %v580
      %597 = vmatprep.subr.mxu0 %v583
      %598 = vmatpush1.msra.mxu0 %v582
      %599 = vmatprep.subr.mxu0 %v585
      %600 = vmatpush1.msra.mxu0 %v584
      %601 = vmatprep.subr.mxu0 0.0
      %602 = vmatpush1.msra.mxu0 0.0
      %603 = vmatprep.subr.mxu0 0.0
      %604 = vmatpush1.msra.mxu0 0.0
      %605 = vmatprep.subr.mxu0 0.0
      %606 = vmatpush1.msra.mxu0 0.0
      %607 = vmatprep.subr.mxu0 0.0
      %608 = vmatpush1.msra.mxu0 0.0
      %609 = vmatprep.subr.mxu0 0.0
      %610 = vmatpush1.msra.mxu0 0.0
      %611 = vmatprep.subr.mxu0 0.0
      %612 = vmatpush1.msra.mxu0 0.0
      %613 = vmatprep.subr.mxu0 0.0
      %614 = vmatpush1.msra.mxu0 0.0
      %615 = vmatprep.subr.mxu0 0.0
      %616 = vmatpush1.msra.mxu0 0.0
      %617 = vmatprep.subr.mxu0 0.0
      %618 = vmatpush1.msra.mxu0 0.0
      %619 = vmatprep.subr.mxu0 0.0
      %620 = vmatpush1.msra.mxu0 0.0
      %621 = vmatprep.subr.mxu0 0.0
      %622 = vmatpush1.msra.mxu0 0.0
      %623 = vmatprep.subr.mxu0 0.0
      %624 = vmatpush1.msra.mxu0 0.0
      %625 = vmatprep.subr.mxu0 0.0
      %626 = vmatpush1.msra.mxu0 0.0
      %627 = vmatprep.subr.mxu0 0.0
      %628 = vmatpush1.msra.mxu0 0.0
      %629 = vmatprep.subr.mxu0 0.0
      %630 = vmatpush1.msra.mxu0 0.0
      %631 = vmatprep.subr.mxu0 0.0
      %632 = vmatpush1.msra.mxu0 0.0
      %633 = vmatprep.subr.mxu0 0.0
      %634 = vmatpush1.msra.mxu0 0.0
      %635 = vmatprep.subr.mxu0 0.0
      %636 = vmatpush1.msra.mxu0 0.0
      %637 = vmatprep.subr.mxu0 0.0
      %638 = vmatpush1.msra.mxu0 0.0
      %639 = vmatprep.subr.mxu0 0.0
      %640 = vmatpush1.msra.mxu0 0.0
      %641 = vmatprep.subr.mxu0 0.0
      %642 = vmatpush1.msra.mxu0 0.0
      %643 = vmatprep.subr.mxu0 0.0
      %644 = vmatpush1.msra.mxu0 0.0
      %645 = vmatprep.subr.mxu0 0.0
      %646 = vmatpush1.msra.mxu0 0.0
      %647 = vmatprep.subr.mxu0 0.0
      %648 = vmatpush1.msra.mxu0 0.0
      %649 = vmatprep.subr.mxu0 0.0
      %650 = vmatpush1.msra.mxu0 0.0
      %651 = vmatprep.subr.mxu0 0.0
      %652 = vmatpush1.msra.mxu0 0.0
      %653 = vmatprep.subr.mxu0 0.0
      %654 = vmatpush1.msra.mxu0 0.0
      %655 = vmatprep.subr.mxu0 0.0
      %656 = vmatpush1.msra.mxu0 0.0
      %657 = vmatprep.subr.mxu0 0.0
      %658 = vmatpush1.msra.mxu0 0.0
      %659 = vmatprep.mubr.f32.mxu0 0.0
      %660 = vmatmul.mubr.f32.gmra.mrb[0].mxu0 %v593
      %v661 = vpop.f32.mrb[0].mxu0
      %v662 = vadd.f32 %v589, %v661
      %v663 = vpop.f32.mrb[0].mxu0
      %v664 = vadd.f32 %v589, %v663
      %665 = vdwg.mxu0
      %666 = vset.pattern.permute.xlu0 0
      %667 = vperm.xlu0 %666, %v502
      %v668 = vpop.permute.xlu0 %667
      %v671 = vsel %vm591, %v498, 0
      %673 = vmatprep.subr.mxu0 %v581
      %674 = vmatpush1.msra.mxu0 %v580
      %675 = vmatprep.subr.mxu0 %v583
      %676 = vmatpush1.msra.mxu0 %v582
      %677 = vmatprep.subr.mxu0 %v585
      %678 = vmatpush1.msra.mxu0 %v584
      %679 = vmatprep.subr.mxu0 0.0
      %680 = vmatpush1.msra.mxu0 0.0
      %681 = vmatprep.subr.mxu0 0.0
      %682 = vmatpush1.msra.mxu0 0.0
      %683 = vmatprep.subr.mxu0 0.0
      %684 = vmatpush1.msra.mxu0 0.0
      %685 = vmatprep.subr.mxu0 0.0
      %686 = vmatpush1.msra.mxu0 0.0
      %687 = vmatprep.subr.mxu0 0.0
      %688 = vmatpush1.msra.mxu0 0.0
      %689 = vmatprep.subr.mxu0 0.0
      %690 = vmatpush1.msra.mxu0 0.0
      %691 = vmatprep.subr.mxu0 0.0
      %692 = vmatpush1.msra.mxu0 0.0
      %693 = vmatprep.subr.mxu0 0.0
      %694 = vmatpush1.msra.mxu0 0.0
      %695 = vmatprep.subr.mxu0 0.0
      %696 = vmatpush1.msra.mxu0 0.0
      %697 = vmatprep.subr.mxu0 0.0
      %698 = vmatpush1.msra.mxu0 0.0
      %699 = vmatprep.subr.mxu0 0.0
      %700 = vmatpush1.msra.mxu0 0.0
      %701 = vmatprep.subr.mxu0 0.0
      %702 = vmatpush1.msra.mxu0 0.0
      %703 = vmatprep.subr.mxu0 0.0
      %704 = vmatpush1.msra.mxu0 0.0
      %705 = vmatprep.subr.mxu0 0.0
      %706 = vmatpush1.msra.mxu0 0.0
      %707 = vmatprep.subr.mxu0 0.0
      %708 = vmatpush1.msra.mxu0 0.0
      %709 = vmatprep.subr.mxu0 0.0
      %710 = vmatpush1.msra.mxu0 0.0
      %711 = vmatprep.subr.mxu0 0.0
      %712 = vmatpush1.msra.mxu0 0.0
      %713 = vmatprep.subr.mxu0 0.0
      %714 = vmatpush1.msra.mxu0 0.0
      %715 = vmatprep.subr.mxu0 0.0
      %716 = vmatpush1.msra.mxu0 0.0
      %717 = vmatprep.subr.mxu0 0.0
      %718 = vmatpush1.msra.mxu0 0.0
      %719 = vmatprep.subr.mxu0 0.0
      %720 = vmatpush1.msra.mxu0 0.0
      %721 = vmatprep.subr.mxu0 0.0
      %722 = vmatpush1.msra.mxu0 0.0
      %723 = vmatprep.subr.mxu0 0.0
      %724 = vmatpush1.msra.mxu0 0.0
      %725 = vmatprep.subr.mxu0 0.0
      %726 = vmatpush1.msra.mxu0 0.0
      %727 = vmatprep.subr.mxu0 0.0
      %728 = vmatpush1.msra.mxu0 0.0
      %729 = vmatprep.subr.mxu0 0.0
      %730 = vmatpush1.msra.mxu0 0.0
      %731 = vmatprep.subr.mxu0 0.0
      %732 = vmatpush1.msra.mxu0 0.0
      %733 = vmatprep.subr.mxu0 0.0
      %734 = vmatpush1.msra.mxu0 0.0
      %735 = vmatprep.subr.mxu0 0.0
      %736 = vmatpush1.msra.mxu0 0.0
      %737 = vmatprep.mubr.f32.mxu0 0.0
      %738 = vmatmul.mubr.f32.gmra.mrb[0].mxu0 %v671
      %v739 = vpop.f32.mrb[0].mxu0
      %v740 = vadd.f32 %v668, %v739
      %v741 = vpop.f32.mrb[0].mxu0
      %v742 = vadd.f32 %v668, %v741
      %743 = vdwg.mxu0
      %v744 = vmul.f32 %v740, 0.2
      %v745 = vmul.f32 %v742, 0.2
      %v746 = vmax.f32 %v740, %v744
      %v747 = vmax.f32 %v742, %v745
      %748 = vset.pattern.permute.xlu0 1
      %749 = vperm.xlu0 %748, %v502
      %v750 = vpop.permute.xlu0 %749
      %vm752 = vcmask 64512
      %v754 = vsel %vm752, %v500, 0
      %756 = vmatprep.subr.mxu0 %v747
      %757 = vmatpush1.msra.mxu0 %v746
      %758 = vmatprep.subr.mxu0 0.0
      %759 = vmatpush1.msra.mxu0 0.0
      %760 = vmatprep.subr.mxu0 0.0
      %761 = vmatpush1.msra.mxu0 0.0
      %762 = vmatprep.subr.mxu0 0.0
      %763 = vmatpush1.msra.mxu0 0.0
      %764 = vmatprep.subr.mxu0 0.0
      %765 = vmatpush1.msra.mxu0 0.0
      %766 = vmatprep.subr.mxu0 0.0
      %767 = vmatpush1.msra.mxu0 0.0
      %768 = vmatprep.subr.mxu0 0.0
      %769 = vmatpush1.msra.mxu0 0.0
      %770 = vmatprep.subr.mxu0 0.0
      %771 = vmatpush1.msra.mxu0 0.0
      %772 = vmatprep.subr.mxu0 0.0
      %773 = vmatpush1.msra.mxu0 0.0
      %774 = vmatprep.subr.mxu0 0.0
      %775 = vmatpush1.msra.mxu0 0.0
      %776 = vmatprep.subr.mxu0 0.0
      %777 = vmatpush1.msra.mxu0 0.0
      %778 = vmatprep.subr.mxu0 0.0
      %779 = vmatpush1.msra.mxu0 0.0
      %780 = vmatprep.subr.mxu0 0.0
      %781 = vmatpush1.msra.mxu0 0.0
      %782 = vmatprep.subr.mxu0 0.0
      %783 = vmatpush1.msra.mxu0 0.0
      %784 = vmatprep.subr.mxu0 0.0
      %785 = vmatpush1.msra.mxu0 0.0
      %786 = vmatprep.subr.mxu0 0.0
      %787 = vmatpush1.msra.mxu0 0.0
      %788 = vmatprep.subr.mxu0 0.0
      %789 = vmatpush1.msra.mxu0 0.0
      %790 = vmatprep.subr.mxu0 0.0
      %791 = vmatpush1.msra.mxu0 0.0
      %792 = vmatprep.subr.mxu0 0.0
      %793 = vmatpush1.msra.mxu0 0.0
      %794 = vmatprep.subr.mxu0 0.0
      %795 = vmatpush1.msra.mxu0 0.0
      %796 = vmatprep.subr.mxu0 0.0
      %797 = vmatpush1.msra.mxu0 0.0
      %798 = vmatprep.subr.mxu0 0.0
      %799 = vmatpush1.msra.mxu0 0.0
      %800 = vmatprep.subr.mxu0 0.0
      %801 = vmatpush1.msra.mxu0 0.0
      %802 = vmatprep.subr.mxu0 0.0
      %803 = vmatpush1.msra.mxu0 0.0
      %804 = vmatprep.subr.mxu0 0.0
      %805 = vmatpush1.msra.mxu0 0.0
      %806 = vmatprep.subr.mxu0 0.0
      %807 = vmatpush1.msra.mxu0 0.0
      %808 = vmatprep.subr.mxu0 0.0
      %809 = vmatpush1.msra.mxu0 0.0
      %810 = vmatprep.subr.mxu0 0.0
      %811 = vmatpush1.msra.mxu0 0.0
      %812 = vmatprep.subr.mxu0 0.0
      %813 = vmatpush1.msra.mxu0 0.0
      %814 = vmatprep.subr.mxu0 0.0
      %815 = vmatpush1.msra.mxu0 0.0
      %816 = vmatprep.subr.mxu0 0.0
      %817 = vmatpush1.msra.mxu0 0.0
      %818 = vmatprep.subr.mxu0 0.0
      %819 = vmatpush1.msra.mxu0 0.0
      %820 = vmatprep.mubr.f32.mxu0 0.0
      %821 = vmatmul.mubr.f32.gmra.mrb[0].mxu0 %v754
      %v822 = vpop.f32.mrb[0].mxu0
      %v823 = vadd.f32 %v750, %v822
      %v824 = vpop.f32.mrb[0].mxu0
      %v825 = vadd.f32 %v750, %v824
      %826 = vdwg.mxu0
      %v827 = vmul.f32 %v823, 0.2
      %v828 = vmul.f32 %v825, 0.2
      %v829 = vmax.f32 %v823, %v827
      %v830 = vmax.f32 %v825, %v828
      %831 = vset.pattern.permute.xlu0 2
      %832 = vperm.xlu0 %831, %v502
      %v833 = vpop.permute.xlu0 %832
      %v836 = vsel %vm752, %v501, 0
      %838 = vmatprep.subr.mxu0 %v830
      %839 = vmatpush1.msra.mxu0 %v829
      %840 = vmatprep.subr.mxu0 0.0
      %841 = vmatpush1.msra.mxu0 0.0
      %842 = vmatprep.subr.mxu0 0.0
      %843 = vmatpush1.msra.mxu0 0.0
      %844 = vmatprep.subr.mxu0 0.0
      %845 = vmatpush1.msra.mxu0 0.0
      %846 = vmatprep.subr.mxu0 0.0
      %847 = vmatpush1.msra.mxu0 0.0
      %848 = vmatprep.subr.mxu0 0.0
      %849 = vmatpush1.msra.mxu0 0.0
      %850 = vmatprep.subr.mxu0 0.0
      %851 = vmatpush1.msra.mxu0 0.0
      %852 = vmatprep.subr.mxu0 0.0
      %853 = vmatpush1.msra.mxu0 0.0
      %854 = vmatprep.subr.mxu0 0.0
      %855 = vmatpush1.msra.mxu0 0.0
      %856 = vmatprep.subr.mxu0 0.0
      %857 = vmatpush1.msra.mxu0 0.0
      %858 = vmatprep.subr.mxu0 0.0
      %859 = vmatpush1.msra.mxu0 0.0
      %860 = vmatprep.subr.mxu0 0.0
      %861 = vmatpush1.msra.mxu0 0.0
      %862 = vmatprep.subr.mxu0 0.0
      %863 = vmatpush1.msra.mxu0 0.0
      %864 = vmatprep.subr.mxu0 0.0
      %865 = vmatpush1.msra.mxu0 0.0
      %866 = vmatprep.subr.mxu0 0.0
      %867 = vmatpush1.msra.mxu0 0.0
      %868 = vmatprep.subr.mxu0 0.0
      %869 = vmatpush1.msra.mxu0 0.0
      %870 = vmatprep.subr.mxu0 0.0
      %871 = vmatpush1.msra.mxu0 0.0
      %872 = vmatprep.subr.mxu0 0.0
      %873 = vmatpush1.msra.mxu0 0.0
      %874 = vmatprep.subr.mxu0 0.0
      %875 = vmatpush1.msra.mxu0 0.0
      %876 = vmatprep.subr.mxu0 0.0
      %877 = vmatpush1.msra.mxu0 0.0
      %878 = vmatprep.subr.mxu0 0.0
      %879 = vmatpush1.msra.mxu0 0.0
      %880 = vmatprep.subr.mxu0 0.0
      %881 = vmatpush1.msra.mxu0 0.0
      %882 = vmatprep.subr.mxu0 0.0
      %883 = vmatpush1.msra.mxu0 0.0
      %884 = vmatprep.subr.mxu0 0.0
      %885 = vmatpush1.msra.mxu0 0.0
      %886 = vmatprep.subr.mxu0 0.0
      %887 = vmatpush1.msra.mxu0 0.0
      %888 = vmatprep.subr.mxu0 0.0
      %889 = vmatpush1.msra.mxu0 0.0
      %890 = vmatprep.subr.mxu0 0.0
      %891 = vmatpush1.msra.mxu0 0.0
      %892 = vmatprep.subr.mxu0 0.0
      %893 = vmatpush1.msra.mxu0 0.0
      %894 = vmatprep.subr.mxu0 0.0
      %895 = vmatpush1.msra.mxu0 0.0
      %896 = vmatprep.subr.mxu0 0.0
      %897 = vmatpush1.msra.mxu0 0.0
      %898 = vmatprep.subr.mxu0 0.0
      %899 = vmatpush1.msra.mxu0 0.0
      %900 = vmatprep.subr.mxu0 0.0
      %901 = vmatpush1.msra.mxu0 0.0
      %902 = vmatprep.mubr.f32.mxu0 0.0
      %903 = vmatmul.mubr.f32.gmra.mrb[0].mxu0 %v836
      %v904 = vpop.f32.mrb[0].mxu0
      %v905 = vadd.f32 %v833, %v904
      %v906 = vpop.f32.mrb[0].mxu0
      %v907 = vadd.f32 %v833, %v906
      %908 = vdwg.mxu0
      %v909 = vadd.f32 %v662, %v905
      %v910 = vadd.f32 %v664, %v907
      %s911 = scalar_lea.vmem %s392, 16
      %912 = vst [vmem:[%s911] sm:$0xff] %v909
      %913 = vst [vmem:[%s911 + $0x8] sm:$0xff] %v910
      %s914 = scalar_lea.vmem %s387, 40
      %v915 = vld [vmem:[%s914] sm:$0xff]
      %v916 = vld [vmem:[%s914 + $0x8] sm:$0xff]
      %v917 = vld [vmem:[%s914 + $0x10] sm:$0xff]
      %v918 = vld [vmem:[%s914 + $0x18] sm:$0xff]
      %v919 = vld [vmem:[%s914 + $0x20] sm:$0xff]
      %920 = vrot.lane.b32.xlu0 %v909, 124
      %v921 = vpop.permute.xlu0 %920
      %922 = vrot.lane.b32.xlu0 %v910, 124
      %v923 = vpop.permute.xlu0 %922
      %vm924 = vcmp.lt.s32.totalorder %v494, 124
      %v925 = vsel %vm924, %v921, %v923
      %v926 = vsel %vm924, %v923, %v921
      %927 = vrot.lane.b32.xlu0 %v909, 4
      %v928 = vpop.permute.xlu0 %927
      %929 = vrot.lane.b32.xlu0 %v910, 4
      %v930 = vpop.permute.xlu0 %929
      %vm931 = vcmp.lt.s32.totalorder %v494, 4
      %v932 = vsel %vm931, %v928, %v930
      %v933 = vsel %vm931, %v930, %v928
      %vm934 = vcmp.lt.s32.totalorder %v496, 12
      %vm935 = vcmp.lt.s32.totalorder %v497, 12
      %v936 = vsel %vm934, %v925, 0.0
      %v937 = vsel %vm935, %v926, 0.0
      %vm938 = vcmp.ge.s32.totalorder %v496, 4
      %vm939 = vcmp.ge.s32.totalorder %v497, 4
      %v940 = vsel %vm938, %v933, 0.0
      %v941 = vsel %vm939, %v932, 0.0
      %v942 = vsub.f32 %v936, %v940
      %v943 = vsub.f32 %v937, %v941
      %944 = vrot.lane.b32.xlu0 %v909, 64
      %v945 = vpop.permute.xlu0 %944
      %946 = vrot.lane.b32.xlu0 %v910, 64
      %v947 = vpop.permute.xlu0 %946
      %vm948 = vcmp.lt.s32.totalorder %v494, 64
      %v949 = vsel %vm948, %v945, %v947
      %v950 = vsel %vm948, %v947, %v945
      %vm951 = vcmp.lt.s32.totalorder %v494, 192
      %vm952 = vcmp.lt.s32.totalorder %v495, 192
      %v953 = vsel %vm951, %v949, 0.0
      %v954 = vsel %vm952, %v950, 0.0
      %vm955 = vcmp.ge.s32.totalorder %v494, 64
      %vm956 = vcmp.ge.s32.totalorder %v495, 64
      %v957 = vsel %vm955, %v950, 0.0
      %v958 = vsel %vm956, %v949, 0.0
      %v959 = vsub.f32 %v953, %v957
      %v960 = vsub.f32 %v954, %v958
      %v961 = vadd.f32 %v909, %v910
      %962 = vadd.xlane.f32.xlu0 %v961
      %v963 = vpop.xlane.xlu0 %962
      %v964 = vadd.f32 %v942, %v943
      %965 = vadd.xlane.f32.xlu0 %v964
      %v966 = vpop.xlane.xlu0 %965
      %v967 = vadd.f32 %v959, %v960
      %968 = vadd.xlane.f32.xlu0 %v967
      %v969 = vpop.xlane.xlu0 %968
      %v970 = vmul.f32 %v963, %v546
      %v971 = vmul.f32 %v966, %v546
      %v972 = vmul.f32 %v969, %v546
      %v973 = vsub.f32 %v909, %v970
      %v974 = vsub.f32 %v910, %v970
      %v975 = vsub.f32 %v942, %v971
      %v976 = vsub.f32 %v943, %v971
      %v977 = vsub.f32 %v959, %v972
      %v978 = vsub.f32 %v960, %v972
      %v979 = vmul.f32 %v973, %v973
      %v980 = vmul.f32 %v974, %v974
      %v981 = vmul.f32 %v975, %v975
      %v982 = vmul.f32 %v976, %v976
      %v983 = vmul.f32 %v977, %v977
      %v984 = vmul.f32 %v978, %v978
      %v985 = vadd.f32 %v979, %v980
      %986 = vadd.xlane.f32.xlu0 %v985
      %v987 = vpop.xlane.xlu0 %986
      %v988 = vadd.f32 %v981, %v982
      %989 = vadd.xlane.f32.xlu0 %v988
      %v990 = vpop.xlane.xlu0 %989
      %v991 = vadd.f32 %v983, %v984
      %992 = vadd.xlane.f32.xlu0 %v991
      %v993 = vpop.xlane.xlu0 %992
      %v994 = vmul.f32 %v987, %v546
      %v995 = vmul.f32 %v990, %v546
      %v996 = vmul.f32 %v993, %v546
      %v997 = vadd.f32 %v994, 1e-05
      %v998 = vadd.f32 %v995, 1e-05
      %v999 = vadd.f32 %v996, 1e-05
      %v1000 = vrsqrt.pop %v997
      %v1001 = vrsqrt.pop %v998
      %v1002 = vrsqrt.pop %v999
      %v1003 = vmul.f32 %v973, %v1000
      %v1004 = vmul.f32 %v974, %v1000
      %v1005 = vmul.f32 %v975, %v1001
      %v1006 = vmul.f32 %v976, %v1001
      %v1007 = vmul.f32 %v977, %v1002
      %v1008 = vmul.f32 %v978, %v1002
      %1010 = vset.pattern.permute.xlu0 3
      %1011 = vperm.xlu0 %1010, %v919
      %v1012 = vpop.permute.xlu0 %1011
      %v1015 = vsel %vm591, %v916, 0
      %1017 = vmatprep.subr.mxu0 %v1004
      %1018 = vmatpush1.msra.mxu0 %v1003
      %1019 = vmatprep.subr.mxu0 %v1006
      %1020 = vmatpush1.msra.mxu0 %v1005
      %1021 = vmatprep.subr.mxu0 %v1008
      %1022 = vmatpush1.msra.mxu0 %v1007
      %1023 = vmatprep.subr.mxu0 0.0
      %1024 = vmatpush1.msra.mxu0 0.0
      %1025 = vmatprep.subr.mxu0 0.0
      %1026 = vmatpush1.msra.mxu0 0.0
      %1027 = vmatprep.subr.mxu0 0.0
      %1028 = vmatpush1.msra.mxu0 0.0
      %1029 = vmatprep.subr.mxu0 0.0
      %1030 = vmatpush1.msra.mxu0 0.0
      %1031 = vmatprep.subr.mxu0 0.0
      %1032 = vmatpush1.msra.mxu0 0.0
      %1033 = vmatprep.subr.mxu0 0.0
      %1034 = vmatpush1.msra.mxu0 0.0
      %1035 = vmatprep.subr.mxu0 0.0
      %1036 = vmatpush1.msra.mxu0 0.0
      %1037 = vmatprep.subr.mxu0 0.0
      %1038 = vmatpush1.msra.mxu0 0.0
      %1039 = vmatprep.subr.mxu0 0.0
      %1040 = vmatpush1.msra.mxu0 0.0
      %1041 = vmatprep.subr.mxu0 0.0
      %1042 = vmatpush1.msra.mxu0 0.0
      %1043 = vmatprep.subr.mxu0 0.0
      %1044 = vmatpush1.msra.mxu0 0.0
      %1045 = vmatprep.subr.mxu0 0.0
      %1046 = vmatpush1.msra.mxu0 0.0
      %1047 = vmatprep.subr.mxu0 0.0
      %1048 = vmatpush1.msra.mxu0 0.0
      %1049 = vmatprep.subr.mxu0 0.0
      %1050 = vmatpush1.msra.mxu0 0.0
      %1051 = vmatprep.subr.mxu0 0.0
      %1052 = vmatpush1.msra.mxu0 0.0
      %1053 = vmatprep.subr.mxu0 0.0
      %1054 = vmatpush1.msra.mxu0 0.0
      %1055 = vmatprep.subr.mxu0 0.0
      %1056 = vmatpush1.msra.mxu0 0.0
      %1057 = vmatprep.subr.mxu0 0.0
      %1058 = vmatpush1.msra.mxu0 0.0
      %1059 = vmatprep.subr.mxu0 0.0
      %1060 = vmatpush1.msra.mxu0 0.0
      %1061 = vmatprep.subr.mxu0 0.0
      %1062 = vmatpush1.msra.mxu0 0.0
      %1063 = vmatprep.subr.mxu0 0.0
      %1064 = vmatpush1.msra.mxu0 0.0
      %1065 = vmatprep.subr.mxu0 0.0
      %1066 = vmatpush1.msra.mxu0 0.0
      %1067 = vmatprep.subr.mxu0 0.0
      %1068 = vmatpush1.msra.mxu0 0.0
      %1069 = vmatprep.subr.mxu0 0.0
      %1070 = vmatpush1.msra.mxu0 0.0
      %1071 = vmatprep.subr.mxu0 0.0
      %1072 = vmatpush1.msra.mxu0 0.0
      %1073 = vmatprep.subr.mxu0 0.0
      %1074 = vmatpush1.msra.mxu0 0.0
      %1075 = vmatprep.subr.mxu0 0.0
      %1076 = vmatpush1.msra.mxu0 0.0
      %1077 = vmatprep.subr.mxu0 0.0
      %1078 = vmatpush1.msra.mxu0 0.0
      %1079 = vmatprep.subr.mxu0 0.0
      %1080 = vmatpush1.msra.mxu0 0.0
      %1081 = vmatprep.mubr.f32.mxu0 0.0
      %1082 = vmatmul.mubr.f32.gmra.mrb[0].mxu0 %v1015
      %v1083 = vpop.f32.mrb[0].mxu0
      %v1084 = vadd.f32 %v1012, %v1083
      %v1085 = vpop.f32.mrb[0].mxu0
      %v1086 = vadd.f32 %v1012, %v1085
      %1087 = vdwg.mxu0
      %1088 = vset.pattern.permute.xlu0 0
      %1089 = vperm.xlu0 %1088, %v919
      %v1090 = vpop.permute.xlu0 %1089
      %v1093 = vsel %vm591, %v915, 0
      %1095 = vmatprep.subr.mxu0 %v1004
      %1096 = vmatpush1.msra.mxu0 %v1003
      %1097 = vmatprep.subr.mxu0 %v1006
      %1098 = vmatpush1.msra.mxu0 %v1005
      %1099 = vmatprep.subr.mxu0 %v1008
      %1100 = vmatpush1.msra.mxu0 %v1007
      %1101 = vmatprep.subr.mxu0 0.0
      %1102 = vmatpush1.msra.mxu0 0.0
      %1103 = vmatprep.subr.mxu0 0.0
      %1104 = vmatpush1.msra.mxu0 0.0
      %1105 = vmatprep.subr.mxu0 0.0
      %1106 = vmatpush1.msra.mxu0 0.0
      %1107 = vmatprep.subr.mxu0 0.0
      %1108 = vmatpush1.msra.mxu0 0.0
      %1109 = vmatprep.subr.mxu0 0.0
      %1110 = vmatpush1.msra.mxu0 0.0
      %1111 = vmatprep.subr.mxu0 0.0
      %1112 = vmatpush1.msra.mxu0 0.0
      %1113 = vmatprep.subr.mxu0 0.0
      %1114 = vmatpush1.msra.mxu0 0.0
      %1115 = vmatprep.subr.mxu0 0.0
      %1116 = vmatpush1.msra.mxu0 0.0
      %1117 = vmatprep.subr.mxu0 0.0
      %1118 = vmatpush1.msra.mxu0 0.0
      %1119 = vmatprep.subr.mxu0 0.0
      %1120 = vmatpush1.msra.mxu0 0.0
      %1121 = vmatprep.subr.mxu0 0.0
      %1122 = vmatpush1.msra.mxu0 0.0
      %1123 = vmatprep.subr.mxu0 0.0
      %1124 = vmatpush1.msra.mxu0 0.0
      %1125 = vmatprep.subr.mxu0 0.0
      %1126 = vmatpush1.msra.mxu0 0.0
      %1127 = vmatprep.subr.mxu0 0.0
      %1128 = vmatpush1.msra.mxu0 0.0
      %1129 = vmatprep.subr.mxu0 0.0
      %1130 = vmatpush1.msra.mxu0 0.0
      %1131 = vmatprep.subr.mxu0 0.0
      %1132 = vmatpush1.msra.mxu0 0.0
      %1133 = vmatprep.subr.mxu0 0.0
      %1134 = vmatpush1.msra.mxu0 0.0
      %1135 = vmatprep.subr.mxu0 0.0
      %1136 = vmatpush1.msra.mxu0 0.0
      %1137 = vmatprep.subr.mxu0 0.0
      %1138 = vmatpush1.msra.mxu0 0.0
      %1139 = vmatprep.subr.mxu0 0.0
      %1140 = vmatpush1.msra.mxu0 0.0
      %1141 = vmatprep.subr.mxu0 0.0
      %1142 = vmatpush1.msra.mxu0 0.0
      %1143 = vmatprep.subr.mxu0 0.0
      %1144 = vmatpush1.msra.mxu0 0.0
      %1145 = vmatprep.subr.mxu0 0.0
      %1146 = vmatpush1.msra.mxu0 0.0
      %1147 = vmatprep.subr.mxu0 0.0
      %1148 = vmatpush1.msra.mxu0 0.0
      %1149 = vmatprep.subr.mxu0 0.0
      %1150 = vmatpush1.msra.mxu0 0.0
      %1151 = vmatprep.subr.mxu0 0.0
      %1152 = vmatpush1.msra.mxu0 0.0
      %1153 = vmatprep.subr.mxu0 0.0
      %1154 = vmatpush1.msra.mxu0 0.0
      %1155 = vmatprep.subr.mxu0 0.0
      %1156 = vmatpush1.msra.mxu0 0.0
      %1157 = vmatprep.subr.mxu0 0.0
      %1158 = vmatpush1.msra.mxu0 0.0
      %1159 = vmatprep.mubr.f32.mxu0 0.0
      %1160 = vmatmul.mubr.f32.gmra.mrb[0].mxu0 %v1093
      %v1161 = vpop.f32.mrb[0].mxu0
      %v1162 = vadd.f32 %v1090, %v1161
      %v1163 = vpop.f32.mrb[0].mxu0
      %v1164 = vadd.f32 %v1090, %v1163
      %1165 = vdwg.mxu0
      %v1166 = vmul.f32 %v1162, 0.2
      %v1167 = vmul.f32 %v1164, 0.2
      %v1168 = vmax.f32 %v1162, %v1166
      %v1169 = vmax.f32 %v1164, %v1167
      %1170 = vset.pattern.permute.xlu0 1
      %1171 = vperm.xlu0 %1170, %v919
      %v1172 = vpop.permute.xlu0 %1171
      %v1175 = vsel %vm752, %v917, 0
      %1177 = vmatprep.subr.mxu0 %v1169
      %1178 = vmatpush1.msra.mxu0 %v1168
      %1179 = vmatprep.subr.mxu0 0.0
      %1180 = vmatpush1.msra.mxu0 0.0
      %1181 = vmatprep.subr.mxu0 0.0
      %1182 = vmatpush1.msra.mxu0 0.0
      %1183 = vmatprep.subr.mxu0 0.0
      %1184 = vmatpush1.msra.mxu0 0.0
      %1185 = vmatprep.subr.mxu0 0.0
      %1186 = vmatpush1.msra.mxu0 0.0
      %1187 = vmatprep.subr.mxu0 0.0
      %1188 = vmatpush1.msra.mxu0 0.0
      %1189 = vmatprep.subr.mxu0 0.0
      %1190 = vmatpush1.msra.mxu0 0.0
      %1191 = vmatprep.subr.mxu0 0.0
      %1192 = vmatpush1.msra.mxu0 0.0
      %1193 = vmatprep.subr.mxu0 0.0
      %1194 = vmatpush1.msra.mxu0 0.0
      %1195 = vmatprep.subr.mxu0 0.0
      %1196 = vmatpush1.msra.mxu0 0.0
      %1197 = vmatprep.subr.mxu0 0.0
      %1198 = vmatpush1.msra.mxu0 0.0
      %1199 = vmatprep.subr.mxu0 0.0
      %1200 = vmatpush1.msra.mxu0 0.0
      %1201 = vmatprep.subr.mxu0 0.0
      %1202 = vmatpush1.msra.mxu0 0.0
      %1203 = vmatprep.subr.mxu0 0.0
      %1204 = vmatpush1.msra.mxu0 0.0
      %1205 = vmatprep.subr.mxu0 0.0
      %1206 = vmatpush1.msra.mxu0 0.0
      %1207 = vmatprep.subr.mxu0 0.0
      %1208 = vmatpush1.msra.mxu0 0.0
      %1209 = vmatprep.subr.mxu0 0.0
      %1210 = vmatpush1.msra.mxu0 0.0
      %1211 = vmatprep.subr.mxu0 0.0
      %1212 = vmatpush1.msra.mxu0 0.0
      %1213 = vmatprep.subr.mxu0 0.0
      %1214 = vmatpush1.msra.mxu0 0.0
      %1215 = vmatprep.subr.mxu0 0.0
      %1216 = vmatpush1.msra.mxu0 0.0
      %1217 = vmatprep.subr.mxu0 0.0
      %1218 = vmatpush1.msra.mxu0 0.0
      %1219 = vmatprep.subr.mxu0 0.0
      %1220 = vmatpush1.msra.mxu0 0.0
      %1221 = vmatprep.subr.mxu0 0.0
      %1222 = vmatpush1.msra.mxu0 0.0
      %1223 = vmatprep.subr.mxu0 0.0
      %1224 = vmatpush1.msra.mxu0 0.0
      %1225 = vmatprep.subr.mxu0 0.0
      %1226 = vmatpush1.msra.mxu0 0.0
      %1227 = vmatprep.subr.mxu0 0.0
      %1228 = vmatpush1.msra.mxu0 0.0
      %1229 = vmatprep.subr.mxu0 0.0
      %1230 = vmatpush1.msra.mxu0 0.0
      %1231 = vmatprep.subr.mxu0 0.0
      %1232 = vmatpush1.msra.mxu0 0.0
      %1233 = vmatprep.subr.mxu0 0.0
      %1234 = vmatpush1.msra.mxu0 0.0
      %1235 = vmatprep.subr.mxu0 0.0
      %1236 = vmatpush1.msra.mxu0 0.0
      %1237 = vmatprep.subr.mxu0 0.0
      %1238 = vmatpush1.msra.mxu0 0.0
      %1239 = vmatprep.subr.mxu0 0.0
      %1240 = vmatpush1.msra.mxu0 0.0
      %1241 = vmatprep.mubr.f32.mxu0 0.0
      %1242 = vmatmul.mubr.f32.gmra.mrb[0].mxu0 %v1175
      %v1243 = vpop.f32.mrb[0].mxu0
      %v1244 = vadd.f32 %v1172, %v1243
      %v1245 = vpop.f32.mrb[0].mxu0
      %v1246 = vadd.f32 %v1172, %v1245
      %1247 = vdwg.mxu0
      %v1248 = vmul.f32 %v1244, 0.2
      %v1249 = vmul.f32 %v1246, 0.2
      %v1250 = vmax.f32 %v1244, %v1248
      %v1251 = vmax.f32 %v1246, %v1249
      %1252 = vset.pattern.permute.xlu0 2
      %1253 = vperm.xlu0 %1252, %v919
      %v1254 = vpop.permute.xlu0 %1253
      %v1257 = vsel %vm752, %v918, 0
      %1259 = vmatprep.subr.mxu0 %v1251
      %1260 = vmatpush1.msra.mxu0 %v1250
      %1261 = vmatprep.subr.mxu0 0.0
      %1262 = vmatpush1.msra.mxu0 0.0
      %1263 = vmatprep.subr.mxu0 0.0
      %1264 = vmatpush1.msra.mxu0 0.0
      %1265 = vmatprep.subr.mxu0 0.0
      %1266 = vmatpush1.msra.mxu0 0.0
      %1267 = vmatprep.subr.mxu0 0.0
      %1268 = vmatpush1.msra.mxu0 0.0
      %1269 = vmatprep.subr.mxu0 0.0
      %1270 = vmatpush1.msra.mxu0 0.0
      %1271 = vmatprep.subr.mxu0 0.0
      %1272 = vmatpush1.msra.mxu0 0.0
      %1273 = vmatprep.subr.mxu0 0.0
      %1274 = vmatpush1.msra.mxu0 0.0
      %1275 = vmatprep.subr.mxu0 0.0
      %1276 = vmatpush1.msra.mxu0 0.0
      %1277 = vmatprep.subr.mxu0 0.0
      %1278 = vmatpush1.msra.mxu0 0.0
      %1279 = vmatprep.subr.mxu0 0.0
      %1280 = vmatpush1.msra.mxu0 0.0
      %1281 = vmatprep.subr.mxu0 0.0
      %1282 = vmatpush1.msra.mxu0 0.0
      %1283 = vmatprep.subr.mxu0 0.0
      %1284 = vmatpush1.msra.mxu0 0.0
      %1285 = vmatprep.subr.mxu0 0.0
      %1286 = vmatpush1.msra.mxu0 0.0
      %1287 = vmatprep.subr.mxu0 0.0
      %1288 = vmatpush1.msra.mxu0 0.0
      %1289 = vmatprep.subr.mxu0 0.0
      %1290 = vmatpush1.msra.mxu0 0.0
      %1291 = vmatprep.subr.mxu0 0.0
      %1292 = vmatpush1.msra.mxu0 0.0
      %1293 = vmatprep.subr.mxu0 0.0
      %1294 = vmatpush1.msra.mxu0 0.0
      %1295 = vmatprep.subr.mxu0 0.0
      %1296 = vmatpush1.msra.mxu0 0.0
      %1297 = vmatprep.subr.mxu0 0.0
      %1298 = vmatpush1.msra.mxu0 0.0
      %1299 = vmatprep.subr.mxu0 0.0
      %1300 = vmatpush1.msra.mxu0 0.0
      %1301 = vmatprep.subr.mxu0 0.0
      %1302 = vmatpush1.msra.mxu0 0.0
      %1303 = vmatprep.subr.mxu0 0.0
      %1304 = vmatpush1.msra.mxu0 0.0
      %1305 = vmatprep.subr.mxu0 0.0
      %1306 = vmatpush1.msra.mxu0 0.0
      %1307 = vmatprep.subr.mxu0 0.0
      %1308 = vmatpush1.msra.mxu0 0.0
      %1309 = vmatprep.subr.mxu0 0.0
      %1310 = vmatpush1.msra.mxu0 0.0
      %1311 = vmatprep.subr.mxu0 0.0
      %1312 = vmatpush1.msra.mxu0 0.0
      %1313 = vmatprep.subr.mxu0 0.0
      %1314 = vmatpush1.msra.mxu0 0.0
      %1315 = vmatprep.subr.mxu0 0.0
      %1316 = vmatpush1.msra.mxu0 0.0
      %1317 = vmatprep.subr.mxu0 0.0
      %1318 = vmatpush1.msra.mxu0 0.0
      %1319 = vmatprep.subr.mxu0 0.0
      %1320 = vmatpush1.msra.mxu0 0.0
      %1321 = vmatprep.subr.mxu0 0.0
      %1322 = vmatpush1.msra.mxu0 0.0
      %1323 = vmatprep.mubr.f32.mxu0 0.0
      %1324 = vmatmul.mubr.f32.gmra.mrb[0].mxu0 %v1257
      %v1325 = vpop.f32.mrb[0].mxu0
      %v1326 = vadd.f32 %v1254, %v1325
      %v1327 = vpop.f32.mrb[0].mxu0
      %v1328 = vadd.f32 %v1254, %v1327
      %1329 = vdwg.mxu0
      %v1330 = vadd.f32 %v1084, %v1326
      %v1331 = vadd.f32 %v1086, %v1328
      %s1332 = scalar_lea.vmem %s392, 32
      %1333 = vst [vmem:[%s1332] sm:$0xff] %v1330
      %1334 = vst [vmem:[%s1332 + $0x8] sm:$0xff] %v1331
      %s1335 = scalar_lea.vmem %s387, 80
      %v1336 = vld [vmem:[%s1335] sm:$0xff]
      %v1337 = vld [vmem:[%s1335 + $0x8] sm:$0xff]
      %v1338 = vld [vmem:[%s1335 + $0x10] sm:$0xff]
      %v1339 = vld [vmem:[%s1335 + $0x18] sm:$0xff]
      %v1340 = vld [vmem:[%s1335 + $0x20] sm:$0xff]
      %1341 = vrot.lane.b32.xlu0 %v1330, 126
      %v1342 = vpop.permute.xlu0 %1341
      %1343 = vrot.lane.b32.xlu0 %v1331, 126
      %v1344 = vpop.permute.xlu0 %1343
      %vm1345 = vcmp.lt.s32.totalorder %v494, 126
      %v1346 = vsel %vm1345, %v1342, %v1344
      %v1347 = vsel %vm1345, %v1344, %v1342
      %1348 = vrot.lane.b32.xlu0 %v1330, 2
      %v1349 = vpop.permute.xlu0 %1348
      %1350 = vrot.lane.b32.xlu0 %v1331, 2
      %v1351 = vpop.permute.xlu0 %1350
      %vm1352 = vcmp.lt.s32.totalorder %v494, 2
      %v1353 = vsel %vm1352, %v1349, %v1351
      %v1354 = vsel %vm1352, %v1351, %v1349
      %vm1355 = vcmp.lt.s32.totalorder %v496, 14
      %vm1356 = vcmp.lt.s32.totalorder %v497, 14
      %v1357 = vsel %vm1355, %v1346, 0.0
      %v1358 = vsel %vm1356, %v1347, 0.0
      %vm1359 = vcmp.ge.s32.totalorder %v496, 2
      %vm1360 = vcmp.ge.s32.totalorder %v497, 2
      %v1361 = vsel %vm1359, %v1354, 0.0
      %v1362 = vsel %vm1360, %v1353, 0.0
      %v1363 = vsub.f32 %v1357, %v1361
      %v1364 = vsub.f32 %v1358, %v1362
      %1365 = vrot.lane.b32.xlu0 %v1330, 96
      %v1366 = vpop.permute.xlu0 %1365
      %1367 = vrot.lane.b32.xlu0 %v1331, 96
      %v1368 = vpop.permute.xlu0 %1367
      %vm1369 = vcmp.lt.s32.totalorder %v494, 96
      %v1370 = vsel %vm1369, %v1366, %v1368
      %v1371 = vsel %vm1369, %v1368, %v1366
      %1372 = vrot.lane.b32.xlu0 %v1330, 32
      %v1373 = vpop.permute.xlu0 %1372
      %1374 = vrot.lane.b32.xlu0 %v1331, 32
      %v1375 = vpop.permute.xlu0 %1374
      %vm1376 = vcmp.lt.s32.totalorder %v494, 32
      %v1377 = vsel %vm1376, %v1373, %v1375
      %v1378 = vsel %vm1376, %v1375, %v1373
      %vm1379 = vcmp.lt.s32.totalorder %v494, 224
      %vm1380 = vcmp.lt.s32.totalorder %v495, 224
      %v1381 = vsel %vm1379, %v1370, 0.0
      %v1382 = vsel %vm1380, %v1371, 0.0
      %vm1383 = vcmp.ge.s32.totalorder %v494, 32
      %vm1384 = vcmp.ge.s32.totalorder %v495, 32
      %v1385 = vsel %vm1383, %v1378, 0.0
      %v1386 = vsel %vm1384, %v1377, 0.0
      %v1387 = vsub.f32 %v1381, %v1385
      %v1388 = vsub.f32 %v1382, %v1386
      %v1389 = vadd.f32 %v1330, %v1331
      %1390 = vadd.xlane.f32.xlu0 %v1389
      %v1391 = vpop.xlane.xlu0 %1390
      %v1392 = vadd.f32 %v1363, %v1364
      %1393 = vadd.xlane.f32.xlu0 %v1392
      %v1394 = vpop.xlane.xlu0 %1393
      %v1395 = vadd.f32 %v1387, %v1388
      %1396 = vadd.xlane.f32.xlu0 %v1395
      %v1397 = vpop.xlane.xlu0 %1396
      %v1398 = vmul.f32 %v1391, %v546
      %v1399 = vmul.f32 %v1394, %v546
      %v1400 = vmul.f32 %v1397, %v546
      %v1401 = vsub.f32 %v1330, %v1398
      %v1402 = vsub.f32 %v1331, %v1398
      %v1403 = vsub.f32 %v1363, %v1399
      %v1404 = vsub.f32 %v1364, %v1399
      %v1405 = vsub.f32 %v1387, %v1400
      %v1406 = vsub.f32 %v1388, %v1400
      %v1407 = vmul.f32 %v1401, %v1401
      %v1408 = vmul.f32 %v1402, %v1402
      %v1409 = vmul.f32 %v1403, %v1403
      %v1410 = vmul.f32 %v1404, %v1404
      %v1411 = vmul.f32 %v1405, %v1405
      %v1412 = vmul.f32 %v1406, %v1406
      %v1413 = vadd.f32 %v1407, %v1408
      %1414 = vadd.xlane.f32.xlu0 %v1413
      %v1415 = vpop.xlane.xlu0 %1414
      %v1416 = vadd.f32 %v1409, %v1410
      %1417 = vadd.xlane.f32.xlu0 %v1416
      %v1418 = vpop.xlane.xlu0 %1417
      %v1419 = vadd.f32 %v1411, %v1412
      %1420 = vadd.xlane.f32.xlu0 %v1419
      %v1421 = vpop.xlane.xlu0 %1420
      %v1422 = vmul.f32 %v1415, %v546
      %v1423 = vmul.f32 %v1418, %v546
      %v1424 = vmul.f32 %v1421, %v546
      %v1425 = vadd.f32 %v1422, 1e-05
      %v1426 = vadd.f32 %v1423, 1e-05
      %v1427 = vadd.f32 %v1424, 1e-05
      %v1428 = vrsqrt.pop %v1425
      %v1429 = vrsqrt.pop %v1426
      %v1430 = vrsqrt.pop %v1427
      %v1431 = vmul.f32 %v1401, %v1428
      %v1432 = vmul.f32 %v1402, %v1428
      %v1433 = vmul.f32 %v1403, %v1429
      %v1434 = vmul.f32 %v1404, %v1429
      %v1435 = vmul.f32 %v1405, %v1430
      %v1436 = vmul.f32 %v1406, %v1430
      %1438 = vset.pattern.permute.xlu0 3
      %1439 = vperm.xlu0 %1438, %v1340
      %v1440 = vpop.permute.xlu0 %1439
      %v1443 = vsel %vm591, %v1337, 0
      %1445 = vmatprep.subr.mxu0 %v1432
      %1446 = vmatpush1.msra.mxu0 %v1431
      %1447 = vmatprep.subr.mxu0 %v1434
      %1448 = vmatpush1.msra.mxu0 %v1433
      %1449 = vmatprep.subr.mxu0 %v1436
      %1450 = vmatpush1.msra.mxu0 %v1435
      %1451 = vmatprep.subr.mxu0 0.0
      %1452 = vmatpush1.msra.mxu0 0.0
      %1453 = vmatprep.subr.mxu0 0.0
      %1454 = vmatpush1.msra.mxu0 0.0
      %1455 = vmatprep.subr.mxu0 0.0
      %1456 = vmatpush1.msra.mxu0 0.0
      %1457 = vmatprep.subr.mxu0 0.0
      %1458 = vmatpush1.msra.mxu0 0.0
      %1459 = vmatprep.subr.mxu0 0.0
      %1460 = vmatpush1.msra.mxu0 0.0
      %1461 = vmatprep.subr.mxu0 0.0
      %1462 = vmatpush1.msra.mxu0 0.0
      %1463 = vmatprep.subr.mxu0 0.0
      %1464 = vmatpush1.msra.mxu0 0.0
      %1465 = vmatprep.subr.mxu0 0.0
      %1466 = vmatpush1.msra.mxu0 0.0
      %1467 = vmatprep.subr.mxu0 0.0
      %1468 = vmatpush1.msra.mxu0 0.0
      %1469 = vmatprep.subr.mxu0 0.0
      %1470 = vmatpush1.msra.mxu0 0.0
      %1471 = vmatprep.subr.mxu0 0.0
      %1472 = vmatpush1.msra.mxu0 0.0
      %1473 = vmatprep.subr.mxu0 0.0
      %1474 = vmatpush1.msra.mxu0 0.0
      %1475 = vmatprep.subr.mxu0 0.0
      %1476 = vmatpush1.msra.mxu0 0.0
      %1477 = vmatprep.subr.mxu0 0.0
      %1478 = vmatpush1.msra.mxu0 0.0
      %1479 = vmatprep.subr.mxu0 0.0
      %1480 = vmatpush1.msra.mxu0 0.0
      %1481 = vmatprep.subr.mxu0 0.0
      %1482 = vmatpush1.msra.mxu0 0.0
      %1483 = vmatprep.subr.mxu0 0.0
      %1484 = vmatpush1.msra.mxu0 0.0
      %1485 = vmatprep.subr.mxu0 0.0
      %1486 = vmatpush1.msra.mxu0 0.0
      %1487 = vmatprep.subr.mxu0 0.0
      %1488 = vmatpush1.msra.mxu0 0.0
      %1489 = vmatprep.subr.mxu0 0.0
      %1490 = vmatpush1.msra.mxu0 0.0
      %1491 = vmatprep.subr.mxu0 0.0
      %1492 = vmatpush1.msra.mxu0 0.0
      %1493 = vmatprep.subr.mxu0 0.0
      %1494 = vmatpush1.msra.mxu0 0.0
      %1495 = vmatprep.subr.mxu0 0.0
      %1496 = vmatpush1.msra.mxu0 0.0
      %1497 = vmatprep.subr.mxu0 0.0
      %1498 = vmatpush1.msra.mxu0 0.0
      %1499 = vmatprep.subr.mxu0 0.0
      %1500 = vmatpush1.msra.mxu0 0.0
      %1501 = vmatprep.subr.mxu0 0.0
      %1502 = vmatpush1.msra.mxu0 0.0
      %1503 = vmatprep.subr.mxu0 0.0
      %1504 = vmatpush1.msra.mxu0 0.0
      %1505 = vmatprep.subr.mxu0 0.0
      %1506 = vmatpush1.msra.mxu0 0.0
      %1507 = vmatprep.subr.mxu0 0.0
      %1508 = vmatpush1.msra.mxu0 0.0
      %1509 = vmatprep.mubr.f32.mxu0 0.0
      %1510 = vmatmul.mubr.f32.gmra.mrb[0].mxu0 %v1443
      %v1511 = vpop.f32.mrb[0].mxu0
      %v1512 = vadd.f32 %v1440, %v1511
      %v1513 = vpop.f32.mrb[0].mxu0
      %v1514 = vadd.f32 %v1440, %v1513
      %1515 = vdwg.mxu0
      %1516 = vset.pattern.permute.xlu0 0
      %1517 = vperm.xlu0 %1516, %v1340
      %v1518 = vpop.permute.xlu0 %1517
      %v1521 = vsel %vm591, %v1336, 0
      %1523 = vmatprep.subr.mxu0 %v1432
      %1524 = vmatpush1.msra.mxu0 %v1431
      %1525 = vmatprep.subr.mxu0 %v1434
      %1526 = vmatpush1.msra.mxu0 %v1433
      %1527 = vmatprep.subr.mxu0 %v1436
      %1528 = vmatpush1.msra.mxu0 %v1435
      %1529 = vmatprep.subr.mxu0 0.0
      %1530 = vmatpush1.msra.mxu0 0.0
      %1531 = vmatprep.subr.mxu0 0.0
      %1532 = vmatpush1.msra.mxu0 0.0
      %1533 = vmatprep.subr.mxu0 0.0
      %1534 = vmatpush1.msra.mxu0 0.0
      %1535 = vmatprep.subr.mxu0 0.0
      %1536 = vmatpush1.msra.mxu0 0.0
      %1537 = vmatprep.subr.mxu0 0.0
      %1538 = vmatpush1.msra.mxu0 0.0
      %1539 = vmatprep.subr.mxu0 0.0
      %1540 = vmatpush1.msra.mxu0 0.0
      %1541 = vmatprep.subr.mxu0 0.0
      %1542 = vmatpush1.msra.mxu0 0.0
      %1543 = vmatprep.subr.mxu0 0.0
      %1544 = vmatpush1.msra.mxu0 0.0
      %1545 = vmatprep.subr.mxu0 0.0
      %1546 = vmatpush1.msra.mxu0 0.0
      %1547 = vmatprep.subr.mxu0 0.0
      %1548 = vmatpush1.msra.mxu0 0.0
      %1549 = vmatprep.subr.mxu0 0.0
      %1550 = vmatpush1.msra.mxu0 0.0
      %1551 = vmatprep.subr.mxu0 0.0
      %1552 = vmatpush1.msra.mxu0 0.0
      %1553 = vmatprep.subr.mxu0 0.0
      %1554 = vmatpush1.msra.mxu0 0.0
      %1555 = vmatprep.subr.mxu0 0.0
      %1556 = vmatpush1.msra.mxu0 0.0
      %1557 = vmatprep.subr.mxu0 0.0
      %1558 = vmatpush1.msra.mxu0 0.0
      %1559 = vmatprep.subr.mxu0 0.0
      %1560 = vmatpush1.msra.mxu0 0.0
      %1561 = vmatprep.subr.mxu0 0.0
      %1562 = vmatpush1.msra.mxu0 0.0
      %1563 = vmatprep.subr.mxu0 0.0
      %1564 = vmatpush1.msra.mxu0 0.0
      %1565 = vmatprep.subr.mxu0 0.0
      %1566 = vmatpush1.msra.mxu0 0.0
      %1567 = vmatprep.subr.mxu0 0.0
      %1568 = vmatpush1.msra.mxu0 0.0
      %1569 = vmatprep.subr.mxu0 0.0
      %1570 = vmatpush1.msra.mxu0 0.0
      %1571 = vmatprep.subr.mxu0 0.0
      %1572 = vmatpush1.msra.mxu0 0.0
      %1573 = vmatprep.subr.mxu0 0.0
      %1574 = vmatpush1.msra.mxu0 0.0
      %1575 = vmatprep.subr.mxu0 0.0
      %1576 = vmatpush1.msra.mxu0 0.0
      %1577 = vmatprep.subr.mxu0 0.0
      %1578 = vmatpush1.msra.mxu0 0.0
      %1579 = vmatprep.subr.mxu0 0.0
      %1580 = vmatpush1.msra.mxu0 0.0
      %1581 = vmatprep.subr.mxu0 0.0
      %1582 = vmatpush1.msra.mxu0 0.0
      %1583 = vmatprep.subr.mxu0 0.0
      %1584 = vmatpush1.msra.mxu0 0.0
      %1585 = vmatprep.subr.mxu0 0.0
      %1586 = vmatpush1.msra.mxu0 0.0
      %1587 = vmatprep.mubr.f32.mxu0 0.0
      %1588 = vmatmul.mubr.f32.gmra.mrb[0].mxu0 %v1521
      %v1589 = vpop.f32.mrb[0].mxu0
      %v1590 = vadd.f32 %v1518, %v1589
      %v1591 = vpop.f32.mrb[0].mxu0
      %v1592 = vadd.f32 %v1518, %v1591
      %1593 = vdwg.mxu0
      %v1594 = vmul.f32 %v1590, 0.2
      %v1595 = vmul.f32 %v1592, 0.2
      %v1596 = vmax.f32 %v1590, %v1594
      %v1597 = vmax.f32 %v1592, %v1595
      %1598 = vset.pattern.permute.xlu0 1
      %1599 = vperm.xlu0 %1598, %v1340
      %v1600 = vpop.permute.xlu0 %1599
      %v1603 = vsel %vm752, %v1338, 0
      %1605 = vmatprep.subr.mxu0 %v1597
      %1606 = vmatpush1.msra.mxu0 %v1596
      %1607 = vmatprep.subr.mxu0 0.0
      %1608 = vmatpush1.msra.mxu0 0.0
      %1609 = vmatprep.subr.mxu0 0.0
      %1610 = vmatpush1.msra.mxu0 0.0
      %1611 = vmatprep.subr.mxu0 0.0
      %1612 = vmatpush1.msra.mxu0 0.0
      %1613 = vmatprep.subr.mxu0 0.0
      %1614 = vmatpush1.msra.mxu0 0.0
      %1615 = vmatprep.subr.mxu0 0.0
      %1616 = vmatpush1.msra.mxu0 0.0
      %1617 = vmatprep.subr.mxu0 0.0
      %1618 = vmatpush1.msra.mxu0 0.0
      %1619 = vmatprep.subr.mxu0 0.0
      %1620 = vmatpush1.msra.mxu0 0.0
      %1621 = vmatprep.subr.mxu0 0.0
      %1622 = vmatpush1.msra.mxu0 0.0
      %1623 = vmatprep.subr.mxu0 0.0
      %1624 = vmatpush1.msra.mxu0 0.0
      %1625 = vmatprep.subr.mxu0 0.0
      %1626 = vmatpush1.msra.mxu0 0.0
      %1627 = vmatprep.subr.mxu0 0.0
      %1628 = vmatpush1.msra.mxu0 0.0
      %1629 = vmatprep.subr.mxu0 0.0
      %1630 = vmatpush1.msra.mxu0 0.0
      %1631 = vmatprep.subr.mxu0 0.0
      %1632 = vmatpush1.msra.mxu0 0.0
      %1633 = vmatprep.subr.mxu0 0.0
      %1634 = vmatpush1.msra.mxu0 0.0
      %1635 = vmatprep.subr.mxu0 0.0
      %1636 = vmatpush1.msra.mxu0 0.0
      %1637 = vmatprep.subr.mxu0 0.0
      %1638 = vmatpush1.msra.mxu0 0.0
      %1639 = vmatprep.subr.mxu0 0.0
      %1640 = vmatpush1.msra.mxu0 0.0
      %1641 = vmatprep.subr.mxu0 0.0
      %1642 = vmatpush1.msra.mxu0 0.0
      %1643 = vmatprep.subr.mxu0 0.0
      %1644 = vmatpush1.msra.mxu0 0.0
      %1645 = vmatprep.subr.mxu0 0.0
      %1646 = vmatpush1.msra.mxu0 0.0
      %1647 = vmatprep.subr.mxu0 0.0
      %1648 = vmatpush1.msra.mxu0 0.0
      %1649 = vmatprep.subr.mxu0 0.0
      %1650 = vmatpush1.msra.mxu0 0.0
      %1651 = vmatprep.subr.mxu0 0.0
      %1652 = vmatpush1.msra.mxu0 0.0
      %1653 = vmatprep.subr.mxu0 0.0
      %1654 = vmatpush1.msra.mxu0 0.0
      %1655 = vmatprep.subr.mxu0 0.0
      %1656 = vmatpush1.msra.mxu0 0.0
      %1657 = vmatprep.subr.mxu0 0.0
      %1658 = vmatpush1.msra.mxu0 0.0
      %1659 = vmatprep.subr.mxu0 0.0
      %1660 = vmatpush1.msra.mxu0 0.0
      %1661 = vmatprep.subr.mxu0 0.0
      %1662 = vmatpush1.msra.mxu0 0.0
      %1663 = vmatprep.subr.mxu0 0.0
      %1664 = vmatpush1.msra.mxu0 0.0
      %1665 = vmatprep.subr.mxu0 0.0
      %1666 = vmatpush1.msra.mxu0 0.0
      %1667 = vmatprep.subr.mxu0 0.0
      %1668 = vmatpush1.msra.mxu0 0.0
      %1669 = vmatprep.mubr.f32.mxu0 0.0
      %1670 = vmatmul.mubr.f32.gmra.mrb[0].mxu0 %v1603
      %v1671 = vpop.f32.mrb[0].mxu0
      %v1672 = vadd.f32 %v1600, %v1671
      %v1673 = vpop.f32.mrb[0].mxu0
      %v1674 = vadd.f32 %v1600, %v1673
      %1675 = vdwg.mxu0
      %v1676 = vmul.f32 %v1672, 0.2
      %v1677 = vmul.f32 %v1674, 0.2
      %v1678 = vmax.f32 %v1672, %v1676
      %v1679 = vmax.f32 %v1674, %v1677
      %1680 = vset.pattern.permute.xlu0 2
      %1681 = vperm.xlu0 %1680, %v1340
      %v1682 = vpop.permute.xlu0 %1681
      %v1685 = vsel %vm752, %v1339, 0
      %1687 = vmatprep.subr.mxu0 %v1679
      %1688 = vmatpush1.msra.mxu0 %v1678
      %1689 = vmatprep.subr.mxu0 0.0
      %1690 = vmatpush1.msra.mxu0 0.0
      %1691 = vmatprep.subr.mxu0 0.0
      %1692 = vmatpush1.msra.mxu0 0.0
      %1693 = vmatprep.subr.mxu0 0.0
      %1694 = vmatpush1.msra.mxu0 0.0
      %1695 = vmatprep.subr.mxu0 0.0
      %1696 = vmatpush1.msra.mxu0 0.0
      %1697 = vmatprep.subr.mxu0 0.0
      %1698 = vmatpush1.msra.mxu0 0.0
      %1699 = vmatprep.subr.mxu0 0.0
      %1700 = vmatpush1.msra.mxu0 0.0
      %1701 = vmatprep.subr.mxu0 0.0
      %1702 = vmatpush1.msra.mxu0 0.0
      %1703 = vmatprep.subr.mxu0 0.0
      %1704 = vmatpush1.msra.mxu0 0.0
      %1705 = vmatprep.subr.mxu0 0.0
      %1706 = vmatpush1.msra.mxu0 0.0
      %1707 = vmatprep.subr.mxu0 0.0
      %1708 = vmatpush1.msra.mxu0 0.0
      %1709 = vmatprep.subr.mxu0 0.0
      %1710 = vmatpush1.msra.mxu0 0.0
      %1711 = vmatprep.subr.mxu0 0.0
      %1712 = vmatpush1.msra.mxu0 0.0
      %1713 = vmatprep.subr.mxu0 0.0
      %1714 = vmatpush1.msra.mxu0 0.0
      %1715 = vmatprep.subr.mxu0 0.0
      %1716 = vmatpush1.msra.mxu0 0.0
      %1717 = vmatprep.subr.mxu0 0.0
      %1718 = vmatpush1.msra.mxu0 0.0
      %1719 = vmatprep.subr.mxu0 0.0
      %1720 = vmatpush1.msra.mxu0 0.0
      %1721 = vmatprep.subr.mxu0 0.0
      %1722 = vmatpush1.msra.mxu0 0.0
      %1723 = vmatprep.subr.mxu0 0.0
      %1724 = vmatpush1.msra.mxu0 0.0
      %1725 = vmatprep.subr.mxu0 0.0
      %1726 = vmatpush1.msra.mxu0 0.0
      %1727 = vmatprep.subr.mxu0 0.0
      %1728 = vmatpush1.msra.mxu0 0.0
      %1729 = vmatprep.subr.mxu0 0.0
      %1730 = vmatpush1.msra.mxu0 0.0
      %1731 = vmatprep.subr.mxu0 0.0
      %1732 = vmatpush1.msra.mxu0 0.0
      %1733 = vmatprep.subr.mxu0 0.0
      %1734 = vmatpush1.msra.mxu0 0.0
      %1735 = vmatprep.subr.mxu0 0.0
      %1736 = vmatpush1.msra.mxu0 0.0
      %1737 = vmatprep.subr.mxu0 0.0
      %1738 = vmatpush1.msra.mxu0 0.0
      %1739 = vmatprep.subr.mxu0 0.0
      %1740 = vmatpush1.msra.mxu0 0.0
      %1741 = vmatprep.subr.mxu0 0.0
      %1742 = vmatpush1.msra.mxu0 0.0
      %1743 = vmatprep.subr.mxu0 0.0
      %1744 = vmatpush1.msra.mxu0 0.0
      %1745 = vmatprep.subr.mxu0 0.0
      %1746 = vmatpush1.msra.mxu0 0.0
      %1747 = vmatprep.subr.mxu0 0.0
      %1748 = vmatpush1.msra.mxu0 0.0
      %1749 = vmatprep.subr.mxu0 0.0
      %1750 = vmatpush1.msra.mxu0 0.0
      %1751 = vmatprep.mubr.f32.mxu0 0.0
      %1752 = vmatmul.mubr.f32.gmra.mrb[0].mxu0 %v1685
      %v1753 = vpop.f32.mrb[0].mxu0
      %v1754 = vadd.f32 %v1682, %v1753
      %v1755 = vpop.f32.mrb[0].mxu0
      %v1756 = vadd.f32 %v1682, %v1755
      %1757 = vdwg.mxu0
      %v1758 = vadd.f32 %v1512, %v1754
      %v1759 = vadd.f32 %v1514, %v1756
      %s1760 = scalar_lea.vmem %s392, 48
      %1761 = vst [vmem:[%s1760] sm:$0xff] %v1758
      %1762 = vst [vmem:[%s1760 + $0x8] sm:$0xff] %v1759
      %s1763 = scalar_lea.vmem %s387, 120
      %v1764 = vld [vmem:[%s1763] sm:$0xff]
      %v1765 = vld [vmem:[%s1763 + $0x8] sm:$0xff]
      %v1766 = vld [vmem:[%s1763 + $0x10] sm:$0xff]
      %v1767 = vld [vmem:[%s1763 + $0x18] sm:$0xff]
      %v1768 = vld [vmem:[%s1763 + $0x20] sm:$0xff]
      %1769 = vrot.lane.b32.xlu0 %v1758, 127
      %v1770 = vpop.permute.xlu0 %1769
      %1771 = vrot.lane.b32.xlu0 %v1759, 127
      %v1772 = vpop.permute.xlu0 %1771
      %vm1773 = vcmp.lt.s32.totalorder %v494, 127
      %v1774 = vsel %vm1773, %v1770, %v1772
      %v1775 = vsel %vm1773, %v1772, %v1770
      %1776 = vrot.lane.b32.xlu0 %v1758, 1
      %v1777 = vpop.permute.xlu0 %1776
      %1778 = vrot.lane.b32.xlu0 %v1759, 1
      %v1779 = vpop.permute.xlu0 %1778
      %vm1780 = vcmp.lt.s32.totalorder %v494, 1
      %v1781 = vsel %vm1780, %v1777, %v1779
      %v1782 = vsel %vm1780, %v1779, %v1777
      %vm1783 = vcmp.lt.s32.totalorder %v496, 15
      %vm1784 = vcmp.lt.s32.totalorder %v497, 15
      %v1785 = vsel %vm1783, %v1774, 0.0
      %v1786 = vsel %vm1784, %v1775, 0.0
      %vm1787 = vcmp.ge.s32.totalorder %v496, 1
      %vm1788 = vcmp.ge.s32.totalorder %v497, 1
      %v1789 = vsel %vm1787, %v1782, 0.0
      %v1790 = vsel %vm1788, %v1781, 0.0
      %v1791 = vsub.f32 %v1785, %v1789
      %v1792 = vsub.f32 %v1786, %v1790
      %1793 = vrot.lane.b32.xlu0 %v1758, 112
      %v1794 = vpop.permute.xlu0 %1793
      %1795 = vrot.lane.b32.xlu0 %v1759, 112
      %v1796 = vpop.permute.xlu0 %1795
      %vm1797 = vcmp.lt.s32.totalorder %v494, 112
      %v1798 = vsel %vm1797, %v1794, %v1796
      %v1799 = vsel %vm1797, %v1796, %v1794
      %1800 = vrot.lane.b32.xlu0 %v1758, 16
      %v1801 = vpop.permute.xlu0 %1800
      %1802 = vrot.lane.b32.xlu0 %v1759, 16
      %v1803 = vpop.permute.xlu0 %1802
      %vm1804 = vcmp.lt.s32.totalorder %v494, 16
      %v1805 = vsel %vm1804, %v1801, %v1803
      %v1806 = vsel %vm1804, %v1803, %v1801
      %vm1807 = vcmp.lt.s32.totalorder %v494, 240
      %vm1808 = vcmp.lt.s32.totalorder %v495, 240
      %v1809 = vsel %vm1807, %v1798, 0.0
      %v1810 = vsel %vm1808, %v1799, 0.0
      %vm1811 = vcmp.ge.s32.totalorder %v494, 16
      %vm1812 = vcmp.ge.s32.totalorder %v495, 16
      %v1813 = vsel %vm1811, %v1806, 0.0
      %v1814 = vsel %vm1812, %v1805, 0.0
      %v1815 = vsub.f32 %v1809, %v1813
      %v1816 = vsub.f32 %v1810, %v1814
      %v1817 = vadd.f32 %v1758, %v1759
      %1818 = vadd.xlane.f32.xlu0 %v1817
      %v1819 = vpop.xlane.xlu0 %1818
      %v1820 = vadd.f32 %v1791, %v1792
      %1821 = vadd.xlane.f32.xlu0 %v1820
      %v1822 = vpop.xlane.xlu0 %1821
      %v1823 = vadd.f32 %v1815, %v1816
      %1824 = vadd.xlane.f32.xlu0 %v1823
      %v1825 = vpop.xlane.xlu0 %1824
      %v1826 = vmul.f32 %v1819, %v546
      %v1827 = vmul.f32 %v1822, %v546
      %v1828 = vmul.f32 %v1825, %v546
      %v1829 = vsub.f32 %v1758, %v1826
      %v1830 = vsub.f32 %v1759, %v1826
      %v1831 = vsub.f32 %v1791, %v1827
      %v1832 = vsub.f32 %v1792, %v1827
      %v1833 = vsub.f32 %v1815, %v1828
      %v1834 = vsub.f32 %v1816, %v1828
      %v1835 = vmul.f32 %v1829, %v1829
      %v1836 = vmul.f32 %v1830, %v1830
      %v1837 = vmul.f32 %v1831, %v1831
      %v1838 = vmul.f32 %v1832, %v1832
      %v1839 = vmul.f32 %v1833, %v1833
      %v1840 = vmul.f32 %v1834, %v1834
      %v1841 = vadd.f32 %v1835, %v1836
      %1842 = vadd.xlane.f32.xlu0 %v1841
      %v1843 = vpop.xlane.xlu0 %1842
      %v1844 = vadd.f32 %v1837, %v1838
      %1845 = vadd.xlane.f32.xlu0 %v1844
      %v1846 = vpop.xlane.xlu0 %1845
      %v1847 = vadd.f32 %v1839, %v1840
      %1848 = vadd.xlane.f32.xlu0 %v1847
      %v1849 = vpop.xlane.xlu0 %1848
      %v1850 = vmul.f32 %v1843, %v546
      %v1851 = vmul.f32 %v1846, %v546
      %v1852 = vmul.f32 %v1849, %v546
      %v1853 = vadd.f32 %v1850, 1e-05
      %v1854 = vadd.f32 %v1851, 1e-05
      %v1855 = vadd.f32 %v1852, 1e-05
      %v1856 = vrsqrt.pop %v1853
      %v1857 = vrsqrt.pop %v1854
      %v1858 = vrsqrt.pop %v1855
      %v1859 = vmul.f32 %v1829, %v1856
      %v1860 = vmul.f32 %v1830, %v1856
      %v1861 = vmul.f32 %v1831, %v1857
      %v1862 = vmul.f32 %v1832, %v1857
      %v1863 = vmul.f32 %v1833, %v1858
      %v1864 = vmul.f32 %v1834, %v1858
      %1866 = vset.pattern.permute.xlu0 3
      %1867 = vperm.xlu0 %1866, %v1768
      %v1868 = vpop.permute.xlu0 %1867
      %v1871 = vsel %vm591, %v1765, 0
      %1873 = vmatprep.subr.mxu0 %v1860
      %1874 = vmatpush1.msra.mxu0 %v1859
      %1875 = vmatprep.subr.mxu0 %v1862
      %1876 = vmatpush1.msra.mxu0 %v1861
      %1877 = vmatprep.subr.mxu0 %v1864
      %1878 = vmatpush1.msra.mxu0 %v1863
      %1879 = vmatprep.subr.mxu0 0.0
      %1880 = vmatpush1.msra.mxu0 0.0
      %1881 = vmatprep.subr.mxu0 0.0
      %1882 = vmatpush1.msra.mxu0 0.0
      %1883 = vmatprep.subr.mxu0 0.0
      %1884 = vmatpush1.msra.mxu0 0.0
      %1885 = vmatprep.subr.mxu0 0.0
      %1886 = vmatpush1.msra.mxu0 0.0
      %1887 = vmatprep.subr.mxu0 0.0
      %1888 = vmatpush1.msra.mxu0 0.0
      %1889 = vmatprep.subr.mxu0 0.0
      %1890 = vmatpush1.msra.mxu0 0.0
      %1891 = vmatprep.subr.mxu0 0.0
      %1892 = vmatpush1.msra.mxu0 0.0
      %1893 = vmatprep.subr.mxu0 0.0
      %1894 = vmatpush1.msra.mxu0 0.0
      %1895 = vmatprep.subr.mxu0 0.0
      %1896 = vmatpush1.msra.mxu0 0.0
      %1897 = vmatprep.subr.mxu0 0.0
      %1898 = vmatpush1.msra.mxu0 0.0
      %1899 = vmatprep.subr.mxu0 0.0
      %1900 = vmatpush1.msra.mxu0 0.0
      %1901 = vmatprep.subr.mxu0 0.0
      %1902 = vmatpush1.msra.mxu0 0.0
      %1903 = vmatprep.subr.mxu0 0.0
      %1904 = vmatpush1.msra.mxu0 0.0
      %1905 = vmatprep.subr.mxu0 0.0
      %1906 = vmatpush1.msra.mxu0 0.0
      %1907 = vmatprep.subr.mxu0 0.0
      %1908 = vmatpush1.msra.mxu0 0.0
      %1909 = vmatprep.subr.mxu0 0.0
      %1910 = vmatpush1.msra.mxu0 0.0
      %1911 = vmatprep.subr.mxu0 0.0
      %1912 = vmatpush1.msra.mxu0 0.0
      %1913 = vmatprep.subr.mxu0 0.0
      %1914 = vmatpush1.msra.mxu0 0.0
      %1915 = vmatprep.subr.mxu0 0.0
      %1916 = vmatpush1.msra.mxu0 0.0
      %1917 = vmatprep.subr.mxu0 0.0
      %1918 = vmatpush1.msra.mxu0 0.0
      %1919 = vmatprep.subr.mxu0 0.0
      %1920 = vmatpush1.msra.mxu0 0.0
      %1921 = vmatprep.subr.mxu0 0.0
      %1922 = vmatpush1.msra.mxu0 0.0
      %1923 = vmatprep.subr.mxu0 0.0
      %1924 = vmatpush1.msra.mxu0 0.0
      %1925 = vmatprep.subr.mxu0 0.0
      %1926 = vmatpush1.msra.mxu0 0.0
      %1927 = vmatprep.subr.mxu0 0.0
      %1928 = vmatpush1.msra.mxu0 0.0
      %1929 = vmatprep.subr.mxu0 0.0
      %1930 = vmatpush1.msra.mxu0 0.0
      %1931 = vmatprep.subr.mxu0 0.0
      %1932 = vmatpush1.msra.mxu0 0.0
      %1933 = vmatprep.subr.mxu0 0.0
      %1934 = vmatpush1.msra.mxu0 0.0
      %1935 = vmatprep.subr.mxu0 0.0
      %1936 = vmatpush1.msra.mxu0 0.0
      %1937 = vmatprep.mubr.f32.mxu0 0.0
      %1938 = vmatmul.mubr.f32.gmra.mrb[0].mxu0 %v1871
      %v1939 = vpop.f32.mrb[0].mxu0
      %v1940 = vadd.f32 %v1868, %v1939
      %v1941 = vpop.f32.mrb[0].mxu0
      %v1942 = vadd.f32 %v1868, %v1941
      %1943 = vdwg.mxu0
      %1944 = vset.pattern.permute.xlu0 0
      %1945 = vperm.xlu0 %1944, %v1768
      %v1946 = vpop.permute.xlu0 %1945
      %v1949 = vsel %vm591, %v1764, 0
      %1951 = vmatprep.subr.mxu0 %v1860
      %1952 = vmatpush1.msra.mxu0 %v1859
      %1953 = vmatprep.subr.mxu0 %v1862
      %1954 = vmatpush1.msra.mxu0 %v1861
      %1955 = vmatprep.subr.mxu0 %v1864
      %1956 = vmatpush1.msra.mxu0 %v1863
      %1957 = vmatprep.subr.mxu0 0.0
      %1958 = vmatpush1.msra.mxu0 0.0
      %1959 = vmatprep.subr.mxu0 0.0
      %1960 = vmatpush1.msra.mxu0 0.0
      %1961 = vmatprep.subr.mxu0 0.0
      %1962 = vmatpush1.msra.mxu0 0.0
      %1963 = vmatprep.subr.mxu0 0.0
      %1964 = vmatpush1.msra.mxu0 0.0
      %1965 = vmatprep.subr.mxu0 0.0
      %1966 = vmatpush1.msra.mxu0 0.0
      %1967 = vmatprep.subr.mxu0 0.0
      %1968 = vmatpush1.msra.mxu0 0.0
      %1969 = vmatprep.subr.mxu0 0.0
      %1970 = vmatpush1.msra.mxu0 0.0
      %1971 = vmatprep.subr.mxu0 0.0
      %1972 = vmatpush1.msra.mxu0 0.0
      %1973 = vmatprep.subr.mxu0 0.0
      %1974 = vmatpush1.msra.mxu0 0.0
      %1975 = vmatprep.subr.mxu0 0.0
      %1976 = vmatpush1.msra.mxu0 0.0
      %1977 = vmatprep.subr.mxu0 0.0
      %1978 = vmatpush1.msra.mxu0 0.0
      %1979 = vmatprep.subr.mxu0 0.0
      %1980 = vmatpush1.msra.mxu0 0.0
      %1981 = vmatprep.subr.mxu0 0.0
      %1982 = vmatpush1.msra.mxu0 0.0
      %1983 = vmatprep.subr.mxu0 0.0
      %1984 = vmatpush1.msra.mxu0 0.0
      %1985 = vmatprep.subr.mxu0 0.0
      %1986 = vmatpush1.msra.mxu0 0.0
      %1987 = vmatprep.subr.mxu0 0.0
      %1988 = vmatpush1.msra.mxu0 0.0
      %1989 = vmatprep.subr.mxu0 0.0
      %1990 = vmatpush1.msra.mxu0 0.0
      %1991 = vmatprep.subr.mxu0 0.0
      %1992 = vmatpush1.msra.mxu0 0.0
      %1993 = vmatprep.subr.mxu0 0.0
      %1994 = vmatpush1.msra.mxu0 0.0
      %1995 = vmatprep.subr.mxu0 0.0
      %1996 = vmatpush1.msra.mxu0 0.0
      %1997 = vmatprep.subr.mxu0 0.0
      %1998 = vmatpush1.msra.mxu0 0.0
      %1999 = vmatprep.subr.mxu0 0.0
      %2000 = vmatpush1.msra.mxu0 0.0
      %2001 = vmatprep.subr.mxu0 0.0
      %2002 = vmatpush1.msra.mxu0 0.0
      %2003 = vmatprep.subr.mxu0 0.0
      %2004 = vmatpush1.msra.mxu0 0.0
      %2005 = vmatprep.subr.mxu0 0.0
      %2006 = vmatpush1.msra.mxu0 0.0
      %2007 = vmatprep.subr.mxu0 0.0
      %2008 = vmatpush1.msra.mxu0 0.0
      %2009 = vmatprep.subr.mxu0 0.0
      %2010 = vmatpush1.msra.mxu0 0.0
      %2011 = vmatprep.subr.mxu0 0.0
      %2012 = vmatpush1.msra.mxu0 0.0
      %2013 = vmatprep.subr.mxu0 0.0
      %2014 = vmatpush1.msra.mxu0 0.0
      %2015 = vmatprep.mubr.f32.mxu0 0.0
      %2016 = vmatmul.mubr.f32.gmra.mrb[0].mxu0 %v1949
      %v2017 = vpop.f32.mrb[0].mxu0
      %v2018 = vadd.f32 %v1946, %v2017
      %v2019 = vpop.f32.mrb[0].mxu0
      %v2020 = vadd.f32 %v1946, %v2019
      %2021 = vdwg.mxu0
      %v2022 = vmul.f32 %v2018, 0.2
      %v2023 = vmul.f32 %v2020, 0.2
      %v2024 = vmax.f32 %v2018, %v2022
      %v2025 = vmax.f32 %v2020, %v2023
      %2026 = vset.pattern.permute.xlu0 1
      %2027 = vperm.xlu0 %2026, %v1768
      %v2028 = vpop.permute.xlu0 %2027
      %v2031 = vsel %vm752, %v1766, 0
      %2033 = vmatprep.subr.mxu0 %v2025
      %2034 = vmatpush1.msra.mxu0 %v2024
      %2035 = vmatprep.subr.mxu0 0.0
      %2036 = vmatpush1.msra.mxu0 0.0
      %2037 = vmatprep.subr.mxu0 0.0
      %2038 = vmatpush1.msra.mxu0 0.0
      %2039 = vmatprep.subr.mxu0 0.0
      %2040 = vmatpush1.msra.mxu0 0.0
      %2041 = vmatprep.subr.mxu0 0.0
      %2042 = vmatpush1.msra.mxu0 0.0
      %2043 = vmatprep.subr.mxu0 0.0
      %2044 = vmatpush1.msra.mxu0 0.0
      %2045 = vmatprep.subr.mxu0 0.0
      %2046 = vmatpush1.msra.mxu0 0.0
      %2047 = vmatprep.subr.mxu0 0.0
      %2048 = vmatpush1.msra.mxu0 0.0
      %2049 = vmatprep.subr.mxu0 0.0
      %2050 = vmatpush1.msra.mxu0 0.0
      %2051 = vmatprep.subr.mxu0 0.0
      %2052 = vmatpush1.msra.mxu0 0.0
      %2053 = vmatprep.subr.mxu0 0.0
      %2054 = vmatpush1.msra.mxu0 0.0
      %2055 = vmatprep.subr.mxu0 0.0
      %2056 = vmatpush1.msra.mxu0 0.0
      %2057 = vmatprep.subr.mxu0 0.0
      %2058 = vmatpush1.msra.mxu0 0.0
      %2059 = vmatprep.subr.mxu0 0.0
      %2060 = vmatpush1.msra.mxu0 0.0
      %2061 = vmatprep.subr.mxu0 0.0
      %2062 = vmatpush1.msra.mxu0 0.0
      %2063 = vmatprep.subr.mxu0 0.0
      %2064 = vmatpush1.msra.mxu0 0.0
      %2065 = vmatprep.subr.mxu0 0.0
      %2066 = vmatpush1.msra.mxu0 0.0
      %2067 = vmatprep.subr.mxu0 0.0
      %2068 = vmatpush1.msra.mxu0 0.0
      %2069 = vmatprep.subr.mxu0 0.0
      %2070 = vmatpush1.msra.mxu0 0.0
      %2071 = vmatprep.subr.mxu0 0.0
      %2072 = vmatpush1.msra.mxu0 0.0
      %2073 = vmatprep.subr.mxu0 0.0
      %2074 = vmatpush1.msra.mxu0 0.0
      %2075 = vmatprep.subr.mxu0 0.0
      %2076 = vmatpush1.msra.mxu0 0.0
      %2077 = vmatprep.subr.mxu0 0.0
      %2078 = vmatpush1.msra.mxu0 0.0
      %2079 = vmatprep.subr.mxu0 0.0
      %2080 = vmatpush1.msra.mxu0 0.0
      %2081 = vmatprep.subr.mxu0 0.0
      %2082 = vmatpush1.msra.mxu0 0.0
      %2083 = vmatprep.subr.mxu0 0.0
      %2084 = vmatpush1.msra.mxu0 0.0
      %2085 = vmatprep.subr.mxu0 0.0
      %2086 = vmatpush1.msra.mxu0 0.0
      %2087 = vmatprep.subr.mxu0 0.0
      %2088 = vmatpush1.msra.mxu0 0.0
      %2089 = vmatprep.subr.mxu0 0.0
      %2090 = vmatpush1.msra.mxu0 0.0
      %2091 = vmatprep.subr.mxu0 0.0
      %2092 = vmatpush1.msra.mxu0 0.0
      %2093 = vmatprep.subr.mxu0 0.0
      %2094 = vmatpush1.msra.mxu0 0.0
      %2095 = vmatprep.subr.mxu0 0.0
      %2096 = vmatpush1.msra.mxu0 0.0
      %2097 = vmatprep.mubr.f32.mxu0 0.0
      %2098 = vmatmul.mubr.f32.gmra.mrb[0].mxu0 %v2031
      %v2099 = vpop.f32.mrb[0].mxu0
      %v2100 = vadd.f32 %v2028, %v2099
      %v2101 = vpop.f32.mrb[0].mxu0
      %v2102 = vadd.f32 %v2028, %v2101
      %2103 = vdwg.mxu0
      %v2104 = vmul.f32 %v2100, 0.2
      %v2105 = vmul.f32 %v2102, 0.2
      %v2106 = vmax.f32 %v2100, %v2104
      %v2107 = vmax.f32 %v2102, %v2105
      %2108 = vset.pattern.permute.xlu0 2
      %2109 = vperm.xlu0 %2108, %v1768
      %v2110 = vpop.permute.xlu0 %2109
      %v2113 = vsel %vm752, %v1767, 0
      %2115 = vmatprep.subr.mxu0 %v2107
      %2116 = vmatpush1.msra.mxu0 %v2106
      %2117 = vmatprep.subr.mxu0 0.0
      %2118 = vmatpush1.msra.mxu0 0.0
      %2119 = vmatprep.subr.mxu0 0.0
      %2120 = vmatpush1.msra.mxu0 0.0
      %2121 = vmatprep.subr.mxu0 0.0
      %2122 = vmatpush1.msra.mxu0 0.0
      %2123 = vmatprep.subr.mxu0 0.0
      %2124 = vmatpush1.msra.mxu0 0.0
      %2125 = vmatprep.subr.mxu0 0.0
      %2126 = vmatpush1.msra.mxu0 0.0
      %2127 = vmatprep.subr.mxu0 0.0
      %2128 = vmatpush1.msra.mxu0 0.0
      %2129 = vmatprep.subr.mxu0 0.0
      %2130 = vmatpush1.msra.mxu0 0.0
      %2131 = vmatprep.subr.mxu0 0.0
      %2132 = vmatpush1.msra.mxu0 0.0
      %2133 = vmatprep.subr.mxu0 0.0
      %2134 = vmatpush1.msra.mxu0 0.0
      %2135 = vmatprep.subr.mxu0 0.0
      %2136 = vmatpush1.msra.mxu0 0.0
      %2137 = vmatprep.subr.mxu0 0.0
      %2138 = vmatpush1.msra.mxu0 0.0
      %2139 = vmatprep.subr.mxu0 0.0
      %2140 = vmatpush1.msra.mxu0 0.0
      %2141 = vmatprep.subr.mxu0 0.0
      %2142 = vmatpush1.msra.mxu0 0.0
      %2143 = vmatprep.subr.mxu0 0.0
      %2144 = vmatpush1.msra.mxu0 0.0
      %2145 = vmatprep.subr.mxu0 0.0
      %2146 = vmatpush1.msra.mxu0 0.0
      %2147 = vmatprep.subr.mxu0 0.0
      %2148 = vmatpush1.msra.mxu0 0.0
      %2149 = vmatprep.subr.mxu0 0.0
      %2150 = vmatpush1.msra.mxu0 0.0
      %2151 = vmatprep.subr.mxu0 0.0
      %2152 = vmatpush1.msra.mxu0 0.0
      %2153 = vmatprep.subr.mxu0 0.0
      %2154 = vmatpush1.msra.mxu0 0.0
      %2155 = vmatprep.subr.mxu0 0.0
      %2156 = vmatpush1.msra.mxu0 0.0
      %2157 = vmatprep.subr.mxu0 0.0
      %2158 = vmatpush1.msra.mxu0 0.0
      %2159 = vmatprep.subr.mxu0 0.0
      %2160 = vmatpush1.msra.mxu0 0.0
      %2161 = vmatprep.subr.mxu0 0.0
      %2162 = vmatpush1.msra.mxu0 0.0
      %2163 = vmatprep.subr.mxu0 0.0
      %2164 = vmatpush1.msra.mxu0 0.0
      %2165 = vmatprep.subr.mxu0 0.0
      %2166 = vmatpush1.msra.mxu0 0.0
      %2167 = vmatprep.subr.mxu0 0.0
      %2168 = vmatpush1.msra.mxu0 0.0
      %2169 = vmatprep.subr.mxu0 0.0
      %2170 = vmatpush1.msra.mxu0 0.0
      %2171 = vmatprep.subr.mxu0 0.0
      %2172 = vmatpush1.msra.mxu0 0.0
      %2173 = vmatprep.subr.mxu0 0.0
      %2174 = vmatpush1.msra.mxu0 0.0
      %2175 = vmatprep.subr.mxu0 0.0
      %2176 = vmatpush1.msra.mxu0 0.0
      %2177 = vmatprep.subr.mxu0 0.0
      %2178 = vmatpush1.msra.mxu0 0.0
      %2179 = vmatprep.mubr.f32.mxu0 0.0
      %2180 = vmatmul.mubr.f32.gmra.mrb[0].mxu0 %v2113
      %v2181 = vpop.f32.mrb[0].mxu0
      %v2182 = vadd.f32 %v2110, %v2181
      %v2183 = vpop.f32.mrb[0].mxu0
      %v2184 = vadd.f32 %v2110, %v2183
      %2185 = vdwg.mxu0
      %v2186 = vadd.f32 %v1940, %v2182
      %v2187 = vadd.f32 %v1942, %v2184
      %s2188 = scalar_lea.vmem %s392, 64
      %2189 = vst [vmem:[%s2188] sm:$0xff] %v2186
      %2190 = vst [vmem:[%s2188 + $0x8] sm:$0xff] %v2187
      %v2191 = vld [vmem:[%s4] sm:$0xff]
      %v2192 = vld [vmem:[%s4 + $0x8] sm:$0xff]
      %v2193 = vld [vmem:[%s4 + $0x10] sm:$0xff]
      %v2194 = vld [vmem:[%s4 + $0x18] sm:$0x1]
      %v2195 = vld [vmem:[%s5] sm:$0xff]
      %v2196 = vld [vmem:[%s5 + $0x8] sm:$0xff]
      %v2197 = vld [vmem:[%s5 + $0x10] sm:$0xff]
      %v2198 = vld [vmem:[%s5 + $0x18] sm:$0x1]
      %2200 = vset.pattern.permute.xlu0 0
      %2201 = vperm.xlu0 %2200, %v2195
      %v2202 = vpop.permute.xlu0 %2201
      %2205 = vset.pattern.permute.xlu0 0
      %2206 = vperm.xlu0 %2205, %v2196
      %v2207 = vpop.permute.xlu0 %2206
      %2210 = vset.pattern.permute.xlu0 0
      %2211 = vperm.xlu0 %2210, %v2197
      %v2212 = vpop.permute.xlu0 %2211
      %2215 = vset.pattern.permute.xlu0 0
      %2216 = vperm.xlu0 %2215, %v2198
      %v2217 = vpop.permute.xlu0 %2216
      %v2220 = vsel %vm752, %v2191, 0
      %v2223 = vsel %vm752, %v2192, 0
      %v2226 = vsel %vm752, %v2193, 0
      %v2229 = vsel %vm752, %v2194, 0
      %2231 = vmatprep.subr.mxu0 %v2187
      %2232 = vmatpush1.msra.mxu0 %v2186
      %2233 = vmatprep.subr.mxu0 0.0
      %2234 = vmatpush1.msra.mxu0 0.0
      %2235 = vmatprep.subr.mxu0 0.0
      %2236 = vmatpush1.msra.mxu0 0.0
      %2237 = vmatprep.subr.mxu0 0.0
      %2238 = vmatpush1.msra.mxu0 0.0
      %2239 = vmatprep.subr.mxu0 0.0
      %2240 = vmatpush1.msra.mxu0 0.0
      %2241 = vmatprep.subr.mxu0 0.0
      %2242 = vmatpush1.msra.mxu0 0.0
      %2243 = vmatprep.subr.mxu0 0.0
      %2244 = vmatpush1.msra.mxu0 0.0
      %2245 = vmatprep.subr.mxu0 0.0
      %2246 = vmatpush1.msra.mxu0 0.0
      %2247 = vmatprep.subr.mxu0 0.0
      %2248 = vmatpush1.msra.mxu0 0.0
      %2249 = vmatprep.subr.mxu0 0.0
      %2250 = vmatpush1.msra.mxu0 0.0
      %2251 = vmatprep.subr.mxu0 0.0
      %2252 = vmatpush1.msra.mxu0 0.0
      %2253 = vmatprep.subr.mxu0 0.0
      %2254 = vmatpush1.msra.mxu0 0.0
      %2255 = vmatprep.subr.mxu0 0.0
      %2256 = vmatpush1.msra.mxu0 0.0
      %2257 = vmatprep.subr.mxu0 0.0
      %2258 = vmatpush1.msra.mxu0 0.0
      %2259 = vmatprep.subr.mxu0 0.0
      %2260 = vmatpush1.msra.mxu0 0.0
      %2261 = vmatprep.subr.mxu0 0.0
      %2262 = vmatpush1.msra.mxu0 0.0
      %2263 = vmatprep.subr.mxu0 0.0
      %2264 = vmatpush1.msra.mxu0 0.0
      %2265 = vmatprep.subr.mxu0 0.0
      %2266 = vmatpush1.msra.mxu0 0.0
      %2267 = vmatprep.subr.mxu0 0.0
      %2268 = vmatpush1.msra.mxu0 0.0
      %2269 = vmatprep.subr.mxu0 0.0
      %2270 = vmatpush1.msra.mxu0 0.0
      %2271 = vmatprep.subr.mxu0 0.0
      %2272 = vmatpush1.msra.mxu0 0.0
      %2273 = vmatprep.subr.mxu0 0.0
      %2274 = vmatpush1.msra.mxu0 0.0
      %2275 = vmatprep.subr.mxu0 0.0
      %2276 = vmatpush1.msra.mxu0 0.0
      %2277 = vmatprep.subr.mxu0 0.0
      %2278 = vmatpush1.msra.mxu0 0.0
      %2279 = vmatprep.subr.mxu0 0.0
      %2280 = vmatpush1.msra.mxu0 0.0
      %2281 = vmatprep.subr.mxu0 0.0
      %2282 = vmatpush1.msra.mxu0 0.0
      %2283 = vmatprep.subr.mxu0 0.0
      %2284 = vmatpush1.msra.mxu0 0.0
      %2285 = vmatprep.subr.mxu0 0.0
      %2286 = vmatpush1.msra.mxu0 0.0
      %2287 = vmatprep.subr.mxu0 0.0
      %2288 = vmatpush1.msra.mxu0 0.0
      %2289 = vmatprep.subr.mxu0 0.0
      %2290 = vmatpush1.msra.mxu0 0.0
      %2291 = vmatprep.subr.mxu0 0.0
      %2292 = vmatpush1.msra.mxu0 0.0
      %2293 = vmatprep.subr.mxu0 0.0
      %2294 = vmatpush1.msra.mxu0 0.0
      %2295 = vmatprep.mubr.f32.mxu0 0.0
      %2296 = vmatmul.mubr.f32.gmra.mrb[0].mxu0 %v2220
      %v2297 = vpop.f32.mrb[0].mxu0
      %v2298 = vadd.f32 %v2202, %v2297
      %v2299 = vpop.f32.mrb[0].mxu0
      %v2300 = vadd.f32 %v2202, %v2299
      %2301 = vmatprep.mubr.f32.mxu0 0.0
      %2302 = vmatmul.mubr.f32.gmra.mrb[0].mxu0 %v2223
      %v2303 = vpop.f32.mrb[0].mxu0
      %v2304 = vadd.f32 %v2207, %v2303
      %v2305 = vpop.f32.mrb[0].mxu0
      %v2306 = vadd.f32 %v2207, %v2305
      %2307 = vmatprep.mubr.f32.mxu0 0.0
      %2308 = vmatmul.mubr.f32.gmra.mrb[0].mxu0 %v2226
      %v2309 = vpop.f32.mrb[0].mxu0
      %v2310 = vadd.f32 %v2212, %v2309
      %v2311 = vpop.f32.mrb[0].mxu0
      %v2312 = vadd.f32 %v2212, %v2311
      %2313 = vmatprep.mubr.f32.mxu0 0.0
      %2314 = vmatmul.mubr.f32.gmra.mrb[0].mxu0 %v2229
      %v2315 = vpop.f32.mrb[0].mxu0
      %v2316 = vadd.f32 %v2217, %v2315
      %v2317 = vpop.f32.mrb[0].mxu0
      %v2318 = vadd.f32 %v2217, %v2317
      %2319 = vdwg.mxu0
      %v2320 = vadd.f32 %v2298, %v2300
      %2321 = vadd.xlane.f32.xlu0 %v2320
      %v2322 = vpop.xlane.xlu0 %2321
      %v2323 = vmul.f32 %v2322, %v546
      %vm2324 = vcmask 7168
      %2325 = vst.msk [vmem:[%s396] sm:$0xff] %vm2324, %v2323
      %v2326 = vld [vmem:[%s6] sm:$0xff]
      %v2327 = vld [vmem:[%s6 + $0x8] sm:$0xff]
      %v2328 = vld [vmem:[%s6 + $0x10] sm:$0xff]
      %v2329 = vld [vmem:[%s6 + $0x18] sm:$0xff]
      %v2330 = vld [vmem:[%s6 + $0x20] sm:$0xff]
      %v2331 = vld [vmem:[%s6 + $0x28] sm:$0xff]
      %v2332 = vld [vmem:[%s6 + $0x30] sm:$0xff]
      %v2333 = vld [vmem:[%s6 + $0x38] sm:$0xff]
      %v2334 = vld [vmem:[%s6 + $0x40] sm:$0xff]
      %v2335 = vld [vmem:[%s6 + $0x48] sm:$0xff]
      %v2336 = vld [vmem:[%s6 + $0x50] sm:$0xff]
      %v2337 = vld [vmem:[%s6 + $0x58] sm:$0xff]
      %v2338 = vld [vmem:[%s6 + $0x60] sm:$0xff]
      %v2339 = vld [vmem:[%s6 + $0x68] sm:$0xff]
      %v2340 = vld [vmem:[%s6 + $0x70] sm:$0xff]
      %v2341 = vld [vmem:[%s6 + $0x78] sm:$0xff]
      %v2342 = vld [vmem:[%s6 + $0x80] sm:$0xff]
      %v2343 = vld [vmem:[%s6 + $0x88] sm:$0xff]
      %v2344 = vld [vmem:[%s6 + $0x90] sm:$0xff]
      %v2345 = vld [vmem:[%s6 + $0x98] sm:$0xff]
      %v2346 = vld [vmem:[%s6 + $0xa0] sm:$0xff]
      %v2347 = vld [vmem:[%s6 + $0xa8] sm:$0xff]
      %v2348 = vld [vmem:[%s6 + $0xb0] sm:$0xff]
      %v2349 = vld [vmem:[%s6 + $0xb8] sm:$0xff]
      %v2350 = vld [vmem:[%s6 + $0xc0] sm:$0xff]
      %v2351 = vld [vmem:[%s6 + $0xc8] sm:$0xff]
      %v2352 = vld [vmem:[%s6 + $0xd0] sm:$0xff]
      %v2353 = vld [vmem:[%s6 + $0xd8] sm:$0xff]
      %v2354 = vld [vmem:[%s6 + $0xe0] sm:$0xff]
      %v2355 = vld [vmem:[%s6 + $0xe8] sm:$0xff]
      %v2356 = vld [vmem:[%s6 + $0xf0] sm:$0xff]
      %v2357 = vld [vmem:[%s6 + $0xf8] sm:$0xff]
      %2358 = vmatprep.subr.mxu0 0.0
      %2359 = vmatpush1.msra.mxu0 %v2326
      %2360 = vmatprep.subr.mxu0 0.0
      %2361 = vmatpush1.msra.mxu0 %v2327
      %2362 = vmatprep.subr.mxu0 0.0
      %2363 = vmatpush1.msra.mxu0 %v2328
      %2364 = vmatprep.subr.mxu0 0.0
      %2365 = vmatpush1.msra.mxu0 %v2329
      %2366 = vmatprep.subr.mxu0 0.0
      %2367 = vmatpush1.msra.mxu0 %v2330
      %2368 = vmatprep.subr.mxu0 0.0
      %2369 = vmatpush1.msra.mxu0 %v2331
      %2370 = vmatprep.subr.mxu0 0.0
      %2371 = vmatpush1.msra.mxu0 %v2332
      %2372 = vmatprep.subr.mxu0 0.0
      %2373 = vmatpush1.msra.mxu0 %v2333
      %2374 = vmatprep.subr.mxu0 0.0
      %2375 = vmatpush1.msra.mxu0 %v2334
      %2376 = vmatprep.subr.mxu0 0.0
      %2377 = vmatpush1.msra.mxu0 %v2335
      %2378 = vmatprep.subr.mxu0 0.0
      %2379 = vmatpush1.msra.mxu0 %v2336
      %2380 = vmatprep.subr.mxu0 0.0
      %2381 = vmatpush1.msra.mxu0 %v2337
      %2382 = vmatprep.subr.mxu0 0.0
      %2383 = vmatpush1.msra.mxu0 %v2338
      %2384 = vmatprep.subr.mxu0 0.0
      %2385 = vmatpush1.msra.mxu0 %v2339
      %2386 = vmatprep.subr.mxu0 0.0
      %2387 = vmatpush1.msra.mxu0 %v2340
      %2388 = vmatprep.subr.mxu0 0.0
      %2389 = vmatpush1.msra.mxu0 %v2341
      %2390 = vmatprep.subr.mxu0 0.0
      %2391 = vmatpush1.msra.mxu0 %v2342
      %2392 = vmatprep.subr.mxu0 0.0
      %2393 = vmatpush1.msra.mxu0 %v2343
      %2394 = vmatprep.subr.mxu0 0.0
      %2395 = vmatpush1.msra.mxu0 %v2344
      %2396 = vmatprep.subr.mxu0 0.0
      %2397 = vmatpush1.msra.mxu0 %v2345
      %2398 = vmatprep.subr.mxu0 0.0
      %2399 = vmatpush1.msra.mxu0 %v2346
      %2400 = vmatprep.subr.mxu0 0.0
      %2401 = vmatpush1.msra.mxu0 %v2347
      %2402 = vmatprep.subr.mxu0 0.0
      %2403 = vmatpush1.msra.mxu0 %v2348
      %2404 = vmatprep.subr.mxu0 0.0
      %2405 = vmatpush1.msra.mxu0 %v2349
      %2406 = vmatprep.subr.mxu0 0.0
      %2407 = vmatpush1.msra.mxu0 %v2350
      %2408 = vmatprep.subr.mxu0 0.0
      %2409 = vmatpush1.msra.mxu0 %v2351
      %2410 = vmatprep.subr.mxu0 0.0
      %2411 = vmatpush1.msra.mxu0 %v2352
      %2412 = vmatprep.subr.mxu0 0.0
      %2413 = vmatpush1.msra.mxu0 %v2353
      %2414 = vmatprep.subr.mxu0 0.0
      %2415 = vmatpush1.msra.mxu0 %v2354
      %2416 = vmatprep.subr.mxu0 0.0
      %2417 = vmatpush1.msra.mxu0 %v2355
      %2418 = vmatprep.subr.mxu0 0.0
      %2419 = vmatpush1.msra.mxu0 %v2356
      %2420 = vmatprep.subr.mxu0 0.0
      %2421 = vmatpush1.msra.mxu0 %v2357
      %2422 = vmatprep.mubr.f32.mxu0 %v2306
      %2423 = vmatmul.mubr.f32.gmra.mrb[0].mxu0 %v2304
      %v2424 = vpop.f32.mrb[0].mxu0
      %v2425 = vadd.f32 0.0, %v2424
      %v2426 = vpop.f32.mrb[0].mxu0
      %2427 = vdwg.mxu0
      %2429 = vrot.lane.b32.xlu0 %v2425, 1
      %v2430 = vpop.permute.xlu0 %2429
      %vm2432 = vcmask 138248
      %2433 = vst.msk [vmem:[%s396] sm:$0xff] %vm2432, %v2430
      %v2434 = vld [vmem:[%s7] sm:$0xff]
      %v2435 = vld [vmem:[%s7 + $0x8] sm:$0xff]
      %v2436 = vld [vmem:[%s7 + $0x10] sm:$0xff]
      %v2437 = vld [vmem:[%s7 + $0x18] sm:$0xff]
      %v2438 = vld [vmem:[%s7 + $0x20] sm:$0xff]
      %v2439 = vld [vmem:[%s7 + $0x28] sm:$0xff]
      %v2440 = vld [vmem:[%s7 + $0x30] sm:$0xff]
      %v2441 = vld [vmem:[%s7 + $0x38] sm:$0xff]
      %v2442 = vld [vmem:[%s7 + $0x40] sm:$0xff]
      %v2443 = vld [vmem:[%s7 + $0x48] sm:$0xff]
      %v2444 = vld [vmem:[%s7 + $0x50] sm:$0xff]
      %v2445 = vld [vmem:[%s7 + $0x58] sm:$0xff]
      %v2446 = vld [vmem:[%s7 + $0x60] sm:$0xff]
      %v2447 = vld [vmem:[%s7 + $0x68] sm:$0xff]
      %v2448 = vld [vmem:[%s7 + $0x70] sm:$0xff]
      %v2449 = vld [vmem:[%s7 + $0x78] sm:$0xff]
      %v2450 = vld [vmem:[%s7 + $0x80] sm:$0xff]
      %v2451 = vld [vmem:[%s7 + $0x88] sm:$0xff]
      %v2452 = vld [vmem:[%s7 + $0x90] sm:$0xff]
      %v2453 = vld [vmem:[%s7 + $0x98] sm:$0xff]
      %v2454 = vld [vmem:[%s7 + $0xa0] sm:$0xff]
      %v2455 = vld [vmem:[%s7 + $0xa8] sm:$0xff]
      %v2456 = vld [vmem:[%s7 + $0xb0] sm:$0xff]
      %v2457 = vld [vmem:[%s7 + $0xb8] sm:$0xff]
      %v2458 = vld [vmem:[%s7 + $0xc0] sm:$0xff]
      %v2459 = vld [vmem:[%s7 + $0xc8] sm:$0xff]
      %v2460 = vld [vmem:[%s7 + $0xd0] sm:$0xff]
      %v2461 = vld [vmem:[%s7 + $0xd8] sm:$0xff]
      %v2462 = vld [vmem:[%s7 + $0xe0] sm:$0xff]
      %v2463 = vld [vmem:[%s7 + $0xe8] sm:$0xff]
      %v2464 = vld [vmem:[%s7 + $0xf0] sm:$0xff]
      %v2465 = vld [vmem:[%s7 + $0xf8] sm:$0xff]
      %2466 = vmatprep.subr.mxu0 0.0
      %2467 = vmatpush1.msra.mxu0 %v2434
      %2468 = vmatprep.subr.mxu0 0.0
      %2469 = vmatpush1.msra.mxu0 %v2435
      %2470 = vmatprep.subr.mxu0 0.0
      %2471 = vmatpush1.msra.mxu0 %v2436
      %2472 = vmatprep.subr.mxu0 0.0
      %2473 = vmatpush1.msra.mxu0 %v2437
      %2474 = vmatprep.subr.mxu0 0.0
      %2475 = vmatpush1.msra.mxu0 %v2438
      %2476 = vmatprep.subr.mxu0 0.0
      %2477 = vmatpush1.msra.mxu0 %v2439
      %2478 = vmatprep.subr.mxu0 0.0
      %2479 = vmatpush1.msra.mxu0 %v2440
      %2480 = vmatprep.subr.mxu0 0.0
      %2481 = vmatpush1.msra.mxu0 %v2441
      %2482 = vmatprep.subr.mxu0 0.0
      %2483 = vmatpush1.msra.mxu0 %v2442
      %2484 = vmatprep.subr.mxu0 0.0
      %2485 = vmatpush1.msra.mxu0 %v2443
      %2486 = vmatprep.subr.mxu0 0.0
      %2487 = vmatpush1.msra.mxu0 %v2444
      %2488 = vmatprep.subr.mxu0 0.0
      %2489 = vmatpush1.msra.mxu0 %v2445
      %2490 = vmatprep.subr.mxu0 0.0
      %2491 = vmatpush1.msra.mxu0 %v2446
      %2492 = vmatprep.subr.mxu0 0.0
      %2493 = vmatpush1.msra.mxu0 %v2447
      %2494 = vmatprep.subr.mxu0 0.0
      %2495 = vmatpush1.msra.mxu0 %v2448
      %2496 = vmatprep.subr.mxu0 0.0
      %2497 = vmatpush1.msra.mxu0 %v2449
      %2498 = vmatprep.subr.mxu0 0.0
      %2499 = vmatpush1.msra.mxu0 %v2450
      %2500 = vmatprep.subr.mxu0 0.0
      %2501 = vmatpush1.msra.mxu0 %v2451
      %2502 = vmatprep.subr.mxu0 0.0
      %2503 = vmatpush1.msra.mxu0 %v2452
      %2504 = vmatprep.subr.mxu0 0.0
      %2505 = vmatpush1.msra.mxu0 %v2453
      %2506 = vmatprep.subr.mxu0 0.0
      %2507 = vmatpush1.msra.mxu0 %v2454
      %2508 = vmatprep.subr.mxu0 0.0
      %2509 = vmatpush1.msra.mxu0 %v2455
      %2510 = vmatprep.subr.mxu0 0.0
      %2511 = vmatpush1.msra.mxu0 %v2456
      %2512 = vmatprep.subr.mxu0 0.0
      %2513 = vmatpush1.msra.mxu0 %v2457
      %2514 = vmatprep.subr.mxu0 0.0
      %2515 = vmatpush1.msra.mxu0 %v2458
      %2516 = vmatprep.subr.mxu0 0.0
      %2517 = vmatpush1.msra.mxu0 %v2459
      %2518 = vmatprep.subr.mxu0 0.0
      %2519 = vmatpush1.msra.mxu0 %v2460
      %2520 = vmatprep.subr.mxu0 0.0
      %2521 = vmatpush1.msra.mxu0 %v2461
      %2522 = vmatprep.subr.mxu0 0.0
      %2523 = vmatpush1.msra.mxu0 %v2462
      %2524 = vmatprep.subr.mxu0 0.0
      %2525 = vmatpush1.msra.mxu0 %v2463
      %2526 = vmatprep.subr.mxu0 0.0
      %2527 = vmatpush1.msra.mxu0 %v2464
      %2528 = vmatprep.subr.mxu0 0.0
      %2529 = vmatpush1.msra.mxu0 %v2465
      %2530 = vmatprep.mubr.f32.mxu0 %v2312
      %2531 = vmatmul.mubr.f32.gmra.mrb[0].mxu0 %v2310
      %v2532 = vpop.f32.mrb[0].mxu0
      %v2533 = vadd.f32 0.0, %v2532
      %v2534 = vpop.f32.mrb[0].mxu0
      %2535 = vdwg.mxu0
      %2537 = vrot.lane.b32.xlu0 %v2533, 17
      %v2538 = vpop.permute.xlu0 %2537
      %vm2540 = vcmask 269448
      %2541 = vst.msk [vmem:[%s396] sm:$0xff] %vm2540, %v2538
      %v2544 = vcombine.low %v2316, %v2318
      %v2546 = vunpack.c.l.s4 1966171168
      %v2547 = vunpack.c.0.s8 %v2546
      %v2548 = vlaneseq
      %v2549 = vshrl.u32 %v2548, 7
      %v2550 = vsub.s32 %v2547, %v2549
      %v2551 = vrot.slane %v2544, %v2550
      %v2553 = vunpack.c.l.s4 1966171168
      %v2554 = vunpack.c.0.s8 %v2553
      %v2555 = vlaneseq
      %v2556 = vshrl.u32 %v2555, 7
      %v2557 = vsub.s32 %v2554, %v2556
      %v2558 = vrot.slane %v2551, %v2557
      %v2560 = vlaneseq
      %vm2561 = vcmp.ge.s32.totalorder %v2560, 0
      %vm2562 = vcmp.lt.s32.totalorder %v2560, 256
      %vm2563 = vmand %vm2561, %vm2562
      %2564 = vst.msk [vmem:[%s400] sm:$0x3] %vm2563, %v2558
      %p2565 = scmp.lt.s32.totalorder %s22, 1
      %s2566 = scalar_select %p2565, %s22, 1
      %s2567 = smul.addr %s2566, 10
      %s2568 = smul.addr %s2567, 8
      %s2569 = scalar_lea.vmem %s8, %s2568
      %p2570 = scmp.lt.s32.totalorder %s22, 1
      %s2571 = scalar_select %p2570, %s22, 1
      %s2572 = smul.addr %s2571, 8
      %s2573 = scalar_lea.vmem %s9, %s2572
      %p2574 = scmp.lt.s32.totalorder %s22, 1
      %s2575 = scalar_select %p2574, %s22, 1
      %s2576 = smul.addr %s2575, 2
      %s2577 = scalar_lea.vmem %s10, %s2576
      // Predicated region
      $region53: #{encoder_forward.1} parent=51 // pred_check
        %p2578 = pneg %p218
      $region54: #{encoder_forward.1} parent=51 // pred_check_branch
        %2580 = sbr.rel (%p2578) target = $region56
      $region55: #{encoder_forward.1} parent=51 // pred_region
        _
      $region56: #{encoder_forward.1} parent=51 // pred_fallthru
        _
      // Predicated region
      $region57: #{encoder_forward.1} parent=51 // pred_check
        %p2581 = pneg %p244
      $region58: #{encoder_forward.1} parent=51 // pred_check_branch
        %2583 = sbr.rel (%p2581) target = $region60
      $region59: #{encoder_forward.1} parent=51 // pred_region
        _
      $region60: #{encoder_forward.1} parent=51 // pred_fallthru
        _
      // Predicated region
      $region61: #{encoder_forward.1} parent=51 // pred_check
        %p2584 = pneg %p270
      $region62: #{encoder_forward.1} parent=51 // pred_check_branch
        %2586 = sbr.rel (%p2584) target = $region64
      $region63: #{encoder_forward.1} parent=51 // pred_region
        _
      $region64: #{encoder_forward.1} parent=51 // pred_fallthru
        _
    $region52: #{encoder_forward.1} parent=5 // pred_fallthru
      _
    %p2587 = scmp.le.s32.totalorder 2, %s17
    // Predicated region
    $region65: #{encoder_forward.1} parent=5 // pred_check
      %p2588 = pneg %p2587
    $region66: #{encoder_forward.1} parent=5 // pred_check_branch
      %2590 = sbr.rel (%p2588) target = $region68
    $region67: #{encoder_forward.1} parent=5 // pred_region
      %s2591 = ssub.s32 %s17, 2
      // Predicated region
      $region69: #{encoder_forward.1} parent=67 // pred_check
        %p2592 = pneg %p224
      $region70: #{encoder_forward.1} parent=67 // pred_check_branch
        %2594 = sbr.rel (%p2592) target = $region72
      $region71: #{encoder_forward.1} parent=67 // pred_region
        %p2595 = scmp.lt.s32.totalorder %s23, 1
        %s2596 = scalar_select %p2595, %s23, 1
        %s2597 = smul.addr %s2596, 10
        %s2598 = smul.addr %s2597, 8
        %s2599 = scalar_lea.vmem %s8, %s2598
      $region72: #{encoder_forward.1} parent=67 // pred_fallthru
        _
      // Predicated region
      $region73: #{encoder_forward.1} parent=67 // pred_check
        %p2600 = pneg %p250
      $region74: #{encoder_forward.1} parent=67 // pred_check_branch
        %2602 = sbr.rel (%p2600) target = $region76
      $region75: #{encoder_forward.1} parent=67 // pred_region
        %p2603 = scmp.lt.s32.totalorder %s23, 1
        %s2604 = scalar_select %p2603, %s23, 1
        %s2605 = smul.addr %s2604, 8
        %s2606 = scalar_lea.vmem %s9, %s2605
      $region76: #{encoder_forward.1} parent=67 // pred_fallthru
        _
      // Predicated region
      $region77: #{encoder_forward.1} parent=67 // pred_check
        %p2607 = pneg %p276
      $region78: #{encoder_forward.1} parent=67 // pred_check_branch
        %2609 = sbr.rel (%p2607) target = $region80
      $region79: #{encoder_forward.1} parent=67 // pred_region
        %p2610 = scmp.lt.s32.totalorder %s23, 1
        %s2611 = scalar_select %p2610, %s23, 1
        %s2612 = smul.addr %s2611, 2
        %s2613 = scalar_lea.vmem %s10, %s2612
      $region80: #{encoder_forward.1} parent=67 // pred_fallthru
        _
    $region68: #{encoder_forward.1} parent=5 // pred_fallthru
      _
  $region6: #{encoder_forward.1} parent=0 // loop_footer
    %s21 = sadd.s32 1, %s17
  $region7: #{encoder_forward.1} parent=0 // loop_footer_branch
    %16 = sbr.rel target = $region3
  $region8: #{encoder_forward.1} parent=0 // loop_exit
    _

</llo_original>
